<compile_context>
chip_gen: v7x
topology: tpu7x:2x2x1
jax: 0.10.0
libtpu: 0.0.40
codegen_flags: <defaults>
</compile_context>

<pallas_src>
import jax
import jax.numpy as jnp
from jax import lax
from jax.experimental import pallas as pl
from jax.experimental.pallas import tpu as pltpu

REG_MAX = 16
EPS = 1e-7
LANE = 128
SUB = 16          # rows per in-kernel compute sub-slab (= bf16 sublane tile)


def rotated_bbox_loss_kernel(small_ref, pd_ref, iou_out, dfl_out):
    f32 = jnp.float32
    tile_rows = small_ref.shape[1]
    nsub = tile_rows // SUB

    def sub_body(j, carry):
        iou_acc, dfl_acc = carry
        off = pl.multiple_of(j * SUB, SUB)
        sl = pl.ds(off, SUB)

        # --- small per-anchor channels, lane-dense (SUB, 128) f32 slabs ---
        x1 = small_ref[0, sl, :]
        y1 = small_ref[1, sl, :]
        w1 = small_ref[2, sl, :]
        h1 = small_ref[3, sl, :]
        r1 = small_ref[4, sl, :]
        x2 = small_ref[5, sl, :]
        y2 = small_ref[6, sl, :]
        w2 = small_ref[7, sl, :]
        h2 = small_ref[8, sl, :]
        r2 = small_ref[9, sl, :]
        ax = small_ref[10, sl, :]
        ay = small_ref[11, sl, :]

        # ----------------------------- probiou -----------------------------
        def cov(ww, hh, rr):
            a = ww * ww * (1.0 / 12.0)
            b = hh * hh * (1.0 / 12.0)
            c = jnp.cos(rr)
            s = jnp.sin(rr)
            return a * c * c + b * s * s, a * s * s + b * c * c, (a - b) * c * s

        a1, b1, c1 = cov(w1, h1, r1)
        a2, b2, c2 = cov(w2, h2, r2)
        sa, sb, sc = a1 + a2, b1 + b2, c1 + c2
        dx, dy = x1 - x2, y1 - y2
        denom = sa * sb - sc * sc
        inv = pl.reciprocal(denom + EPS, approx=True)        # EUP slot
        t1 = (sa * dy * dy + sb * dx * dx) * inv * 0.25
        t2 = (sc * (-dx) * dy) * inv * 0.5                   # (x2-x1)*(y1-y2) == -dx*dy
        det1 = jnp.maximum(a1 * b1 - c1 * c1, 0.0)
        det2 = jnp.maximum(a2 * b2 - c2 * c2, 0.0)
        inv_det = pl.reciprocal(4.0 * jnp.sqrt(det1 * det2) + EPS, approx=True)
        t3 = 0.5 * jnp.log(denom * inv_det + EPS)
        bd = jnp.clip(t1 + t2 + t3, EPS, 100.0)
        hd = jnp.sqrt(1.0 - jnp.exp(-bd) + EPS)              # == (1 - iou)

        weight = small_ref[12, sl, :]
        fg = small_ref[13, sl, :] > 0.0
        iou_contrib = jnp.where(fg, hd * weight, 0.0)        # select-mask -> NaN safe
        # fold to (8,128) and accumulate right away (frees iou/weight/fg vregs)
        iou_acc = iou_acc + iou_contrib[0:8, :] + iou_contrib[8:16, :]

        # ------------------------------- DFL --------------------------------
        # target_ltrb = bbox2dist(anchor, xywh2xyxy(target_bboxes[..., :4]), 15)
        hw = w2 * 0.5
        hh = h2 * 0.5
        sides = (ax - (x2 - hw),      # left
                 ay - (y2 - hh),      # top
                 (x2 + hw) - ax,      # right
                 (y2 + hh) - ay)      # bottom

        dfl_sum = jnp.zeros((SUB, LANE), f32)
        for s, tgt in enumerate(sides):
            tgt = jnp.clip(tgt, 0.0, REG_MAX - 1 - 0.01)
            tl = jnp.floor(tgt)              # left bin (exact small ints in f32)
            wl = tl + 1.0 - tgt              # left weight; right weight = 1 - wl
            base = s * REG_MAX

            # running max over the 16 bins (stays bf16; native on v6e/v7x VPU)
            m = pd_ref[base, sl, :]
            for bi in range(1, REG_MAX):
                m = jnp.maximum(m, pd_ref[base + bi, sl, :])
            m = m.astype(f32)

            # exp pass + select-"gather" of the tl/tr logits.  (tl == bi) is
            # computed once per bin; the previous compare is reused for the
            # right-bin select (tr == bi  <=>  tl == bi - 1).
            se = jnp.zeros((SUB, LANE), f32)
            logit_l = jnp.zeros((SUB, LANE), f32)
            logit_r = jnp.zeros((SUB, LANE), f32)
            eq_prev = None
            for bi in range(REG_MAX):
                lb = pd_ref[base + bi, sl, :].astype(f32)
                se = se + jnp.exp(lb - m)
                eq = tl == float(bi)
                logit_l = jnp.where(eq, lb, logit_l)
                if eq_prev is not None:
                    logit_r = jnp.where(eq_prev, lb, logit_r)
                eq_prev = eq
            lse = m + jnp.log(se)
            dfl_sum = dfl_sum + (lse - logit_l) * wl + (lse - logit_r) * (1.0 - wl)

        # reload weight/fg (cheap vld; vld slot has slack) instead of holding
        # them live across the 4x16 unrolled bin loop above.
        weight = small_ref[12, sl, :]
        fg = small_ref[13, sl, :] > 0.0
        dfl_contrib = jnp.where(fg, dfl_sum * 0.25 * weight, 0.0)   # mean of 4 sides
        dfl_acc = dfl_acc + dfl_contrib[0:8, :] + dfl_contrib[8:16, :]
        return iou_acc, dfl_acc

    init = (jnp.zeros((8, LANE), jnp.float32), jnp.zeros((8, LANE), jnp.float32))
    iou_acc, dfl_acc = lax.fori_loop(0, nsub, sub_body, init)
    iou_out[0] = iou_acc
    dfl_out[0] = dfl_acc


def rotated_bbox_loss(pred_dist, pred_bboxes, anchor_points, target_bboxes,
                      target_scores, target_scores_sum, fg_mask,
                      *, max_tile_rows=128):
    """Forward pass of ultralytics RotatedBboxLoss. Returns (loss_iou, loss_dfl)."""
    B, A, _ = pred_bboxes.shape
    N = B * A

    # weight = target_scores.sum(-1); computed here so the NC-wide scores never
    # travel through the kernel.
    weight = target_scores.sum(-1).reshape(N, 1).astype(jnp.float32)
    fg = fg_mask.reshape(N, 1).astype(jnp.float32)
    pb = pred_bboxes.reshape(N, 5).astype(jnp.float32)
    tb = target_bboxes.reshape(N, 5).astype(jnp.float32)
    ap = jnp.broadcast_to(anchor_points[None], (B, A, 2)).reshape(N, 2).astype(jnp.float32)
    small = jnp.concatenate([pb, tb, ap, weight, fg], axis=1)        # (N, 14) f32
    pd = pred_dist.reshape(N, 4 * REG_MAX).astype(jnp.bfloat16)      # bf16 before relayout

    # pad N up to a multiple of one compute sub-slab (SUB*LANE = 2048 anchors);
    # padded rows carry fg = 0 and never enter the sums.
    n_pad = (-N) % (SUB * LANE)
    if n_pad:
        small = jnp.pad(small, ((0, n_pad), (0, 0)))
        pd = jnp.pad(pd, ((0, n_pad), (0, 0)))
    Np = N + n_pad
    NT = Np // LANE

    # biggest DMA tile (rows of 128 anchors) that divides NT, up to max_tile_rows
    tile_rows = SUB
    for t in (max_tile_rows, max_tile_rows // 2, max_tile_rows // 4, max_tile_rows // 8):
        if t >= SUB and NT % t == 0:
            tile_rows = t
            break
    G = NT // tile_rows

    # lane-dense relayout: anchor index lands on (sublane, lane)
    small_ld = small.T.reshape(14, NT, LANE)
    pd_ld = pd.T.reshape(4 * REG_MAX, NT, LANE)

    grid_spec = pltpu.PrefetchScalarGridSpec(
        num_scalar_prefetch=0,
        grid=(G,),
        in_specs=[
            pl.BlockSpec((14, tile_rows, LANE), lambda i: (0, i, 0)),
            pl.BlockSpec((4 * REG_MAX, tile_rows, LANE), lambda i: (0, i, 0)),
        ],
        out_specs=(pl.BlockSpec((1, 8, LANE), lambda i: (i, 0, 0)),
                   pl.BlockSpec((1, 8, LANE), lambda i: (i, 0, 0))),
    )

    iou_parts, dfl_parts = pl.pallas_call(
        rotated_bbox_loss_kernel,
        out_shape=(jax.ShapeDtypeStruct((G, 8, LANE), jnp.float32),
                   jax.ShapeDtypeStruct((G, 8, LANE), jnp.float32)),
        grid_spec=grid_spec,
        compiler_params=pltpu.CompilerParams(dimension_semantics=("parallel",)),
    )(small_ld, pd_ld)

    loss_iou = jnp.sum(iou_parts) / target_scores_sum
    loss_dfl = jnp.sum(dfl_parts) / target_scores_sum
    return loss_iou, loss_dfl


# ---------------------- pure-JAX reference (for sanity) ----------------------
def _reference(pred_dist, pred_bboxes, anchor_points, target_bboxes,
               target_scores, target_scores_sum, fg_mask):
    B, A, _ = pred_bboxes.shape
    N = B * A
    pb = pred_bboxes.reshape(N, 5)
    tb = target_bboxes.reshape(N, 5)
    ap = jnp.broadcast_to(anchor_points[None], (B, A, 2)).reshape(N, 2)
    pd = pred_dist.reshape(N, 4, REG_MAX)
    fg = fg_mask.reshape(N, 1).astype(jnp.float32)
    weight = target_scores.reshape(N, -1).sum(-1, keepdims=True)

    x1, y1, w1, h1, r1 = (pb[:, k:k + 1] for k in range(5))
    x2, y2, w2, h2, r2 = (tb[:, k:k + 1] for k in range(5))

    def cov(w, h, r):
        a, b = w * w / 12.0, h * h / 12.0
        c_, s_ = jnp.cos(r), jnp.sin(r)
        return a * c_ ** 2 + b * s_ ** 2, a * s_ ** 2 + b * c_ ** 2, (a - b) * c_ * s_

    a1, b1, c1 = cov(w1, h1, r1)
    a2, b2, c2 = cov(w2, h2, r2)
    denom = (a1 + a2) * (b1 + b2) - (c1 + c2) ** 2
    t1 = ((a1 + a2) * (y1 - y2) ** 2 + (b1 + b2) * (x1 - x2) ** 2) / (denom + EPS) * 0.25
    t2 = ((c1 + c2) * (x2 - x1) * (y1 - y2)) / (denom + EPS) * 0.5
    t3 = jnp.log(denom / (4 * jnp.sqrt(jnp.maximum(a1 * b1 - c1 ** 2, 0.)
                                       * jnp.maximum(a2 * b2 - c2 ** 2, 0.)) + EPS) + EPS) * 0.5
    bd = jnp.clip(t1 + t2 + t3, EPS, 100.0)
    iou = 1.0 - jnp.sqrt(1.0 - jnp.exp(-bd) + EPS)
    loss_iou = jnp.sum((1.0 - iou) * weight * fg) / target_scores_sum

    hw, hh = w2 * 0.5, h2 * 0.5
    ltrb = jnp.concatenate([ap[:, 0:1] - (x2 - hw), ap[:, 1:2] - (y2 - hh),
                            (x2 + hw) - ap[:, 0:1], (y2 + hh) - ap[:, 1:2]], axis=-1)
    target = jnp.clip(ltrb, 0.0, REG_MAX - 1 - 0.01)
    tl = jnp.floor(target)
    tr = tl + 1.0
    wl, wr = tr - target, target - tl
    logp = jax.nn.log_softmax(pd, axis=-1)
    ce_l = -jnp.take_along_axis(logp, tl.astype(jnp.int32)[..., None], axis=-1)[..., 0]
    ce_r = -jnp.take_along_axis(logp, tr.astype(jnp.int32)[..., None], axis=-1)[..., 0]
    dfl = jnp.mean(ce_l * wl + ce_r * wr, axis=-1, keepdims=True)
    loss_dfl = jnp.sum(dfl * weight * fg) / target_scores_sum
    return loss_iou, loss_dfl


if __name__ == "__main__":
    key = jax.random.PRNGKey(0)
    B, A, NC = 2, 128, 4
    ks = jax.random.split(key, 8)

    pred_dist = jax.random.normal(ks[0], (B, A, 4 * REG_MAX), jnp.float32)
    pred_bboxes = jnp.concatenate([
        jax.random.uniform(ks[1], (B, A, 2), jnp.float32, 0.0, 16.0),      # xy
        jax.random.uniform(ks[2], (B, A, 2), jnp.float32, 1.0, 6.0),       # wh
        jax.random.uniform(ks[3], (B, A, 1), jnp.float32, -0.7, 0.7),      # angle
    ], axis=-1)
    target_bboxes = jnp.concatenate([
        jax.random.uniform(ks[4], (B, A, 2), jnp.float32, 0.0, 16.0),
        jax.random.uniform(ks[5], (B, A, 2), jnp.float32, 1.0, 6.0),
        jax.random.uniform(ks[6], (B, A, 1), jnp.float32, -0.7, 0.7),
    ], axis=-1)
    # anchor points: 8x16 grid of cell centers
    gy, gx = jnp.meshgrid(jnp.arange(8, dtype=jnp.float32) + 0.5,
                          jnp.arange(16, dtype=jnp.float32) + 0.5, indexing="ij")
    anchor_points = jnp.stack([gx.reshape(-1), gy.reshape(-1)], axis=-1)   # (128, 2)
    target_scores = jax.random.uniform(ks[7], (B, A, NC), jnp.float32)
    fg_mask = jax.random.bernoulli(jax.random.PRNGKey(42), 0.5, (B, A))
    target_scores_sum = jnp.maximum(target_scores.sum(), 1.0)

    loss_iou, loss_dfl = jax.jit(rotated_bbox_loss)(
        pred_dist, pred_bboxes, anchor_points, target_bboxes,
        target_scores, target_scores_sum, fg_mask)
    jax.block_until_ready((loss_iou, loss_dfl))

    # Reference sees the same bf16-rounded logits the kernel consumes; the
    # remaining kernel/reference deltas are the EUP approx reciprocals.
    pred_dist_q = pred_dist.astype(jnp.bfloat16).astype(jnp.float32)
    ref_iou, ref_dfl = _reference(pred_dist_q, pred_bboxes, anchor_points, target_bboxes,
                                  target_scores, target_scores_sum, fg_mask)
    assert jnp.allclose(loss_iou, ref_iou, rtol=5e-3, atol=1e-4), (loss_iou, ref_iou)
    assert jnp.allclose(loss_dfl, ref_dfl, rtol=5e-3, atol=1e-4), (loss_dfl, ref_dfl)

    print("KERNEL_OK")
</pallas_src>

<mosaic_0001>
module attributes {stable_mosaic.version = 11 : i64} {
  func.func @rotated_bbox_loss_kernel(%arg0: i32, %arg1: memref<14x16x128xf32, #tpu.memory_space<vmem>>, %arg2: memref<64x16x128xbf16, #tpu.memory_space<vmem>>, %arg3: memref<1x8x128xf32, #tpu.memory_space<vmem>>, %arg4: memref<1x8x128xf32, #tpu.memory_space<vmem>>) attributes {dimension_semantics = [#tpu.dimension_semantics<parallel>], iteration_bounds = array<i64: 1>, scalar_prefetch = 0 : i64, scratch_operands = 0 : i64, tpu.core_type = #tpu.core_type<tc>, window_params = [{transform_indices = @transform_0, window_bounds = array<i64: 14, 16, 128>}, {transform_indices = @transform_1, window_bounds = array<i64: 64, 16, 128>}, {transform_indices = @transform_2, window_bounds = array<i64: 1, 8, 128>}, {transform_indices = @transform_3, window_bounds = array<i64: 1, 8, 128>}]} {
    %cst = arith.constant 0.000000e+00 : f32
    %0 = vector.broadcast %cst : f32 to vector<8x128xf32>
    %cst_0 = arith.constant 0.000000e+00 : f32
    %1 = vector.broadcast %cst_0 : f32 to vector<8x128xf32>
    %c0_i32 = arith.constant 0 : i32
    %c16_i32 = arith.constant 16 : i32
    %2 = arith.muli %c0_i32, %c16_i32 : i32
    %3 = tpu.assume_multiple %2, 16 : i32
    %c0 = arith.constant 0 : index
    %4 = arith.index_cast %3 : i32 to index
    %c0_1 = arith.constant 0 : index
    %5 = vector.load %arg1[%c0, %4, %c0_1] : memref<14x16x128xf32, #tpu.memory_space<vmem>>, vector<1x16x128xf32>
    %6 = vector.shape_cast %5 : vector<1x16x128xf32> to vector<16x128xf32>
    %c1 = arith.constant 1 : index
    %7 = arith.index_cast %3 : i32 to index
    %c0_2 = arith.constant 0 : index
    %8 = vector.load %arg1[%c1, %7, %c0_2] : memref<14x16x128xf32, #tpu.memory_space<vmem>>, vector<1x16x128xf32>
    %9 = vector.shape_cast %8 : vector<1x16x128xf32> to vector<16x128xf32>
    %c2 = arith.constant 2 : index
    %10 = arith.index_cast %3 : i32 to index
    %c0_3 = arith.constant 0 : index
    %11 = vector.load %arg1[%c2, %10, %c0_3] : memref<14x16x128xf32, #tpu.memory_space<vmem>>, vector<1x16x128xf32>
    %12 = vector.shape_cast %11 : vector<1x16x128xf32> to vector<16x128xf32>
    %c3 = arith.constant 3 : index
    %13 = arith.index_cast %3 : i32 to index
    %c0_4 = arith.constant 0 : index
    %14 = vector.load %arg1[%c3, %13, %c0_4] : memref<14x16x128xf32, #tpu.memory_space<vmem>>, vector<1x16x128xf32>
    %15 = vector.shape_cast %14 : vector<1x16x128xf32> to vector<16x128xf32>
    %c4 = arith.constant 4 : index
    %16 = arith.index_cast %3 : i32 to index
    %c0_5 = arith.constant 0 : index
    %17 = vector.load %arg1[%c4, %16, %c0_5] : memref<14x16x128xf32, #tpu.memory_space<vmem>>, vector<1x16x128xf32>
    %18 = vector.shape_cast %17 : vector<1x16x128xf32> to vector<16x128xf32>
    %c5 = arith.constant 5 : index
    %19 = arith.index_cast %3 : i32 to index
    %c0_6 = arith.constant 0 : index
    %20 = vector.load %arg1[%c5, %19, %c0_6] : memref<14x16x128xf32, #tpu.memory_space<vmem>>, vector<1x16x128xf32>
    %21 = vector.shape_cast %20 : vector<1x16x128xf32> to vector<16x128xf32>
    %c6 = arith.constant 6 : index
    %22 = arith.index_cast %3 : i32 to index
    %c0_7 = arith.constant 0 : index
    %23 = vector.load %arg1[%c6, %22, %c0_7] : memref<14x16x128xf32, #tpu.memory_space<vmem>>, vector<1x16x128xf32>
    %24 = vector.shape_cast %23 : vector<1x16x128xf32> to vector<16x128xf32>
    %c7 = arith.constant 7 : index
    %25 = arith.index_cast %3 : i32 to index
    %c0_8 = arith.constant 0 : index
    %26 = vector.load %arg1[%c7, %25, %c0_8] : memref<14x16x128xf32, #tpu.memory_space<vmem>>, vector<1x16x128xf32>
    %27 = vector.shape_cast %26 : vector<1x16x128xf32> to vector<16x128xf32>
    %c8 = arith.constant 8 : index
    %28 = arith.index_cast %3 : i32 to index
    %c0_9 = arith.constant 0 : index
    %29 = vector.load %arg1[%c8, %28, %c0_9] : memref<14x16x128xf32, #tpu.memory_space<vmem>>, vector<1x16x128xf32>
    %30 = vector.shape_cast %29 : vector<1x16x128xf32> to vector<16x128xf32>
    %c9 = arith.constant 9 : index
    %31 = arith.index_cast %3 : i32 to index
    %c0_10 = arith.constant 0 : index
    %32 = vector.load %arg1[%c9, %31, %c0_10] : memref<14x16x128xf32, #tpu.memory_space<vmem>>, vector<1x16x128xf32>
    %33 = vector.shape_cast %32 : vector<1x16x128xf32> to vector<16x128xf32>
    %c10 = arith.constant 10 : index
    %34 = arith.index_cast %3 : i32 to index
    %c0_11 = arith.constant 0 : index
    %35 = vector.load %arg1[%c10, %34, %c0_11] : memref<14x16x128xf32, #tpu.memory_space<vmem>>, vector<1x16x128xf32>
    %36 = vector.shape_cast %35 : vector<1x16x128xf32> to vector<16x128xf32>
    %c11 = arith.constant 11 : index
    %37 = arith.index_cast %3 : i32 to index
    %c0_12 = arith.constant 0 : index
    %38 = vector.load %arg1[%c11, %37, %c0_12] : memref<14x16x128xf32, #tpu.memory_space<vmem>>, vector<1x16x128xf32>
    %39 = vector.shape_cast %38 : vector<1x16x128xf32> to vector<16x128xf32>
    %40 = arith.mulf %12, %12 : vector<16x128xf32>
    %cst_13 = arith.constant 0.0833333358 : f32
    %41 = vector.broadcast %cst_13 : f32 to vector<16x128xf32>
    %42 = arith.mulf %40, %41 : vector<16x128xf32>
    %43 = arith.mulf %15, %15 : vector<16x128xf32>
    %cst_14 = arith.constant 0.0833333358 : f32
    %44 = vector.broadcast %cst_14 : f32 to vector<16x128xf32>
    %45 = arith.mulf %43, %44 : vector<16x128xf32>
    %46 = math.cos %18 : vector<16x128xf32>
    %47 = math.sin %18 : vector<16x128xf32>
    %48 = arith.mulf %42, %46 : vector<16x128xf32>
    %49 = arith.mulf %48, %46 : vector<16x128xf32>
    %50 = arith.mulf %45, %47 : vector<16x128xf32>
    %51 = arith.mulf %50, %47 : vector<16x128xf32>
    %52 = arith.addf %49, %51 : vector<16x128xf32>
    %53 = arith.mulf %42, %47 : vector<16x128xf32>
    %54 = arith.mulf %53, %47 : vector<16x128xf32>
    %55 = arith.mulf %45, %46 : vector<16x128xf32>
    %56 = arith.mulf %55, %46 : vector<16x128xf32>
    %57 = arith.addf %54, %56 : vector<16x128xf32>
    %58 = arith.subf %42, %45 : vector<16x128xf32>
    %59 = arith.mulf %58, %46 : vector<16x128xf32>
    %60 = arith.mulf %59, %47 : vector<16x128xf32>
    %61 = arith.mulf %27, %27 : vector<16x128xf32>
    %cst_15 = arith.constant 0.0833333358 : f32
    %62 = vector.broadcast %cst_15 : f32 to vector<16x128xf32>
    %63 = arith.mulf %61, %62 : vector<16x128xf32>
    %64 = arith.mulf %30, %30 : vector<16x128xf32>
    %cst_16 = arith.constant 0.0833333358 : f32
    %65 = vector.broadcast %cst_16 : f32 to vector<16x128xf32>
    %66 = arith.mulf %64, %65 : vector<16x128xf32>
    %67 = math.cos %33 : vector<16x128xf32>
    %68 = math.sin %33 : vector<16x128xf32>
    %69 = arith.mulf %63, %67 : vector<16x128xf32>
    %70 = arith.mulf %69, %67 : vector<16x128xf32>
    %71 = arith.mulf %66, %68 : vector<16x128xf32>
    %72 = arith.mulf %71, %68 : vector<16x128xf32>
    %73 = arith.addf %70, %72 : vector<16x128xf32>
    %74 = arith.mulf %63, %68 : vector<16x128xf32>
    %75 = arith.mulf %74, %68 : vector<16x128xf32>
    %76 = arith.mulf %66, %67 : vector<16x128xf32>
    %77 = arith.mulf %76, %67 : vector<16x128xf32>
    %78 = arith.addf %75, %77 : vector<16x128xf32>
    %79 = arith.subf %63, %66 : vector<16x128xf32>
    %80 = arith.mulf %79, %67 : vector<16x128xf32>
    %81 = arith.mulf %80, %68 : vector<16x128xf32>
    %82 = arith.addf %52, %73 : vector<16x128xf32>
    %83 = arith.addf %57, %78 : vector<16x128xf32>
    %84 = arith.addf %60, %81 : vector<16x128xf32>
    %85 = arith.subf %6, %21 : vector<16x128xf32>
    %86 = arith.subf %9, %24 : vector<16x128xf32>
    %87 = arith.mulf %82, %83 : vector<16x128xf32>
    %88 = arith.mulf %84, %84 : vector<16x128xf32>
    %89 = arith.subf %87, %88 : vector<16x128xf32>
    %cst_17 = arith.constant 1.000000e-07 : f32
    %90 = vector.broadcast %cst_17 : f32 to vector<16x128xf32>
    %91 = arith.addf %89, %90 : vector<16x128xf32>
    %92 = tpu.reciprocal %91 {approx = true} : vector<16x128xf32> -> vector<16x128xf32>
    %93 = arith.mulf %82, %86 : vector<16x128xf32>
    %94 = arith.mulf %93, %86 : vector<16x128xf32>
    %95 = arith.mulf %83, %85 : vector<16x128xf32>
    %96 = arith.mulf %95, %85 : vector<16x128xf32>
    %97 = arith.addf %94, %96 : vector<16x128xf32>
    %98 = arith.mulf %97, %92 : vector<16x128xf32>
    %cst_18 = arith.constant 2.500000e-01 : f32
    %99 = vector.broadcast %cst_18 : f32 to vector<16x128xf32>
    %100 = arith.mulf %98, %99 : vector<16x128xf32>
    %cst_19 = arith.constant 0.000000e+00 : f32
    %101 = vector.broadcast %cst_19 : f32 to vector<16x128xf32>
    %102 = arith.subf %101, %85 : vector<16x128xf32>
    %103 = arith.mulf %84, %102 : vector<16x128xf32>
    %104 = arith.mulf %103, %86 : vector<16x128xf32>
    %105 = arith.mulf %104, %92 : vector<16x128xf32>
    %cst_20 = arith.constant 5.000000e-01 : f32
    %106 = vector.broadcast %cst_20 : f32 to vector<16x128xf32>
    %107 = arith.mulf %105, %106 : vector<16x128xf32>
    %108 = arith.mulf %52, %57 : vector<16x128xf32>
    %109 = arith.mulf %60, %60 : vector<16x128xf32>
    %110 = arith.subf %108, %109 : vector<16x128xf32>
    %cst_21 = arith.constant 0.000000e+00 : f32
    %111 = vector.broadcast %cst_21 : f32 to vector<16x128xf32>
    %112 = arith.maximumf %110, %111 : vector<16x128xf32>
    %113 = arith.mulf %73, %78 : vector<16x128xf32>
    %114 = arith.mulf %81, %81 : vector<16x128xf32>
    %115 = arith.subf %113, %114 : vector<16x128xf32>
    %cst_22 = arith.constant 0.000000e+00 : f32
    %116 = vector.broadcast %cst_22 : f32 to vector<16x128xf32>
    %117 = arith.maximumf %115, %116 : vector<16x128xf32>
    %118 = arith.mulf %112, %117 : vector<16x128xf32>
    %119 = math.sqrt %118 : vector<16x128xf32>
    %cst_23 = arith.constant 4.000000e+00 : f32
    %120 = vector.broadcast %cst_23 : f32 to vector<16x128xf32>
    %121 = arith.mulf %120, %119 : vector<16x128xf32>
    %cst_24 = arith.constant 1.000000e-07 : f32
    %122 = vector.broadcast %cst_24 : f32 to vector<16x128xf32>
    %123 = arith.addf %121, %122 : vector<16x128xf32>
    %124 = tpu.reciprocal %123 {approx = true} : vector<16x128xf32> -> vector<16x128xf32>
    %125 = arith.mulf %89, %124 : vector<16x128xf32>
    %cst_25 = arith.constant 1.000000e-07 : f32
    %126 = vector.broadcast %cst_25 : f32 to vector<16x128xf32>
    %127 = arith.addf %125, %126 : vector<16x128xf32>
    %128 = math.log %127 : vector<16x128xf32>
    %cst_26 = arith.constant 5.000000e-01 : f32
    %129 = vector.broadcast %cst_26 : f32 to vector<16x128xf32>
    %130 = arith.mulf %129, %128 : vector<16x128xf32>
    %131 = arith.addf %100, %107 : vector<16x128xf32>
    %132 = arith.addf %131, %130 : vector<16x128xf32>
    %cst_27 = arith.constant 1.000000e-07 : f32
    %cst_28 = arith.constant 1.000000e+02 : f32
    %133 = vector.broadcast %cst_27 : f32 to vector<16x128xf32>
    %134 = arith.maximumf %133, %132 : vector<16x128xf32>
    %135 = vector.broadcast %cst_28 : f32 to vector<16x128xf32>
    %136 = arith.minimumf %135, %134 : vector<16x128xf32>
    %cst_29 = arith.constant 0.000000e+00 : f32
    %137 = vector.broadcast %cst_29 : f32 to vector<16x128xf32>
    %138 = arith.subf %137, %136 : vector<16x128xf32>
    %139 = math.exp %138 : vector<16x128xf32>
    %cst_30 = arith.constant 1.000000e+00 : f32
    %140 = vector.broadcast %cst_30 : f32 to vector<16x128xf32>
    %141 = arith.subf %140, %139 : vector<16x128xf32>
    %cst_31 = arith.constant 1.000000e-07 : f32
    %142 = vector.broadcast %cst_31 : f32 to vector<16x128xf32>
    %143 = arith.addf %141, %142 : vector<16x128xf32>
    %144 = math.sqrt %143 : vector<16x128xf32>
    %c12 = arith.constant 12 : index
    %145 = arith.index_cast %3 : i32 to index
    %c0_32 = arith.constant 0 : index
    %146 = vector.load %arg1[%c12, %145, %c0_32] : memref<14x16x128xf32, #tpu.memory_space<vmem>>, vector<1x16x128xf32>
    %147 = vector.shape_cast %146 : vector<1x16x128xf32> to vector<16x128xf32>
    %c13 = arith.constant 13 : index
    %148 = arith.index_cast %3 : i32 to index
    %c0_33 = arith.constant 0 : index
    %149 = vector.load %arg1[%c13, %148, %c0_33] : memref<14x16x128xf32, #tpu.memory_space<vmem>>, vector<1x16x128xf32>
    %150 = vector.shape_cast %149 : vector<1x16x128xf32> to vector<16x128xf32>
    %cst_34 = arith.constant 0.000000e+00 : f32
    %151 = vector.broadcast %cst_34 : f32 to vector<16x128xf32>
    %152 = arith.cmpf ogt, %150, %151 : vector<16x128xf32>
    %153 = arith.mulf %144, %147 : vector<16x128xf32>
    %cst_35 = arith.constant 0.000000e+00 : f32
    %154 = vector.broadcast %cst_35 : f32 to vector<16x128xf32>
    %155 = arith.select %152, %153, %154 : vector<16x128xi1>, vector<16x128xf32>
    %156 = vector.extract_strided_slice %155 {offsets = [0, 0], sizes = [8, 128], strides = [1, 1]} : vector<16x128xf32> to vector<8x128xf32>
    %157 = arith.addf %0, %156 : vector<8x128xf32>
    %158 = vector.extract_strided_slice %155 {offsets = [8, 0], sizes = [8, 128], strides = [1, 1]} : vector<16x128xf32> to vector<8x128xf32>
    %159 = arith.addf %157, %158 : vector<8x128xf32>
    %cst_36 = arith.constant 5.000000e-01 : f32
    %160 = vector.broadcast %cst_36 : f32 to vector<16x128xf32>
    %161 = arith.mulf %27, %160 : vector<16x128xf32>
    %cst_37 = arith.constant 5.000000e-01 : f32
    %162 = vector.broadcast %cst_37 : f32 to vector<16x128xf32>
    %163 = arith.mulf %30, %162 : vector<16x128xf32>
    %164 = arith.subf %21, %161 : vector<16x128xf32>
    %165 = arith.subf %36, %164 : vector<16x128xf32>
    %166 = arith.subf %24, %163 : vector<16x128xf32>
    %167 = arith.subf %39, %166 : vector<16x128xf32>
    %168 = arith.addf %21, %161 : vector<16x128xf32>
    %169 = arith.subf %168, %36 : vector<16x128xf32>
    %170 = arith.addf %24, %163 : vector<16x128xf32>
    %171 = arith.subf %170, %39 : vector<16x128xf32>
    %cst_38 = arith.constant 0.000000e+00 : f32
    %172 = vector.broadcast %cst_38 : f32 to vector<16x128xf32>
    %cst_39 = arith.constant 0.000000e+00 : f32
    %cst_40 = arith.constant 1.499000e+01 : f32
    %173 = vector.broadcast %cst_39 : f32 to vector<16x128xf32>
    %174 = arith.maximumf %173, %165 : vector<16x128xf32>
    %175 = vector.broadcast %cst_40 : f32 to vector<16x128xf32>
    %176 = arith.minimumf %175, %174 : vector<16x128xf32>
    %177 = math.floor %176 : vector<16x128xf32>
    %cst_41 = arith.constant 1.000000e+00 : f32
    %178 = vector.broadcast %cst_41 : f32 to vector<16x128xf32>
    %179 = arith.addf %177, %178 : vector<16x128xf32>
    %180 = arith.subf %179, %176 : vector<16x128xf32>
    %c0_42 = arith.constant 0 : index
    %181 = arith.index_cast %3 : i32 to index
    %c0_43 = arith.constant 0 : index
    %182 = vector.load %arg2[%c0_42, %181, %c0_43] : memref<64x16x128xbf16, #tpu.memory_space<vmem>>, vector<1x16x128xbf16>
    %183 = vector.shape_cast %182 : vector<1x16x128xbf16> to vector<16x128xbf16>
    %c1_44 = arith.constant 1 : index
    %184 = arith.index_cast %3 : i32 to index
    %c0_45 = arith.constant 0 : index
    %185 = vector.load %arg2[%c1_44, %184, %c0_45] : memref<64x16x128xbf16, #tpu.memory_space<vmem>>, vector<1x16x128xbf16>
    %186 = vector.shape_cast %185 : vector<1x16x128xbf16> to vector<16x128xbf16>
    %187 = arith.maximumf %183, %186 : vector<16x128xbf16>
    %c2_46 = arith.constant 2 : index
    %188 = arith.index_cast %3 : i32 to index
    %c0_47 = arith.constant 0 : index
    %189 = vector.load %arg2[%c2_46, %188, %c0_47] : memref<64x16x128xbf16, #tpu.memory_space<vmem>>, vector<1x16x128xbf16>
    %190 = vector.shape_cast %189 : vector<1x16x128xbf16> to vector<16x128xbf16>
    %191 = arith.maximumf %187, %190 : vector<16x128xbf16>
    %c3_48 = arith.constant 3 : index
    %192 = arith.index_cast %3 : i32 to index
    %c0_49 = arith.constant 0 : index
    %193 = vector.load %arg2[%c3_48, %192, %c0_49] : memref<64x16x128xbf16, #tpu.memory_space<vmem>>, vector<1x16x128xbf16>
    %194 = vector.shape_cast %193 : vector<1x16x128xbf16> to vector<16x128xbf16>
    %195 = arith.maximumf %191, %194 : vector<16x128xbf16>
    %c4_50 = arith.constant 4 : index
    %196 = arith.index_cast %3 : i32 to index
    %c0_51 = arith.constant 0 : index
    %197 = vector.load %arg2[%c4_50, %196, %c0_51] : memref<64x16x128xbf16, #tpu.memory_space<vmem>>, vector<1x16x128xbf16>
    %198 = vector.shape_cast %197 : vector<1x16x128xbf16> to vector<16x128xbf16>
    %199 = arith.maximumf %195, %198 : vector<16x128xbf16>
    %c5_52 = arith.constant 5 : index
    %200 = arith.index_cast %3 : i32 to index
    %c0_53 = arith.constant 0 : index
    %201 = vector.load %arg2[%c5_52, %200, %c0_53] : memref<64x16x128xbf16, #tpu.memory_space<vmem>>, vector<1x16x128xbf16>
    %202 = vector.shape_cast %201 : vector<1x16x128xbf16> to vector<16x128xbf16>
    %203 = arith.maximumf %199, %202 : vector<16x128xbf16>
    %c6_54 = arith.constant 6 : index
    %204 = arith.index_cast %3 : i32 to index
    %c0_55 = arith.constant 0 : index
    %205 = vector.load %arg2[%c6_54, %204, %c0_55] : memref<64x16x128xbf16, #tpu.memory_space<vmem>>, vector<1x16x128xbf16>
    %206 = vector.shape_cast %205 : vector<1x16x128xbf16> to vector<16x128xbf16>
    %207 = arith.maximumf %203, %206 : vector<16x128xbf16>
    %c7_56 = arith.constant 7 : index
    %208 = arith.index_cast %3 : i32 to index
    %c0_57 = arith.constant 0 : index
    %209 = vector.load %arg2[%c7_56, %208, %c0_57] : memref<64x16x128xbf16, #tpu.memory_space<vmem>>, vector<1x16x128xbf16>
    %210 = vector.shape_cast %209 : vector<1x16x128xbf16> to vector<16x128xbf16>
    %211 = arith.maximumf %207, %210 : vector<16x128xbf16>
    %c8_58 = arith.constant 8 : index
    %212 = arith.index_cast %3 : i32 to index
    %c0_59 = arith.constant 0 : index
    %213 = vector.load %arg2[%c8_58, %212, %c0_59] : memref<64x16x128xbf16, #tpu.memory_space<vmem>>, vector<1x16x128xbf16>
    %214 = vector.shape_cast %213 : vector<1x16x128xbf16> to vector<16x128xbf16>
    %215 = arith.maximumf %211, %214 : vector<16x128xbf16>
    %c9_60 = arith.constant 9 : index
    %216 = arith.index_cast %3 : i32 to index
    %c0_61 = arith.constant 0 : index
    %217 = vector.load %arg2[%c9_60, %216, %c0_61] : memref<64x16x128xbf16, #tpu.memory_space<vmem>>, vector<1x16x128xbf16>
    %218 = vector.shape_cast %217 : vector<1x16x128xbf16> to vector<16x128xbf16>
    %219 = arith.maximumf %215, %218 : vector<16x128xbf16>
    %c10_62 = arith.constant 10 : index
    %220 = arith.index_cast %3 : i32 to index
    %c0_63 = arith.constant 0 : index
    %221 = vector.load %arg2[%c10_62, %220, %c0_63] : memref<64x16x128xbf16, #tpu.memory_space<vmem>>, vector<1x16x128xbf16>
    %222 = vector.shape_cast %221 : vector<1x16x128xbf16> to vector<16x128xbf16>
    %223 = arith.maximumf %219, %222 : vector<16x128xbf16>
    %c11_64 = arith.constant 11 : index
    %224 = arith.index_cast %3 : i32 to index
    %c0_65 = arith.constant 0 : index
    %225 = vector.load %arg2[%c11_64, %224, %c0_65] : memref<64x16x128xbf16, #tpu.memory_space<vmem>>, vector<1x16x128xbf16>
    %226 = vector.shape_cast %225 : vector<1x16x128xbf16> to vector<16x128xbf16>
    %227 = arith.maximumf %223, %226 : vector<16x128xbf16>
    %c12_66 = arith.constant 12 : index
    %228 = arith.index_cast %3 : i32 to index
    %c0_67 = arith.constant 0 : index
    %229 = vector.load %arg2[%c12_66, %228, %c0_67] : memref<64x16x128xbf16, #tpu.memory_space<vmem>>, vector<1x16x128xbf16>
    %230 = vector.shape_cast %229 : vector<1x16x128xbf16> to vector<16x128xbf16>
    %231 = arith.maximumf %227, %230 : vector<16x128xbf16>
    %c13_68 = arith.constant 13 : index
    %232 = arith.index_cast %3 : i32 to index
    %c0_69 = arith.constant 0 : index
    %233 = vector.load %arg2[%c13_68, %232, %c0_69] : memref<64x16x128xbf16, #tpu.memory_space<vmem>>, vector<1x16x128xbf16>
    %234 = vector.shape_cast %233 : vector<1x16x128xbf16> to vector<16x128xbf16>
    %235 = arith.maximumf %231, %234 : vector<16x128xbf16>
    %c14 = arith.constant 14 : index
    %236 = arith.index_cast %3 : i32 to index
    %c0_70 = arith.constant 0 : index
    %237 = vector.load %arg2[%c14, %236, %c0_70] : memref<64x16x128xbf16, #tpu.memory_space<vmem>>, vector<1x16x128xbf16>
    %238 = vector.shape_cast %237 : vector<1x16x128xbf16> to vector<16x128xbf16>
    %239 = arith.maximumf %235, %238 : vector<16x128xbf16>
    %c15 = arith.constant 15 : index
    %240 = arith.index_cast %3 : i32 to index
    %c0_71 = arith.constant 0 : index
    %241 = vector.load %arg2[%c15, %240, %c0_71] : memref<64x16x128xbf16, #tpu.memory_space<vmem>>, vector<1x16x128xbf16>
    %242 = vector.shape_cast %241 : vector<1x16x128xbf16> to vector<16x128xbf16>
    %243 = arith.maximumf %239, %242 : vector<16x128xbf16>
    %244 = arith.extf %243 : vector<16x128xbf16> to vector<16x128xf32>
    %cst_72 = arith.constant 0.000000e+00 : f32
    %245 = vector.broadcast %cst_72 : f32 to vector<16x128xf32>
    %cst_73 = arith.constant 0.000000e+00 : f32
    %246 = vector.broadcast %cst_73 : f32 to vector<16x128xf32>
    %cst_74 = arith.constant 0.000000e+00 : f32
    %247 = vector.broadcast %cst_74 : f32 to vector<16x128xf32>
    %c0_75 = arith.constant 0 : index
    %248 = arith.index_cast %3 : i32 to index
    %c0_76 = arith.constant 0 : index
    %249 = vector.load %arg2[%c0_75, %248, %c0_76] : memref<64x16x128xbf16, #tpu.memory_space<vmem>>, vector<1x16x128xbf16>
    %250 = vector.shape_cast %249 : vector<1x16x128xbf16> to vector<16x128xbf16>
    %251 = arith.extf %250 : vector<16x128xbf16> to vector<16x128xf32>
    %252 = arith.subf %251, %244 : vector<16x128xf32>
    %253 = math.exp %252 : vector<16x128xf32>
    %254 = arith.addf %245, %253 : vector<16x128xf32>
    %cst_77 = arith.constant 0.000000e+00 : f32
    %255 = vector.broadcast %cst_77 : f32 to vector<16x128xf32>
    %256 = arith.cmpf oeq, %177, %255 : vector<16x128xf32>
    %257 = arith.select %256, %251, %246 : vector<16x128xi1>, vector<16x128xf32>
    %c1_78 = arith.constant 1 : index
    %258 = arith.index_cast %3 : i32 to index
    %c0_79 = arith.constant 0 : index
    %259 = vector.load %arg2[%c1_78, %258, %c0_79] : memref<64x16x128xbf16, #tpu.memory_space<vmem>>, vector<1x16x128xbf16>
    %260 = vector.shape_cast %259 : vector<1x16x128xbf16> to vector<16x128xbf16>
    %261 = arith.extf %260 : vector<16x128xbf16> to vector<16x128xf32>
    %262 = arith.subf %261, %244 : vector<16x128xf32>
    %263 = math.exp %262 : vector<16x128xf32>
    %264 = arith.addf %254, %263 : vector<16x128xf32>
    %cst_80 = arith.constant 1.000000e+00 : f32
    %265 = vector.broadcast %cst_80 : f32 to vector<16x128xf32>
    %266 = arith.cmpf oeq, %177, %265 : vector<16x128xf32>
    %267 = arith.select %266, %261, %257 : vector<16x128xi1>, vector<16x128xf32>
    %268 = arith.select %256, %261, %247 : vector<16x128xi1>, vector<16x128xf32>
    %c2_81 = arith.constant 2 : index
    %269 = arith.index_cast %3 : i32 to index
    %c0_82 = arith.constant 0 : index
    %270 = vector.load %arg2[%c2_81, %269, %c0_82] : memref<64x16x128xbf16, #tpu.memory_space<vmem>>, vector<1x16x128xbf16>
    %271 = vector.shape_cast %270 : vector<1x16x128xbf16> to vector<16x128xbf16>
    %272 = arith.extf %271 : vector<16x128xbf16> to vector<16x128xf32>
    %273 = arith.subf %272, %244 : vector<16x128xf32>
    %274 = math.exp %273 : vector<16x128xf32>
    %275 = arith.addf %264, %274 : vector<16x128xf32>
    %cst_83 = arith.constant 2.000000e+00 : f32
    %276 = vector.broadcast %cst_83 : f32 to vector<16x128xf32>
    %277 = arith.cmpf oeq, %177, %276 : vector<16x128xf32>
    %278 = arith.select %277, %272, %267 : vector<16x128xi1>, vector<16x128xf32>
    %279 = arith.select %266, %272, %268 : vector<16x128xi1>, vector<16x128xf32>
    %c3_84 = arith.constant 3 : index
    %280 = arith.index_cast %3 : i32 to index
    %c0_85 = arith.constant 0 : index
    %281 = vector.load %arg2[%c3_84, %280, %c0_85] : memref<64x16x128xbf16, #tpu.memory_space<vmem>>, vector<1x16x128xbf16>
    %282 = vector.shape_cast %281 : vector<1x16x128xbf16> to vector<16x128xbf16>
    %283 = arith.extf %282 : vector<16x128xbf16> to vector<16x128xf32>
    %284 = arith.subf %283, %244 : vector<16x128xf32>
    %285 = math.exp %284 : vector<16x128xf32>
    %286 = arith.addf %275, %285 : vector<16x128xf32>
    %cst_86 = arith.constant 3.000000e+00 : f32
    %287 = vector.broadcast %cst_86 : f32 to vector<16x128xf32>
    %288 = arith.cmpf oeq, %177, %287 : vector<16x128xf32>
    %289 = arith.select %288, %283, %278 : vector<16x128xi1>, vector<16x128xf32>
    %290 = arith.select %277, %283, %279 : vector<16x128xi1>, vector<16x128xf32>
    %c4_87 = arith.constant 4 : index
    %291 = arith.index_cast %3 : i32 to index
    %c0_88 = arith.constant 0 : index
    %292 = vector.load %arg2[%c4_87, %291, %c0_88] : memref<64x16x128xbf16, #tpu.memory_space<vmem>>, vector<1x16x128xbf16>
    %293 = vector.shape_cast %292 : vector<1x16x128xbf16> to vector<16x128xbf16>
    %294 = arith.extf %293 : vector<16x128xbf16> to vector<16x128xf32>
    %295 = arith.subf %294, %244 : vector<16x128xf32>
    %296 = math.exp %295 : vector<16x128xf32>
    %297 = arith.addf %286, %296 : vector<16x128xf32>
    %cst_89 = arith.constant 4.000000e+00 : f32
    %298 = vector.broadcast %cst_89 : f32 to vector<16x128xf32>
    %299 = arith.cmpf oeq, %177, %298 : vector<16x128xf32>
    %300 = arith.select %299, %294, %289 : vector<16x128xi1>, vector<16x128xf32>
    %301 = arith.select %288, %294, %290 : vector<16x128xi1>, vector<16x128xf32>
    %c5_90 = arith.constant 5 : index
    %302 = arith.index_cast %3 : i32 to index
    %c0_91 = arith.constant 0 : index
    %303 = vector.load %arg2[%c5_90, %302, %c0_91] : memref<64x16x128xbf16, #tpu.memory_space<vmem>>, vector<1x16x128xbf16>
    %304 = vector.shape_cast %303 : vector<1x16x128xbf16> to vector<16x128xbf16>
    %305 = arith.extf %304 : vector<16x128xbf16> to vector<16x128xf32>
    %306 = arith.subf %305, %244 : vector<16x128xf32>
    %307 = math.exp %306 : vector<16x128xf32>
    %308 = arith.addf %297, %307 : vector<16x128xf32>
    %cst_92 = arith.constant 5.000000e+00 : f32
    %309 = vector.broadcast %cst_92 : f32 to vector<16x128xf32>
    %310 = arith.cmpf oeq, %177, %309 : vector<16x128xf32>
    %311 = arith.select %310, %305, %300 : vector<16x128xi1>, vector<16x128xf32>
    %312 = arith.select %299, %305, %301 : vector<16x128xi1>, vector<16x128xf32>
    %c6_93 = arith.constant 6 : index
    %313 = arith.index_cast %3 : i32 to index
    %c0_94 = arith.constant 0 : index
    %314 = vector.load %arg2[%c6_93, %313, %c0_94] : memref<64x16x128xbf16, #tpu.memory_space<vmem>>, vector<1x16x128xbf16>
    %315 = vector.shape_cast %314 : vector<1x16x128xbf16> to vector<16x128xbf16>
    %316 = arith.extf %315 : vector<16x128xbf16> to vector<16x128xf32>
    %317 = arith.subf %316, %244 : vector<16x128xf32>
    %318 = math.exp %317 : vector<16x128xf32>
    %319 = arith.addf %308, %318 : vector<16x128xf32>
    %cst_95 = arith.constant 6.000000e+00 : f32
    %320 = vector.broadcast %cst_95 : f32 to vector<16x128xf32>
    %321 = arith.cmpf oeq, %177, %320 : vector<16x128xf32>
    %322 = arith.select %321, %316, %311 : vector<16x128xi1>, vector<16x128xf32>
    %323 = arith.select %310, %316, %312 : vector<16x128xi1>, vector<16x128xf32>
    %c7_96 = arith.constant 7 : index
    %324 = arith.index_cast %3 : i32 to index
    %c0_97 = arith.constant 0 : index
    %325 = vector.load %arg2[%c7_96, %324, %c0_97] : memref<64x16x128xbf16, #tpu.memory_space<vmem>>, vector<1x16x128xbf16>
    %326 = vector.shape_cast %325 : vector<1x16x128xbf16> to vector<16x128xbf16>
    %327 = arith.extf %326 : vector<16x128xbf16> to vector<16x128xf32>
    %328 = arith.subf %327, %244 : vector<16x128xf32>
    %329 = math.exp %328 : vector<16x128xf32>
    %330 = arith.addf %319, %329 : vector<16x128xf32>
    %cst_98 = arith.constant 7.000000e+00 : f32
    %331 = vector.broadcast %cst_98 : f32 to vector<16x128xf32>
    %332 = arith.cmpf oeq, %177, %331 : vector<16x128xf32>
    %333 = arith.select %332, %327, %322 : vector<16x128xi1>, vector<16x128xf32>
    %334 = arith.select %321, %327, %323 : vector<16x128xi1>, vector<16x128xf32>
    %c8_99 = arith.constant 8 : index
    %335 = arith.index_cast %3 : i32 to index
    %c0_100 = arith.constant 0 : index
    %336 = vector.load %arg2[%c8_99, %335, %c0_100] : memref<64x16x128xbf16, #tpu.memory_space<vmem>>, vector<1x16x128xbf16>
    %337 = vector.shape_cast %336 : vector<1x16x128xbf16> to vector<16x128xbf16>
    %338 = arith.extf %337 : vector<16x128xbf16> to vector<16x128xf32>
    %339 = arith.subf %338, %244 : vector<16x128xf32>
    %340 = math.exp %339 : vector<16x128xf32>
    %341 = arith.addf %330, %340 : vector<16x128xf32>
    %cst_101 = arith.constant 8.000000e+00 : f32
    %342 = vector.broadcast %cst_101 : f32 to vector<16x128xf32>
    %343 = arith.cmpf oeq, %177, %342 : vector<16x128xf32>
    %344 = arith.select %343, %338, %333 : vector<16x128xi1>, vector<16x128xf32>
    %345 = arith.select %332, %338, %334 : vector<16x128xi1>, vector<16x128xf32>
    %c9_102 = arith.constant 9 : index
    %346 = arith.index_cast %3 : i32 to index
    %c0_103 = arith.constant 0 : index
    %347 = vector.load %arg2[%c9_102, %346, %c0_103] : memref<64x16x128xbf16, #tpu.memory_space<vmem>>, vector<1x16x128xbf16>
    %348 = vector.shape_cast %347 : vector<1x16x128xbf16> to vector<16x128xbf16>
    %349 = arith.extf %348 : vector<16x128xbf16> to vector<16x128xf32>
    %350 = arith.subf %349, %244 : vector<16x128xf32>
    %351 = math.exp %350 : vector<16x128xf32>
    %352 = arith.addf %341, %351 : vector<16x128xf32>
    %cst_104 = arith.constant 9.000000e+00 : f32
    %353 = vector.broadcast %cst_104 : f32 to vector<16x128xf32>
    %354 = arith.cmpf oeq, %177, %353 : vector<16x128xf32>
    %355 = arith.select %354, %349, %344 : vector<16x128xi1>, vector<16x128xf32>
    %356 = arith.select %343, %349, %345 : vector<16x128xi1>, vector<16x128xf32>
    %c10_105 = arith.constant 10 : index
    %357 = arith.index_cast %3 : i32 to index
    %c0_106 = arith.constant 0 : index
    %358 = vector.load %arg2[%c10_105, %357, %c0_106] : memref<64x16x128xbf16, #tpu.memory_space<vmem>>, vector<1x16x128xbf16>
    %359 = vector.shape_cast %358 : vector<1x16x128xbf16> to vector<16x128xbf16>
    %360 = arith.extf %359 : vector<16x128xbf16> to vector<16x128xf32>
    %361 = arith.subf %360, %244 : vector<16x128xf32>
    %362 = math.exp %361 : vector<16x128xf32>
    %363 = arith.addf %352, %362 : vector<16x128xf32>
    %cst_107 = arith.constant 1.000000e+01 : f32
    %364 = vector.broadcast %cst_107 : f32 to vector<16x128xf32>
    %365 = arith.cmpf oeq, %177, %364 : vector<16x128xf32>
    %366 = arith.select %365, %360, %355 : vector<16x128xi1>, vector<16x128xf32>
    %367 = arith.select %354, %360, %356 : vector<16x128xi1>, vector<16x128xf32>
    %c11_108 = arith.constant 11 : index
    %368 = arith.index_cast %3 : i32 to index
    %c0_109 = arith.constant 0 : index
    %369 = vector.load %arg2[%c11_108, %368, %c0_109] : memref<64x16x128xbf16, #tpu.memory_space<vmem>>, vector<1x16x128xbf16>
    %370 = vector.shape_cast %369 : vector<1x16x128xbf16> to vector<16x128xbf16>
    %371 = arith.extf %370 : vector<16x128xbf16> to vector<16x128xf32>
    %372 = arith.subf %371, %244 : vector<16x128xf32>
    %373 = math.exp %372 : vector<16x128xf32>
    %374 = arith.addf %363, %373 : vector<16x128xf32>
    %cst_110 = arith.constant 1.100000e+01 : f32
    %375 = vector.broadcast %cst_110 : f32 to vector<16x128xf32>
    %376 = arith.cmpf oeq, %177, %375 : vector<16x128xf32>
    %377 = arith.select %376, %371, %366 : vector<16x128xi1>, vector<16x128xf32>
    %378 = arith.select %365, %371, %367 : vector<16x128xi1>, vector<16x128xf32>
    %c12_111 = arith.constant 12 : index
    %379 = arith.index_cast %3 : i32 to index
    %c0_112 = arith.constant 0 : index
    %380 = vector.load %arg2[%c12_111, %379, %c0_112] : memref<64x16x128xbf16, #tpu.memory_space<vmem>>, vector<1x16x128xbf16>
    %381 = vector.shape_cast %380 : vector<1x16x128xbf16> to vector<16x128xbf16>
    %382 = arith.extf %381 : vector<16x128xbf16> to vector<16x128xf32>
    %383 = arith.subf %382, %244 : vector<16x128xf32>
    %384 = math.exp %383 : vector<16x128xf32>
    %385 = arith.addf %374, %384 : vector<16x128xf32>
    %cst_113 = arith.constant 1.200000e+01 : f32
    %386 = vector.broadcast %cst_113 : f32 to vector<16x128xf32>
    %387 = arith.cmpf oeq, %177, %386 : vector<16x128xf32>
    %388 = arith.select %387, %382, %377 : vector<16x128xi1>, vector<16x128xf32>
    %389 = arith.select %376, %382, %378 : vector<16x128xi1>, vector<16x128xf32>
    %c13_114 = arith.constant 13 : index
    %390 = arith.index_cast %3 : i32 to index
    %c0_115 = arith.constant 0 : index
    %391 = vector.load %arg2[%c13_114, %390, %c0_115] : memref<64x16x128xbf16, #tpu.memory_space<vmem>>, vector<1x16x128xbf16>
    %392 = vector.shape_cast %391 : vector<1x16x128xbf16> to vector<16x128xbf16>
    %393 = arith.extf %392 : vector<16x128xbf16> to vector<16x128xf32>
    %394 = arith.subf %393, %244 : vector<16x128xf32>
    %395 = math.exp %394 : vector<16x128xf32>
    %396 = arith.addf %385, %395 : vector<16x128xf32>
    %cst_116 = arith.constant 1.300000e+01 : f32
    %397 = vector.broadcast %cst_116 : f32 to vector<16x128xf32>
    %398 = arith.cmpf oeq, %177, %397 : vector<16x128xf32>
    %399 = arith.select %398, %393, %388 : vector<16x128xi1>, vector<16x128xf32>
    %400 = arith.select %387, %393, %389 : vector<16x128xi1>, vector<16x128xf32>
    %c14_117 = arith.constant 14 : index
    %401 = arith.index_cast %3 : i32 to index
    %c0_118 = arith.constant 0 : index
    %402 = vector.load %arg2[%c14_117, %401, %c0_118] : memref<64x16x128xbf16, #tpu.memory_space<vmem>>, vector<1x16x128xbf16>
    %403 = vector.shape_cast %402 : vector<1x16x128xbf16> to vector<16x128xbf16>
    %404 = arith.extf %403 : vector<16x128xbf16> to vector<16x128xf32>
    %405 = arith.subf %404, %244 : vector<16x128xf32>
    %406 = math.exp %405 : vector<16x128xf32>
    %407 = arith.addf %396, %406 : vector<16x128xf32>
    %cst_119 = arith.constant 1.400000e+01 : f32
    %408 = vector.broadcast %cst_119 : f32 to vector<16x128xf32>
    %409 = arith.cmpf oeq, %177, %408 : vector<16x128xf32>
    %410 = arith.select %409, %404, %399 : vector<16x128xi1>, vector<16x128xf32>
    %411 = arith.select %398, %404, %400 : vector<16x128xi1>, vector<16x128xf32>
    %c15_120 = arith.constant 15 : index
    %412 = arith.index_cast %3 : i32 to index
    %c0_121 = arith.constant 0 : index
    %413 = vector.load %arg2[%c15_120, %412, %c0_121] : memref<64x16x128xbf16, #tpu.memory_space<vmem>>, vector<1x16x128xbf16>
    %414 = vector.shape_cast %413 : vector<1x16x128xbf16> to vector<16x128xbf16>
    %415 = arith.extf %414 : vector<16x128xbf16> to vector<16x128xf32>
    %416 = arith.subf %415, %244 : vector<16x128xf32>
    %417 = math.exp %416 : vector<16x128xf32>
    %418 = arith.addf %407, %417 : vector<16x128xf32>
    %cst_122 = arith.constant 1.500000e+01 : f32
    %419 = vector.broadcast %cst_122 : f32 to vector<16x128xf32>
    %420 = arith.cmpf oeq, %177, %419 : vector<16x128xf32>
    %421 = arith.select %420, %415, %410 : vector<16x128xi1>, vector<16x128xf32>
    %422 = arith.select %409, %415, %411 : vector<16x128xi1>, vector<16x128xf32>
    %423 = math.log %418 : vector<16x128xf32>
    %424 = arith.addf %244, %423 : vector<16x128xf32>
    %425 = arith.subf %424, %421 : vector<16x128xf32>
    %426 = arith.mulf %425, %180 : vector<16x128xf32>
    %427 = arith.addf %172, %426 : vector<16x128xf32>
    %428 = arith.subf %424, %422 : vector<16x128xf32>
    %cst_123 = arith.constant 1.000000e+00 : f32
    %429 = vector.broadcast %cst_123 : f32 to vector<16x128xf32>
    %430 = arith.subf %429, %180 : vector<16x128xf32>
    %431 = arith.mulf %428, %430 : vector<16x128xf32>
    %432 = arith.addf %427, %431 : vector<16x128xf32>
    %cst_124 = arith.constant 0.000000e+00 : f32
    %cst_125 = arith.constant 1.499000e+01 : f32
    %433 = vector.broadcast %cst_124 : f32 to vector<16x128xf32>
    %434 = arith.maximumf %433, %167 : vector<16x128xf32>
    %435 = vector.broadcast %cst_125 : f32 to vector<16x128xf32>
    %436 = arith.minimumf %435, %434 : vector<16x128xf32>
    %437 = math.floor %436 : vector<16x128xf32>
    %cst_126 = arith.constant 1.000000e+00 : f32
    %438 = vector.broadcast %cst_126 : f32 to vector<16x128xf32>
    %439 = arith.addf %437, %438 : vector<16x128xf32>
    %440 = arith.subf %439, %436 : vector<16x128xf32>
    %c16 = arith.constant 16 : index
    %441 = arith.index_cast %3 : i32 to index
    %c0_127 = arith.constant 0 : index
    %442 = vector.load %arg2[%c16, %441, %c0_127] : memref<64x16x128xbf16, #tpu.memory_space<vmem>>, vector<1x16x128xbf16>
    %443 = vector.shape_cast %442 : vector<1x16x128xbf16> to vector<16x128xbf16>
    %c17 = arith.constant 17 : index
    %444 = arith.index_cast %3 : i32 to index
    %c0_128 = arith.constant 0 : index
    %445 = vector.load %arg2[%c17, %444, %c0_128] : memref<64x16x128xbf16, #tpu.memory_space<vmem>>, vector<1x16x128xbf16>
    %446 = vector.shape_cast %445 : vector<1x16x128xbf16> to vector<16x128xbf16>
    %447 = arith.maximumf %443, %446 : vector<16x128xbf16>
    %c18 = arith.constant 18 : index
    %448 = arith.index_cast %3 : i32 to index
    %c0_129 = arith.constant 0 : index
    %449 = vector.load %arg2[%c18, %448, %c0_129] : memref<64x16x128xbf16, #tpu.memory_space<vmem>>, vector<1x16x128xbf16>
    %450 = vector.shape_cast %449 : vector<1x16x128xbf16> to vector<16x128xbf16>
    %451 = arith.maximumf %447, %450 : vector<16x128xbf16>
    %c19 = arith.constant 19 : index
    %452 = arith.index_cast %3 : i32 to index
    %c0_130 = arith.constant 0 : index
    %453 = vector.load %arg2[%c19, %452, %c0_130] : memref<64x16x128xbf16, #tpu.memory_space<vmem>>, vector<1x16x128xbf16>
    %454 = vector.shape_cast %453 : vector<1x16x128xbf16> to vector<16x128xbf16>
    %455 = arith.maximumf %451, %454 : vector<16x128xbf16>
    %c20 = arith.constant 20 : index
    %456 = arith.index_cast %3 : i32 to index
    %c0_131 = arith.constant 0 : index
    %457 = vector.load %arg2[%c20, %456, %c0_131] : memref<64x16x128xbf16, #tpu.memory_space<vmem>>, vector<1x16x128xbf16>
    %458 = vector.shape_cast %457 : vector<1x16x128xbf16> to vector<16x128xbf16>
    %459 = arith.maximumf %455, %458 : vector<16x128xbf16>
    %c21 = arith.constant 21 : index
    %460 = arith.index_cast %3 : i32 to index
    %c0_132 = arith.constant 0 : index
    %461 = vector.load %arg2[%c21, %460, %c0_132] : memref<64x16x128xbf16, #tpu.memory_space<vmem>>, vector<1x16x128xbf16>
    %462 = vector.shape_cast %461 : vector<1x16x128xbf16> to vector<16x128xbf16>
    %463 = arith.maximumf %459, %462 : vector<16x128xbf16>
    %c22 = arith.constant 22 : index
    %464 = arith.index_cast %3 : i32 to index
    %c0_133 = arith.constant 0 : index
    %465 = vector.load %arg2[%c22, %464, %c0_133] : memref<64x16x128xbf16, #tpu.memory_space<vmem>>, vector<1x16x128xbf16>
    %466 = vector.shape_cast %465 : vector<1x16x128xbf16> to vector<16x128xbf16>
    %467 = arith.maximumf %463, %466 : vector<16x128xbf16>
    %c23 = arith.constant 23 : index
    %468 = arith.index_cast %3 : i32 to index
    %c0_134 = arith.constant 0 : index
    %469 = vector.load %arg2[%c23, %468, %c0_134] : memref<64x16x128xbf16, #tpu.memory_space<vmem>>, vector<1x16x128xbf16>
    %470 = vector.shape_cast %469 : vector<1x16x128xbf16> to vector<16x128xbf16>
    %471 = arith.maximumf %467, %470 : vector<16x128xbf16>
    %c24 = arith.constant 24 : index
    %472 = arith.index_cast %3 : i32 to index
    %c0_135 = arith.constant 0 : index
    %473 = vector.load %arg2[%c24, %472, %c0_135] : memref<64x16x128xbf16, #tpu.memory_space<vmem>>, vector<1x16x128xbf16>
    %474 = vector.shape_cast %473 : vector<1x16x128xbf16> to vector<16x128xbf16>
    %475 = arith.maximumf %471, %474 : vector<16x128xbf16>
    %c25 = arith.constant 25 : index
    %476 = arith.index_cast %3 : i32 to index
    %c0_136 = arith.constant 0 : index
    %477 = vector.load %arg2[%c25, %476, %c0_136] : memref<64x16x128xbf16, #tpu.memory_space<vmem>>, vector<1x16x128xbf16>
    %478 = vector.shape_cast %477 : vector<1x16x128xbf16> to vector<16x128xbf16>
    %479 = arith.maximumf %475, %478 : vector<16x128xbf16>
    %c26 = arith.constant 26 : index
    %480 = arith.index_cast %3 : i32 to index
    %c0_137 = arith.constant 0 : index
    %481 = vector.load %arg2[%c26, %480, %c0_137] : memref<64x16x128xbf16, #tpu.memory_space<vmem>>, vector<1x16x128xbf16>
    %482 = vector.shape_cast %481 : vector<1x16x128xbf16> to vector<16x128xbf16>
    %483 = arith.maximumf %479, %482 : vector<16x128xbf16>
    %c27 = arith.constant 27 : index
    %484 = arith.index_cast %3 : i32 to index
    %c0_138 = arith.constant 0 : index
    %485 = vector.load %arg2[%c27, %484, %c0_138] : memref<64x16x128xbf16, #tpu.memory_space<vmem>>, vector<1x16x128xbf16>
    %486 = vector.shape_cast %485 : vector<1x16x128xbf16> to vector<16x128xbf16>
    %487 = arith.maximumf %483, %486 : vector<16x128xbf16>
    %c28 = arith.constant 28 : index
    %488 = arith.index_cast %3 : i32 to index
    %c0_139 = arith.constant 0 : index
    %489 = vector.load %arg2[%c28, %488, %c0_139] : memref<64x16x128xbf16, #tpu.memory_space<vmem>>, vector<1x16x128xbf16>
    %490 = vector.shape_cast %489 : vector<1x16x128xbf16> to vector<16x128xbf16>
    %491 = arith.maximumf %487, %490 : vector<16x128xbf16>
    %c29 = arith.constant 29 : index
    %492 = arith.index_cast %3 : i32 to index
    %c0_140 = arith.constant 0 : index
    %493 = vector.load %arg2[%c29, %492, %c0_140] : memref<64x16x128xbf16, #tpu.memory_space<vmem>>, vector<1x16x128xbf16>
    %494 = vector.shape_cast %493 : vector<1x16x128xbf16> to vector<16x128xbf16>
    %495 = arith.maximumf %491, %494 : vector<16x128xbf16>
    %c30 = arith.constant 30 : index
    %496 = arith.index_cast %3 : i32 to index
    %c0_141 = arith.constant 0 : index
    %497 = vector.load %arg2[%c30, %496, %c0_141] : memref<64x16x128xbf16, #tpu.memory_space<vmem>>, vector<1x16x128xbf16>
    %498 = vector.shape_cast %497 : vector<1x16x128xbf16> to vector<16x128xbf16>
    %499 = arith.maximumf %495, %498 : vector<16x128xbf16>
    %c31 = arith.constant 31 : index
    %500 = arith.index_cast %3 : i32 to index
    %c0_142 = arith.constant 0 : index
    %501 = vector.load %arg2[%c31, %500, %c0_142] : memref<64x16x128xbf16, #tpu.memory_space<vmem>>, vector<1x16x128xbf16>
    %502 = vector.shape_cast %501 : vector<1x16x128xbf16> to vector<16x128xbf16>
    %503 = arith.maximumf %499, %502 : vector<16x128xbf16>
    %504 = arith.extf %503 : vector<16x128xbf16> to vector<16x128xf32>
    %cst_143 = arith.constant 0.000000e+00 : f32
    %505 = vector.broadcast %cst_143 : f32 to vector<16x128xf32>
    %cst_144 = arith.constant 0.000000e+00 : f32
    %506 = vector.broadcast %cst_144 : f32 to vector<16x128xf32>
    %cst_145 = arith.constant 0.000000e+00 : f32
    %507 = vector.broadcast %cst_145 : f32 to vector<16x128xf32>
    %c16_146 = arith.constant 16 : index
    %508 = arith.index_cast %3 : i32 to index
    %c0_147 = arith.constant 0 : index
    %509 = vector.load %arg2[%c16_146, %508, %c0_147] : memref<64x16x128xbf16, #tpu.memory_space<vmem>>, vector<1x16x128xbf16>
    %510 = vector.shape_cast %509 : vector<1x16x128xbf16> to vector<16x128xbf16>
    %511 = arith.extf %510 : vector<16x128xbf16> to vector<16x128xf32>
    %512 = arith.subf %511, %504 : vector<16x128xf32>
    %513 = math.exp %512 : vector<16x128xf32>
    %514 = arith.addf %505, %513 : vector<16x128xf32>
    %cst_148 = arith.constant 0.000000e+00 : f32
    %515 = vector.broadcast %cst_148 : f32 to vector<16x128xf32>
    %516 = arith.cmpf oeq, %437, %515 : vector<16x128xf32>
    %517 = arith.select %516, %511, %506 : vector<16x128xi1>, vector<16x128xf32>
    %c17_149 = arith.constant 17 : index
    %518 = arith.index_cast %3 : i32 to index
    %c0_150 = arith.constant 0 : index
    %519 = vector.load %arg2[%c17_149, %518, %c0_150] : memref<64x16x128xbf16, #tpu.memory_space<vmem>>, vector<1x16x128xbf16>
    %520 = vector.shape_cast %519 : vector<1x16x128xbf16> to vector<16x128xbf16>
    %521 = arith.extf %520 : vector<16x128xbf16> to vector<16x128xf32>
    %522 = arith.subf %521, %504 : vector<16x128xf32>
    %523 = math.exp %522 : vector<16x128xf32>
    %524 = arith.addf %514, %523 : vector<16x128xf32>
    %cst_151 = arith.constant 1.000000e+00 : f32
    %525 = vector.broadcast %cst_151 : f32 to vector<16x128xf32>
    %526 = arith.cmpf oeq, %437, %525 : vector<16x128xf32>
    %527 = arith.select %526, %521, %517 : vector<16x128xi1>, vector<16x128xf32>
    %528 = arith.select %516, %521, %507 : vector<16x128xi1>, vector<16x128xf32>
    %c18_152 = arith.constant 18 : index
    %529 = arith.index_cast %3 : i32 to index
    %c0_153 = arith.constant 0 : index
    %530 = vector.load %arg2[%c18_152, %529, %c0_153] : memref<64x16x128xbf16, #tpu.memory_space<vmem>>, vector<1x16x128xbf16>
    %531 = vector.shape_cast %530 : vector<1x16x128xbf16> to vector<16x128xbf16>
    %532 = arith.extf %531 : vector<16x128xbf16> to vector<16x128xf32>
    %533 = arith.subf %532, %504 : vector<16x128xf32>
    %534 = math.exp %533 : vector<16x128xf32>
    %535 = arith.addf %524, %534 : vector<16x128xf32>
    %cst_154 = arith.constant 2.000000e+00 : f32
    %536 = vector.broadcast %cst_154 : f32 to vector<16x128xf32>
    %537 = arith.cmpf oeq, %437, %536 : vector<16x128xf32>
    %538 = arith.select %537, %532, %527 : vector<16x128xi1>, vector<16x128xf32>
    %539 = arith.select %526, %532, %528 : vector<16x128xi1>, vector<16x128xf32>
    %c19_155 = arith.constant 19 : index
    %540 = arith.index_cast %3 : i32 to index
    %c0_156 = arith.constant 0 : index
    %541 = vector.load %arg2[%c19_155, %540, %c0_156] : memref<64x16x128xbf16, #tpu.memory_space<vmem>>, vector<1x16x128xbf16>
    %542 = vector.shape_cast %541 : vector<1x16x128xbf16> to vector<16x128xbf16>
    %543 = arith.extf %542 : vector<16x128xbf16> to vector<16x128xf32>
    %544 = arith.subf %543, %504 : vector<16x128xf32>
    %545 = math.exp %544 : vector<16x128xf32>
    %546 = arith.addf %535, %545 : vector<16x128xf32>
    %cst_157 = arith.constant 3.000000e+00 : f32
    %547 = vector.broadcast %cst_157 : f32 to vector<16x128xf32>
    %548 = arith.cmpf oeq, %437, %547 : vector<16x128xf32>
    %549 = arith.select %548, %543, %538 : vector<16x128xi1>, vector<16x128xf32>
    %550 = arith.select %537, %543, %539 : vector<16x128xi1>, vector<16x128xf32>
    %c20_158 = arith.constant 20 : index
    %551 = arith.index_cast %3 : i32 to index
    %c0_159 = arith.constant 0 : index
    %552 = vector.load %arg2[%c20_158, %551, %c0_159] : memref<64x16x128xbf16, #tpu.memory_space<vmem>>, vector<1x16x128xbf16>
    %553 = vector.shape_cast %552 : vector<1x16x128xbf16> to vector<16x128xbf16>
    %554 = arith.extf %553 : vector<16x128xbf16> to vector<16x128xf32>
    %555 = arith.subf %554, %504 : vector<16x128xf32>
    %556 = math.exp %555 : vector<16x128xf32>
    %557 = arith.addf %546, %556 : vector<16x128xf32>
    %cst_160 = arith.constant 4.000000e+00 : f32
    %558 = vector.broadcast %cst_160 : f32 to vector<16x128xf32>
    %559 = arith.cmpf oeq, %437, %558 : vector<16x128xf32>
    %560 = arith.select %559, %554, %549 : vector<16x128xi1>, vector<16x128xf32>
    %561 = arith.select %548, %554, %550 : vector<16x128xi1>, vector<16x128xf32>
    %c21_161 = arith.constant 21 : index
    %562 = arith.index_cast %3 : i32 to index
    %c0_162 = arith.constant 0 : index
    %563 = vector.load %arg2[%c21_161, %562, %c0_162] : memref<64x16x128xbf16, #tpu.memory_space<vmem>>, vector<1x16x128xbf16>
    %564 = vector.shape_cast %563 : vector<1x16x128xbf16> to vector<16x128xbf16>
    %565 = arith.extf %564 : vector<16x128xbf16> to vector<16x128xf32>
    %566 = arith.subf %565, %504 : vector<16x128xf32>
    %567 = math.exp %566 : vector<16x128xf32>
    %568 = arith.addf %557, %567 : vector<16x128xf32>
    %cst_163 = arith.constant 5.000000e+00 : f32
    %569 = vector.broadcast %cst_163 : f32 to vector<16x128xf32>
    %570 = arith.cmpf oeq, %437, %569 : vector<16x128xf32>
    %571 = arith.select %570, %565, %560 : vector<16x128xi1>, vector<16x128xf32>
    %572 = arith.select %559, %565, %561 : vector<16x128xi1>, vector<16x128xf32>
    %c22_164 = arith.constant 22 : index
    %573 = arith.index_cast %3 : i32 to index
    %c0_165 = arith.constant 0 : index
    %574 = vector.load %arg2[%c22_164, %573, %c0_165] : memref<64x16x128xbf16, #tpu.memory_space<vmem>>, vector<1x16x128xbf16>
    %575 = vector.shape_cast %574 : vector<1x16x128xbf16> to vector<16x128xbf16>
    %576 = arith.extf %575 : vector<16x128xbf16> to vector<16x128xf32>
    %577 = arith.subf %576, %504 : vector<16x128xf32>
    %578 = math.exp %577 : vector<16x128xf32>
    %579 = arith.addf %568, %578 : vector<16x128xf32>
    %cst_166 = arith.constant 6.000000e+00 : f32
    %580 = vector.broadcast %cst_166 : f32 to vector<16x128xf32>
    %581 = arith.cmpf oeq, %437, %580 : vector<16x128xf32>
    %582 = arith.select %581, %576, %571 : vector<16x128xi1>, vector<16x128xf32>
    %583 = arith.select %570, %576, %572 : vector<16x128xi1>, vector<16x128xf32>
    %c23_167 = arith.constant 23 : index
    %584 = arith.index_cast %3 : i32 to index
    %c0_168 = arith.constant 0 : index
    %585 = vector.load %arg2[%c23_167, %584, %c0_168] : memref<64x16x128xbf16, #tpu.memory_space<vmem>>, vector<1x16x128xbf16>
    %586 = vector.shape_cast %585 : vector<1x16x128xbf16> to vector<16x128xbf16>
    %587 = arith.extf %586 : vector<16x128xbf16> to vector<16x128xf32>
    %588 = arith.subf %587, %504 : vector<16x128xf32>
    %589 = math.exp %588 : vector<16x128xf32>
    %590 = arith.addf %579, %589 : vector<16x128xf32>
    %cst_169 = arith.constant 7.000000e+00 : f32
    %591 = vector.broadcast %cst_169 : f32 to vector<16x128xf32>
    %592 = arith.cmpf oeq, %437, %591 : vector<16x128xf32>
    %593 = arith.select %592, %587, %582 : vector<16x128xi1>, vector<16x128xf32>
    %594 = arith.select %581, %587, %583 : vector<16x128xi1>, vector<16x128xf32>
    %c24_170 = arith.constant 24 : index
    %595 = arith.index_cast %3 : i32 to index
    %c0_171 = arith.constant 0 : index
    %596 = vector.load %arg2[%c24_170, %595, %c0_171] : memref<64x16x128xbf16, #tpu.memory_space<vmem>>, vector<1x16x128xbf16>
    %597 = vector.shape_cast %596 : vector<1x16x128xbf16> to vector<16x128xbf16>
    %598 = arith.extf %597 : vector<16x128xbf16> to vector<16x128xf32>
    %599 = arith.subf %598, %504 : vector<16x128xf32>
    %600 = math.exp %599 : vector<16x128xf32>
    %601 = arith.addf %590, %600 : vector<16x128xf32>
    %cst_172 = arith.constant 8.000000e+00 : f32
    %602 = vector.broadcast %cst_172 : f32 to vector<16x128xf32>
    %603 = arith.cmpf oeq, %437, %602 : vector<16x128xf32>
    %604 = arith.select %603, %598, %593 : vector<16x128xi1>, vector<16x128xf32>
    %605 = arith.select %592, %598, %594 : vector<16x128xi1>, vector<16x128xf32>
    %c25_173 = arith.constant 25 : index
    %606 = arith.index_cast %3 : i32 to index
    %c0_174 = arith.constant 0 : index
    %607 = vector.load %arg2[%c25_173, %606, %c0_174] : memref<64x16x128xbf16, #tpu.memory_space<vmem>>, vector<1x16x128xbf16>
    %608 = vector.shape_cast %607 : vector<1x16x128xbf16> to vector<16x128xbf16>
    %609 = arith.extf %608 : vector<16x128xbf16> to vector<16x128xf32>
    %610 = arith.subf %609, %504 : vector<16x128xf32>
    %611 = math.exp %610 : vector<16x128xf32>
    %612 = arith.addf %601, %611 : vector<16x128xf32>
    %cst_175 = arith.constant 9.000000e+00 : f32
    %613 = vector.broadcast %cst_175 : f32 to vector<16x128xf32>
    %614 = arith.cmpf oeq, %437, %613 : vector<16x128xf32>
    %615 = arith.select %614, %609, %604 : vector<16x128xi1>, vector<16x128xf32>
    %616 = arith.select %603, %609, %605 : vector<16x128xi1>, vector<16x128xf32>
    %c26_176 = arith.constant 26 : index
    %617 = arith.index_cast %3 : i32 to index
    %c0_177 = arith.constant 0 : index
    %618 = vector.load %arg2[%c26_176, %617, %c0_177] : memref<64x16x128xbf16, #tpu.memory_space<vmem>>, vector<1x16x128xbf16>
    %619 = vector.shape_cast %618 : vector<1x16x128xbf16> to vector<16x128xbf16>
    %620 = arith.extf %619 : vector<16x128xbf16> to vector<16x128xf32>
    %621 = arith.subf %620, %504 : vector<16x128xf32>
    %622 = math.exp %621 : vector<16x128xf32>
    %623 = arith.addf %612, %622 : vector<16x128xf32>
    %cst_178 = arith.constant 1.000000e+01 : f32
    %624 = vector.broadcast %cst_178 : f32 to vector<16x128xf32>
    %625 = arith.cmpf oeq, %437, %624 : vector<16x128xf32>
    %626 = arith.select %625, %620, %615 : vector<16x128xi1>, vector<16x128xf32>
    %627 = arith.select %614, %620, %616 : vector<16x128xi1>, vector<16x128xf32>
    %c27_179 = arith.constant 27 : index
    %628 = arith.index_cast %3 : i32 to index
    %c0_180 = arith.constant 0 : index
    %629 = vector.load %arg2[%c27_179, %628, %c0_180] : memref<64x16x128xbf16, #tpu.memory_space<vmem>>, vector<1x16x128xbf16>
    %630 = vector.shape_cast %629 : vector<1x16x128xbf16> to vector<16x128xbf16>
    %631 = arith.extf %630 : vector<16x128xbf16> to vector<16x128xf32>
    %632 = arith.subf %631, %504 : vector<16x128xf32>
    %633 = math.exp %632 : vector<16x128xf32>
    %634 = arith.addf %623, %633 : vector<16x128xf32>
    %cst_181 = arith.constant 1.100000e+01 : f32
    %635 = vector.broadcast %cst_181 : f32 to vector<16x128xf32>
    %636 = arith.cmpf oeq, %437, %635 : vector<16x128xf32>
    %637 = arith.select %636, %631, %626 : vector<16x128xi1>, vector<16x128xf32>
    %638 = arith.select %625, %631, %627 : vector<16x128xi1>, vector<16x128xf32>
    %c28_182 = arith.constant 28 : index
    %639 = arith.index_cast %3 : i32 to index
    %c0_183 = arith.constant 0 : index
    %640 = vector.load %arg2[%c28_182, %639, %c0_183] : memref<64x16x128xbf16, #tpu.memory_space<vmem>>, vector<1x16x128xbf16>
    %641 = vector.shape_cast %640 : vector<1x16x128xbf16> to vector<16x128xbf16>
    %642 = arith.extf %641 : vector<16x128xbf16> to vector<16x128xf32>
    %643 = arith.subf %642, %504 : vector<16x128xf32>
    %644 = math.exp %643 : vector<16x128xf32>
    %645 = arith.addf %634, %644 : vector<16x128xf32>
    %cst_184 = arith.constant 1.200000e+01 : f32
    %646 = vector.broadcast %cst_184 : f32 to vector<16x128xf32>
    %647 = arith.cmpf oeq, %437, %646 : vector<16x128xf32>
    %648 = arith.select %647, %642, %637 : vector<16x128xi1>, vector<16x128xf32>
    %649 = arith.select %636, %642, %638 : vector<16x128xi1>, vector<16x128xf32>
    %c29_185 = arith.constant 29 : index
    %650 = arith.index_cast %3 : i32 to index
    %c0_186 = arith.constant 0 : index
    %651 = vector.load %arg2[%c29_185, %650, %c0_186] : memref<64x16x128xbf16, #tpu.memory_space<vmem>>, vector<1x16x128xbf16>
    %652 = vector.shape_cast %651 : vector<1x16x128xbf16> to vector<16x128xbf16>
    %653 = arith.extf %652 : vector<16x128xbf16> to vector<16x128xf32>
    %654 = arith.subf %653, %504 : vector<16x128xf32>
    %655 = math.exp %654 : vector<16x128xf32>
    %656 = arith.addf %645, %655 : vector<16x128xf32>
    %cst_187 = arith.constant 1.300000e+01 : f32
    %657 = vector.broadcast %cst_187 : f32 to vector<16x128xf32>
    %658 = arith.cmpf oeq, %437, %657 : vector<16x128xf32>
    %659 = arith.select %658, %653, %648 : vector<16x128xi1>, vector<16x128xf32>
    %660 = arith.select %647, %653, %649 : vector<16x128xi1>, vector<16x128xf32>
    %c30_188 = arith.constant 30 : index
    %661 = arith.index_cast %3 : i32 to index
    %c0_189 = arith.constant 0 : index
    %662 = vector.load %arg2[%c30_188, %661, %c0_189] : memref<64x16x128xbf16, #tpu.memory_space<vmem>>, vector<1x16x128xbf16>
    %663 = vector.shape_cast %662 : vector<1x16x128xbf16> to vector<16x128xbf16>
    %664 = arith.extf %663 : vector<16x128xbf16> to vector<16x128xf32>
    %665 = arith.subf %664, %504 : vector<16x128xf32>
    %666 = math.exp %665 : vector<16x128xf32>
    %667 = arith.addf %656, %666 : vector<16x128xf32>
    %cst_190 = arith.constant 1.400000e+01 : f32
    %668 = vector.broadcast %cst_190 : f32 to vector<16x128xf32>
    %669 = arith.cmpf oeq, %437, %668 : vector<16x128xf32>
    %670 = arith.select %669, %664, %659 : vector<16x128xi1>, vector<16x128xf32>
    %671 = arith.select %658, %664, %660 : vector<16x128xi1>, vector<16x128xf32>
    %c31_191 = arith.constant 31 : index
    %672 = arith.index_cast %3 : i32 to index
    %c0_192 = arith.constant 0 : index
    %673 = vector.load %arg2[%c31_191, %672, %c0_192] : memref<64x16x128xbf16, #tpu.memory_space<vmem>>, vector<1x16x128xbf16>
    %674 = vector.shape_cast %673 : vector<1x16x128xbf16> to vector<16x128xbf16>
    %675 = arith.extf %674 : vector<16x128xbf16> to vector<16x128xf32>
    %676 = arith.subf %675, %504 : vector<16x128xf32>
    %677 = math.exp %676 : vector<16x128xf32>
    %678 = arith.addf %667, %677 : vector<16x128xf32>
    %cst_193 = arith.constant 1.500000e+01 : f32
    %679 = vector.broadcast %cst_193 : f32 to vector<16x128xf32>
    %680 = arith.cmpf oeq, %437, %679 : vector<16x128xf32>
    %681 = arith.select %680, %675, %670 : vector<16x128xi1>, vector<16x128xf32>
    %682 = arith.select %669, %675, %671 : vector<16x128xi1>, vector<16x128xf32>
    %683 = math.log %678 : vector<16x128xf32>
    %684 = arith.addf %504, %683 : vector<16x128xf32>
    %685 = arith.subf %684, %681 : vector<16x128xf32>
    %686 = arith.mulf %685, %440 : vector<16x128xf32>
    %687 = arith.addf %432, %686 : vector<16x128xf32>
    %688 = arith.subf %684, %682 : vector<16x128xf32>
    %cst_194 = arith.constant 1.000000e+00 : f32
    %689 = vector.broadcast %cst_194 : f32 to vector<16x128xf32>
    %690 = arith.subf %689, %440 : vector<16x128xf32>
    %691 = arith.mulf %688, %690 : vector<16x128xf32>
    %692 = arith.addf %687, %691 : vector<16x128xf32>
    %cst_195 = arith.constant 0.000000e+00 : f32
    %cst_196 = arith.constant 1.499000e+01 : f32
    %693 = vector.broadcast %cst_195 : f32 to vector<16x128xf32>
    %694 = arith.maximumf %693, %169 : vector<16x128xf32>
    %695 = vector.broadcast %cst_196 : f32 to vector<16x128xf32>
    %696 = arith.minimumf %695, %694 : vector<16x128xf32>
    %697 = math.floor %696 : vector<16x128xf32>
    %cst_197 = arith.constant 1.000000e+00 : f32
    %698 = vector.broadcast %cst_197 : f32 to vector<16x128xf32>
    %699 = arith.addf %697, %698 : vector<16x128xf32>
    %700 = arith.subf %699, %696 : vector<16x128xf32>
    %c32 = arith.constant 32 : index
    %701 = arith.index_cast %3 : i32 to index
    %c0_198 = arith.constant 0 : index
    %702 = vector.load %arg2[%c32, %701, %c0_198] : memref<64x16x128xbf16, #tpu.memory_space<vmem>>, vector<1x16x128xbf16>
    %703 = vector.shape_cast %702 : vector<1x16x128xbf16> to vector<16x128xbf16>
    %c33 = arith.constant 33 : index
    %704 = arith.index_cast %3 : i32 to index
    %c0_199 = arith.constant 0 : index
    %705 = vector.load %arg2[%c33, %704, %c0_199] : memref<64x16x128xbf16, #tpu.memory_space<vmem>>, vector<1x16x128xbf16>
    %706 = vector.shape_cast %705 : vector<1x16x128xbf16> to vector<16x128xbf16>
    %707 = arith.maximumf %703, %706 : vector<16x128xbf16>
    %c34 = arith.constant 34 : index
    %708 = arith.index_cast %3 : i32 to index
    %c0_200 = arith.constant 0 : index
    %709 = vector.load %arg2[%c34, %708, %c0_200] : memref<64x16x128xbf16, #tpu.memory_space<vmem>>, vector<1x16x128xbf16>
    %710 = vector.shape_cast %709 : vector<1x16x128xbf16> to vector<16x128xbf16>
    %711 = arith.maximumf %707, %710 : vector<16x128xbf16>
    %c35 = arith.constant 35 : index
    %712 = arith.index_cast %3 : i32 to index
    %c0_201 = arith.constant 0 : index
    %713 = vector.load %arg2[%c35, %712, %c0_201] : memref<64x16x128xbf16, #tpu.memory_space<vmem>>, vector<1x16x128xbf16>
    %714 = vector.shape_cast %713 : vector<1x16x128xbf16> to vector<16x128xbf16>
    %715 = arith.maximumf %711, %714 : vector<16x128xbf16>
    %c36 = arith.constant 36 : index
    %716 = arith.index_cast %3 : i32 to index
    %c0_202 = arith.constant 0 : index
    %717 = vector.load %arg2[%c36, %716, %c0_202] : memref<64x16x128xbf16, #tpu.memory_space<vmem>>, vector<1x16x128xbf16>
    %718 = vector.shape_cast %717 : vector<1x16x128xbf16> to vector<16x128xbf16>
    %719 = arith.maximumf %715, %718 : vector<16x128xbf16>
    %c37 = arith.constant 37 : index
    %720 = arith.index_cast %3 : i32 to index
    %c0_203 = arith.constant 0 : index
    %721 = vector.load %arg2[%c37, %720, %c0_203] : memref<64x16x128xbf16, #tpu.memory_space<vmem>>, vector<1x16x128xbf16>
    %722 = vector.shape_cast %721 : vector<1x16x128xbf16> to vector<16x128xbf16>
    %723 = arith.maximumf %719, %722 : vector<16x128xbf16>
    %c38 = arith.constant 38 : index
    %724 = arith.index_cast %3 : i32 to index
    %c0_204 = arith.constant 0 : index
    %725 = vector.load %arg2[%c38, %724, %c0_204] : memref<64x16x128xbf16, #tpu.memory_space<vmem>>, vector<1x16x128xbf16>
    %726 = vector.shape_cast %725 : vector<1x16x128xbf16> to vector<16x128xbf16>
    %727 = arith.maximumf %723, %726 : vector<16x128xbf16>
    %c39 = arith.constant 39 : index
    %728 = arith.index_cast %3 : i32 to index
    %c0_205 = arith.constant 0 : index
    %729 = vector.load %arg2[%c39, %728, %c0_205] : memref<64x16x128xbf16, #tpu.memory_space<vmem>>, vector<1x16x128xbf16>
    %730 = vector.shape_cast %729 : vector<1x16x128xbf16> to vector<16x128xbf16>
    %731 = arith.maximumf %727, %730 : vector<16x128xbf16>
    %c40 = arith.constant 40 : index
    %732 = arith.index_cast %3 : i32 to index
    %c0_206 = arith.constant 0 : index
    %733 = vector.load %arg2[%c40, %732, %c0_206] : memref<64x16x128xbf16, #tpu.memory_space<vmem>>, vector<1x16x128xbf16>
    %734 = vector.shape_cast %733 : vector<1x16x128xbf16> to vector<16x128xbf16>
    %735 = arith.maximumf %731, %734 : vector<16x128xbf16>
    %c41 = arith.constant 41 : index
    %736 = arith.index_cast %3 : i32 to index
    %c0_207 = arith.constant 0 : index
    %737 = vector.load %arg2[%c41, %736, %c0_207] : memref<64x16x128xbf16, #tpu.memory_space<vmem>>, vector<1x16x128xbf16>
    %738 = vector.shape_cast %737 : vector<1x16x128xbf16> to vector<16x128xbf16>
    %739 = arith.maximumf %735, %738 : vector<16x128xbf16>
    %c42 = arith.constant 42 : index
    %740 = arith.index_cast %3 : i32 to index
    %c0_208 = arith.constant 0 : index
    %741 = vector.load %arg2[%c42, %740, %c0_208] : memref<64x16x128xbf16, #tpu.memory_space<vmem>>, vector<1x16x128xbf16>
    %742 = vector.shape_cast %741 : vector<1x16x128xbf16> to vector<16x128xbf16>
    %743 = arith.maximumf %739, %742 : vector<16x128xbf16>
    %c43 = arith.constant 43 : index
    %744 = arith.index_cast %3 : i32 to index
    %c0_209 = arith.constant 0 : index
    %745 = vector.load %arg2[%c43, %744, %c0_209] : memref<64x16x128xbf16, #tpu.memory_space<vmem>>, vector<1x16x128xbf16>
    %746 = vector.shape_cast %745 : vector<1x16x128xbf16> to vector<16x128xbf16>
    %747 = arith.maximumf %743, %746 : vector<16x128xbf16>
    %c44 = arith.constant 44 : index
    %748 = arith.index_cast %3 : i32 to index
    %c0_210 = arith.constant 0 : index
    %749 = vector.load %arg2[%c44, %748, %c0_210] : memref<64x16x128xbf16, #tpu.memory_space<vmem>>, vector<1x16x128xbf16>
    %750 = vector.shape_cast %749 : vector<1x16x128xbf16> to vector<16x128xbf16>
    %751 = arith.maximumf %747, %750 : vector<16x128xbf16>
    %c45 = arith.constant 45 : index
    %752 = arith.index_cast %3 : i32 to index
    %c0_211 = arith.constant 0 : index
    %753 = vector.load %arg2[%c45, %752, %c0_211] : memref<64x16x128xbf16, #tpu.memory_space<vmem>>, vector<1x16x128xbf16>
    %754 = vector.shape_cast %753 : vector<1x16x128xbf16> to vector<16x128xbf16>
    %755 = arith.maximumf %751, %754 : vector<16x128xbf16>
    %c46 = arith.constant 46 : index
    %756 = arith.index_cast %3 : i32 to index
    %c0_212 = arith.constant 0 : index
    %757 = vector.load %arg2[%c46, %756, %c0_212] : memref<64x16x128xbf16, #tpu.memory_space<vmem>>, vector<1x16x128xbf16>
    %758 = vector.shape_cast %757 : vector<1x16x128xbf16> to vector<16x128xbf16>
    %759 = arith.maximumf %755, %758 : vector<16x128xbf16>
    %c47 = arith.constant 47 : index
    %760 = arith.index_cast %3 : i32 to index
    %c0_213 = arith.constant 0 : index
    %761 = vector.load %arg2[%c47, %760, %c0_213] : memref<64x16x128xbf16, #tpu.memory_space<vmem>>, vector<1x16x128xbf16>
    %762 = vector.shape_cast %761 : vector<1x16x128xbf16> to vector<16x128xbf16>
    %763 = arith.maximumf %759, %762 : vector<16x128xbf16>
    %764 = arith.extf %763 : vector<16x128xbf16> to vector<16x128xf32>
    %cst_214 = arith.constant 0.000000e+00 : f32
    %765 = vector.broadcast %cst_214 : f32 to vector<16x128xf32>
    %cst_215 = arith.constant 0.000000e+00 : f32
    %766 = vector.broadcast %cst_215 : f32 to vector<16x128xf32>
    %cst_216 = arith.constant 0.000000e+00 : f32
    %767 = vector.broadcast %cst_216 : f32 to vector<16x128xf32>
    %c32_217 = arith.constant 32 : index
    %768 = arith.index_cast %3 : i32 to index
    %c0_218 = arith.constant 0 : index
    %769 = vector.load %arg2[%c32_217, %768, %c0_218] : memref<64x16x128xbf16, #tpu.memory_space<vmem>>, vector<1x16x128xbf16>
    %770 = vector.shape_cast %769 : vector<1x16x128xbf16> to vector<16x128xbf16>
    %771 = arith.extf %770 : vector<16x128xbf16> to vector<16x128xf32>
    %772 = arith.subf %771, %764 : vector<16x128xf32>
    %773 = math.exp %772 : vector<16x128xf32>
    %774 = arith.addf %765, %773 : vector<16x128xf32>
    %cst_219 = arith.constant 0.000000e+00 : f32
    %775 = vector.broadcast %cst_219 : f32 to vector<16x128xf32>
    %776 = arith.cmpf oeq, %697, %775 : vector<16x128xf32>
    %777 = arith.select %776, %771, %766 : vector<16x128xi1>, vector<16x128xf32>
    %c33_220 = arith.constant 33 : index
    %778 = arith.index_cast %3 : i32 to index
    %c0_221 = arith.constant 0 : index
    %779 = vector.load %arg2[%c33_220, %778, %c0_221] : memref<64x16x128xbf16, #tpu.memory_space<vmem>>, vector<1x16x128xbf16>
    %780 = vector.shape_cast %779 : vector<1x16x128xbf16> to vector<16x128xbf16>
    %781 = arith.extf %780 : vector<16x128xbf16> to vector<16x128xf32>
    %782 = arith.subf %781, %764 : vector<16x128xf32>
    %783 = math.exp %782 : vector<16x128xf32>
    %784 = arith.addf %774, %783 : vector<16x128xf32>
    %cst_222 = arith.constant 1.000000e+00 : f32
    %785 = vector.broadcast %cst_222 : f32 to vector<16x128xf32>
    %786 = arith.cmpf oeq, %697, %785 : vector<16x128xf32>
    %787 = arith.select %786, %781, %777 : vector<16x128xi1>, vector<16x128xf32>
    %788 = arith.select %776, %781, %767 : vector<16x128xi1>, vector<16x128xf32>
    %c34_223 = arith.constant 34 : index
    %789 = arith.index_cast %3 : i32 to index
    %c0_224 = arith.constant 0 : index
    %790 = vector.load %arg2[%c34_223, %789, %c0_224] : memref<64x16x128xbf16, #tpu.memory_space<vmem>>, vector<1x16x128xbf16>
    %791 = vector.shape_cast %790 : vector<1x16x128xbf16> to vector<16x128xbf16>
    %792 = arith.extf %791 : vector<16x128xbf16> to vector<16x128xf32>
    %793 = arith.subf %792, %764 : vector<16x128xf32>
    %794 = math.exp %793 : vector<16x128xf32>
    %795 = arith.addf %784, %794 : vector<16x128xf32>
    %cst_225 = arith.constant 2.000000e+00 : f32
    %796 = vector.broadcast %cst_225 : f32 to vector<16x128xf32>
    %797 = arith.cmpf oeq, %697, %796 : vector<16x128xf32>
    %798 = arith.select %797, %792, %787 : vector<16x128xi1>, vector<16x128xf32>
    %799 = arith.select %786, %792, %788 : vector<16x128xi1>, vector<16x128xf32>
    %c35_226 = arith.constant 35 : index
    %800 = arith.index_cast %3 : i32 to index
    %c0_227 = arith.constant 0 : index
    %801 = vector.load %arg2[%c35_226, %800, %c0_227] : memref<64x16x128xbf16, #tpu.memory_space<vmem>>, vector<1x16x128xbf16>
    %802 = vector.shape_cast %801 : vector<1x16x128xbf16> to vector<16x128xbf16>
    %803 = arith.extf %802 : vector<16x128xbf16> to vector<16x128xf32>
    %804 = arith.subf %803, %764 : vector<16x128xf32>
    %805 = math.exp %804 : vector<16x128xf32>
    %806 = arith.addf %795, %805 : vector<16x128xf32>
    %cst_228 = arith.constant 3.000000e+00 : f32
    %807 = vector.broadcast %cst_228 : f32 to vector<16x128xf32>
    %808 = arith.cmpf oeq, %697, %807 : vector<16x128xf32>
    %809 = arith.select %808, %803, %798 : vector<16x128xi1>, vector<16x128xf32>
    %810 = arith.select %797, %803, %799 : vector<16x128xi1>, vector<16x128xf32>
    %c36_229 = arith.constant 36 : index
    %811 = arith.index_cast %3 : i32 to index
    %c0_230 = arith.constant 0 : index
    %812 = vector.load %arg2[%c36_229, %811, %c0_230] : memref<64x16x128xbf16, #tpu.memory_space<vmem>>, vector<1x16x128xbf16>
    %813 = vector.shape_cast %812 : vector<1x16x128xbf16> to vector<16x128xbf16>
    %814 = arith.extf %813 : vector<16x128xbf16> to vector<16x128xf32>
    %815 = arith.subf %814, %764 : vector<16x128xf32>
    %816 = math.exp %815 : vector<16x128xf32>
    %817 = arith.addf %806, %816 : vector<16x128xf32>
    %cst_231 = arith.constant 4.000000e+00 : f32
    %818 = vector.broadcast %cst_231 : f32 to vector<16x128xf32>
    %819 = arith.cmpf oeq, %697, %818 : vector<16x128xf32>
    %820 = arith.select %819, %814, %809 : vector<16x128xi1>, vector<16x128xf32>
    %821 = arith.select %808, %814, %810 : vector<16x128xi1>, vector<16x128xf32>
    %c37_232 = arith.constant 37 : index
    %822 = arith.index_cast %3 : i32 to index
    %c0_233 = arith.constant 0 : index
    %823 = vector.load %arg2[%c37_232, %822, %c0_233] : memref<64x16x128xbf16, #tpu.memory_space<vmem>>, vector<1x16x128xbf16>
    %824 = vector.shape_cast %823 : vector<1x16x128xbf16> to vector<16x128xbf16>
    %825 = arith.extf %824 : vector<16x128xbf16> to vector<16x128xf32>
    %826 = arith.subf %825, %764 : vector<16x128xf32>
    %827 = math.exp %826 : vector<16x128xf32>
    %828 = arith.addf %817, %827 : vector<16x128xf32>
    %cst_234 = arith.constant 5.000000e+00 : f32
    %829 = vector.broadcast %cst_234 : f32 to vector<16x128xf32>
    %830 = arith.cmpf oeq, %697, %829 : vector<16x128xf32>
    %831 = arith.select %830, %825, %820 : vector<16x128xi1>, vector<16x128xf32>
    %832 = arith.select %819, %825, %821 : vector<16x128xi1>, vector<16x128xf32>
    %c38_235 = arith.constant 38 : index
    %833 = arith.index_cast %3 : i32 to index
    %c0_236 = arith.constant 0 : index
    %834 = vector.load %arg2[%c38_235, %833, %c0_236] : memref<64x16x128xbf16, #tpu.memory_space<vmem>>, vector<1x16x128xbf16>
    %835 = vector.shape_cast %834 : vector<1x16x128xbf16> to vector<16x128xbf16>
    %836 = arith.extf %835 : vector<16x128xbf16> to vector<16x128xf32>
    %837 = arith.subf %836, %764 : vector<16x128xf32>
    %838 = math.exp %837 : vector<16x128xf32>
    %839 = arith.addf %828, %838 : vector<16x128xf32>
    %cst_237 = arith.constant 6.000000e+00 : f32
    %840 = vector.broadcast %cst_237 : f32 to vector<16x128xf32>
    %841 = arith.cmpf oeq, %697, %840 : vector<16x128xf32>
    %842 = arith.select %841, %836, %831 : vector<16x128xi1>, vector<16x128xf32>
    %843 = arith.select %830, %836, %832 : vector<16x128xi1>, vector<16x128xf32>
    %c39_238 = arith.constant 39 : index
    %844 = arith.index_cast %3 : i32 to index
    %c0_239 = arith.constant 0 : index
    %845 = vector.load %arg2[%c39_238, %844, %c0_239] : memref<64x16x128xbf16, #tpu.memory_space<vmem>>, vector<1x16x128xbf16>
    %846 = vector.shape_cast %845 : vector<1x16x128xbf16> to vector<16x128xbf16>
    %847 = arith.extf %846 : vector<16x128xbf16> to vector<16x128xf32>
    %848 = arith.subf %847, %764 : vector<16x128xf32>
    %849 = math.exp %848 : vector<16x128xf32>
    %850 = arith.addf %839, %849 : vector<16x128xf32>
    %cst_240 = arith.constant 7.000000e+00 : f32
    %851 = vector.broadcast %cst_240 : f32 to vector<16x128xf32>
    %852 = arith.cmpf oeq, %697, %851 : vector<16x128xf32>
    %853 = arith.select %852, %847, %842 : vector<16x128xi1>, vector<16x128xf32>
    %854 = arith.select %841, %847, %843 : vector<16x128xi1>, vector<16x128xf32>
    %c40_241 = arith.constant 40 : index
    %855 = arith.index_cast %3 : i32 to index
    %c0_242 = arith.constant 0 : index
    %856 = vector.load %arg2[%c40_241, %855, %c0_242] : memref<64x16x128xbf16, #tpu.memory_space<vmem>>, vector<1x16x128xbf16>
    %857 = vector.shape_cast %856 : vector<1x16x128xbf16> to vector<16x128xbf16>
    %858 = arith.extf %857 : vector<16x128xbf16> to vector<16x128xf32>
    %859 = arith.subf %858, %764 : vector<16x128xf32>
    %860 = math.exp %859 : vector<16x128xf32>
    %861 = arith.addf %850, %860 : vector<16x128xf32>
    %cst_243 = arith.constant 8.000000e+00 : f32
    %862 = vector.broadcast %cst_243 : f32 to vector<16x128xf32>
    %863 = arith.cmpf oeq, %697, %862 : vector<16x128xf32>
    %864 = arith.select %863, %858, %853 : vector<16x128xi1>, vector<16x128xf32>
    %865 = arith.select %852, %858, %854 : vector<16x128xi1>, vector<16x128xf32>
    %c41_244 = arith.constant 41 : index
    %866 = arith.index_cast %3 : i32 to index
    %c0_245 = arith.constant 0 : index
    %867 = vector.load %arg2[%c41_244, %866, %c0_245] : memref<64x16x128xbf16, #tpu.memory_space<vmem>>, vector<1x16x128xbf16>
    %868 = vector.shape_cast %867 : vector<1x16x128xbf16> to vector<16x128xbf16>
    %869 = arith.extf %868 : vector<16x128xbf16> to vector<16x128xf32>
    %870 = arith.subf %869, %764 : vector<16x128xf32>
    %871 = math.exp %870 : vector<16x128xf32>
    %872 = arith.addf %861, %871 : vector<16x128xf32>
    %cst_246 = arith.constant 9.000000e+00 : f32
    %873 = vector.broadcast %cst_246 : f32 to vector<16x128xf32>
    %874 = arith.cmpf oeq, %697, %873 : vector<16x128xf32>
    %875 = arith.select %874, %869, %864 : vector<16x128xi1>, vector<16x128xf32>
    %876 = arith.select %863, %869, %865 : vector<16x128xi1>, vector<16x128xf32>
    %c42_247 = arith.constant 42 : index
    %877 = arith.index_cast %3 : i32 to index
    %c0_248 = arith.constant 0 : index
    %878 = vector.load %arg2[%c42_247, %877, %c0_248] : memref<64x16x128xbf16, #tpu.memory_space<vmem>>, vector<1x16x128xbf16>
    %879 = vector.shape_cast %878 : vector<1x16x128xbf16> to vector<16x128xbf16>
    %880 = arith.extf %879 : vector<16x128xbf16> to vector<16x128xf32>
    %881 = arith.subf %880, %764 : vector<16x128xf32>
    %882 = math.exp %881 : vector<16x128xf32>
    %883 = arith.addf %872, %882 : vector<16x128xf32>
    %cst_249 = arith.constant 1.000000e+01 : f32
    %884 = vector.broadcast %cst_249 : f32 to vector<16x128xf32>
    %885 = arith.cmpf oeq, %697, %884 : vector<16x128xf32>
    %886 = arith.select %885, %880, %875 : vector<16x128xi1>, vector<16x128xf32>
    %887 = arith.select %874, %880, %876 : vector<16x128xi1>, vector<16x128xf32>
    %c43_250 = arith.constant 43 : index
    %888 = arith.index_cast %3 : i32 to index
    %c0_251 = arith.constant 0 : index
    %889 = vector.load %arg2[%c43_250, %888, %c0_251] : memref<64x16x128xbf16, #tpu.memory_space<vmem>>, vector<1x16x128xbf16>
    %890 = vector.shape_cast %889 : vector<1x16x128xbf16> to vector<16x128xbf16>
    %891 = arith.extf %890 : vector<16x128xbf16> to vector<16x128xf32>
    %892 = arith.subf %891, %764 : vector<16x128xf32>
    %893 = math.exp %892 : vector<16x128xf32>
    %894 = arith.addf %883, %893 : vector<16x128xf32>
    %cst_252 = arith.constant 1.100000e+01 : f32
    %895 = vector.broadcast %cst_252 : f32 to vector<16x128xf32>
    %896 = arith.cmpf oeq, %697, %895 : vector<16x128xf32>
    %897 = arith.select %896, %891, %886 : vector<16x128xi1>, vector<16x128xf32>
    %898 = arith.select %885, %891, %887 : vector<16x128xi1>, vector<16x128xf32>
    %c44_253 = arith.constant 44 : index
    %899 = arith.index_cast %3 : i32 to index
    %c0_254 = arith.constant 0 : index
    %900 = vector.load %arg2[%c44_253, %899, %c0_254] : memref<64x16x128xbf16, #tpu.memory_space<vmem>>, vector<1x16x128xbf16>
    %901 = vector.shape_cast %900 : vector<1x16x128xbf16> to vector<16x128xbf16>
    %902 = arith.extf %901 : vector<16x128xbf16> to vector<16x128xf32>
    %903 = arith.subf %902, %764 : vector<16x128xf32>
    %904 = math.exp %903 : vector<16x128xf32>
    %905 = arith.addf %894, %904 : vector<16x128xf32>
    %cst_255 = arith.constant 1.200000e+01 : f32
    %906 = vector.broadcast %cst_255 : f32 to vector<16x128xf32>
    %907 = arith.cmpf oeq, %697, %906 : vector<16x128xf32>
    %908 = arith.select %907, %902, %897 : vector<16x128xi1>, vector<16x128xf32>
    %909 = arith.select %896, %902, %898 : vector<16x128xi1>, vector<16x128xf32>
    %c45_256 = arith.constant 45 : index
    %910 = arith.index_cast %3 : i32 to index
    %c0_257 = arith.constant 0 : index
    %911 = vector.load %arg2[%c45_256, %910, %c0_257] : memref<64x16x128xbf16, #tpu.memory_space<vmem>>, vector<1x16x128xbf16>
    %912 = vector.shape_cast %911 : vector<1x16x128xbf16> to vector<16x128xbf16>
    %913 = arith.extf %912 : vector<16x128xbf16> to vector<16x128xf32>
    %914 = arith.subf %913, %764 : vector<16x128xf32>
    %915 = math.exp %914 : vector<16x128xf32>
    %916 = arith.addf %905, %915 : vector<16x128xf32>
    %cst_258 = arith.constant 1.300000e+01 : f32
    %917 = vector.broadcast %cst_258 : f32 to vector<16x128xf32>
    %918 = arith.cmpf oeq, %697, %917 : vector<16x128xf32>
    %919 = arith.select %918, %913, %908 : vector<16x128xi1>, vector<16x128xf32>
    %920 = arith.select %907, %913, %909 : vector<16x128xi1>, vector<16x128xf32>
    %c46_259 = arith.constant 46 : index
    %921 = arith.index_cast %3 : i32 to index
    %c0_260 = arith.constant 0 : index
    %922 = vector.load %arg2[%c46_259, %921, %c0_260] : memref<64x16x128xbf16, #tpu.memory_space<vmem>>, vector<1x16x128xbf16>
    %923 = vector.shape_cast %922 : vector<1x16x128xbf16> to vector<16x128xbf16>
    %924 = arith.extf %923 : vector<16x128xbf16> to vector<16x128xf32>
    %925 = arith.subf %924, %764 : vector<16x128xf32>
    %926 = math.exp %925 : vector<16x128xf32>
    %927 = arith.addf %916, %926 : vector<16x128xf32>
    %cst_261 = arith.constant 1.400000e+01 : f32
    %928 = vector.broadcast %cst_261 : f32 to vector<16x128xf32>
    %929 = arith.cmpf oeq, %697, %928 : vector<16x128xf32>
    %930 = arith.select %929, %924, %919 : vector<16x128xi1>, vector<16x128xf32>
    %931 = arith.select %918, %924, %920 : vector<16x128xi1>, vector<16x128xf32>
    %c47_262 = arith.constant 47 : index
    %932 = arith.index_cast %3 : i32 to index
    %c0_263 = arith.constant 0 : index
    %933 = vector.load %arg2[%c47_262, %932, %c0_263] : memref<64x16x128xbf16, #tpu.memory_space<vmem>>, vector<1x16x128xbf16>
    %934 = vector.shape_cast %933 : vector<1x16x128xbf16> to vector<16x128xbf16>
    %935 = arith.extf %934 : vector<16x128xbf16> to vector<16x128xf32>
    %936 = arith.subf %935, %764 : vector<16x128xf32>
    %937 = math.exp %936 : vector<16x128xf32>
    %938 = arith.addf %927, %937 : vector<16x128xf32>
    %cst_264 = arith.constant 1.500000e+01 : f32
    %939 = vector.broadcast %cst_264 : f32 to vector<16x128xf32>
    %940 = arith.cmpf oeq, %697, %939 : vector<16x128xf32>
    %941 = arith.select %940, %935, %930 : vector<16x128xi1>, vector<16x128xf32>
    %942 = arith.select %929, %935, %931 : vector<16x128xi1>, vector<16x128xf32>
    %943 = math.log %938 : vector<16x128xf32>
    %944 = arith.addf %764, %943 : vector<16x128xf32>
    %945 = arith.subf %944, %941 : vector<16x128xf32>
    %946 = arith.mulf %945, %700 : vector<16x128xf32>
    %947 = arith.addf %692, %946 : vector<16x128xf32>
    %948 = arith.subf %944, %942 : vector<16x128xf32>
    %cst_265 = arith.constant 1.000000e+00 : f32
    %949 = vector.broadcast %cst_265 : f32 to vector<16x128xf32>
    %950 = arith.subf %949, %700 : vector<16x128xf32>
    %951 = arith.mulf %948, %950 : vector<16x128xf32>
    %952 = arith.addf %947, %951 : vector<16x128xf32>
    %cst_266 = arith.constant 0.000000e+00 : f32
    %cst_267 = arith.constant 1.499000e+01 : f32
    %953 = vector.broadcast %cst_266 : f32 to vector<16x128xf32>
    %954 = arith.maximumf %953, %171 : vector<16x128xf32>
    %955 = vector.broadcast %cst_267 : f32 to vector<16x128xf32>
    %956 = arith.minimumf %955, %954 : vector<16x128xf32>
    %957 = math.floor %956 : vector<16x128xf32>
    %cst_268 = arith.constant 1.000000e+00 : f32
    %958 = vector.broadcast %cst_268 : f32 to vector<16x128xf32>
    %959 = arith.addf %957, %958 : vector<16x128xf32>
    %960 = arith.subf %959, %956 : vector<16x128xf32>
    %c48 = arith.constant 48 : index
    %961 = arith.index_cast %3 : i32 to index
    %c0_269 = arith.constant 0 : index
    %962 = vector.load %arg2[%c48, %961, %c0_269] : memref<64x16x128xbf16, #tpu.memory_space<vmem>>, vector<1x16x128xbf16>
    %963 = vector.shape_cast %962 : vector<1x16x128xbf16> to vector<16x128xbf16>
    %c49 = arith.constant 49 : index
    %964 = arith.index_cast %3 : i32 to index
    %c0_270 = arith.constant 0 : index
    %965 = vector.load %arg2[%c49, %964, %c0_270] : memref<64x16x128xbf16, #tpu.memory_space<vmem>>, vector<1x16x128xbf16>
    %966 = vector.shape_cast %965 : vector<1x16x128xbf16> to vector<16x128xbf16>
    %967 = arith.maximumf %963, %966 : vector<16x128xbf16>
    %c50 = arith.constant 50 : index
    %968 = arith.index_cast %3 : i32 to index
    %c0_271 = arith.constant 0 : index
    %969 = vector.load %arg2[%c50, %968, %c0_271] : memref<64x16x128xbf16, #tpu.memory_space<vmem>>, vector<1x16x128xbf16>
    %970 = vector.shape_cast %969 : vector<1x16x128xbf16> to vector<16x128xbf16>
    %971 = arith.maximumf %967, %970 : vector<16x128xbf16>
    %c51 = arith.constant 51 : index
    %972 = arith.index_cast %3 : i32 to index
    %c0_272 = arith.constant 0 : index
    %973 = vector.load %arg2[%c51, %972, %c0_272] : memref<64x16x128xbf16, #tpu.memory_space<vmem>>, vector<1x16x128xbf16>
    %974 = vector.shape_cast %973 : vector<1x16x128xbf16> to vector<16x128xbf16>
    %975 = arith.maximumf %971, %974 : vector<16x128xbf16>
    %c52 = arith.constant 52 : index
    %976 = arith.index_cast %3 : i32 to index
    %c0_273 = arith.constant 0 : index
    %977 = vector.load %arg2[%c52, %976, %c0_273] : memref<64x16x128xbf16, #tpu.memory_space<vmem>>, vector<1x16x128xbf16>
    %978 = vector.shape_cast %977 : vector<1x16x128xbf16> to vector<16x128xbf16>
    %979 = arith.maximumf %975, %978 : vector<16x128xbf16>
    %c53 = arith.constant 53 : index
    %980 = arith.index_cast %3 : i32 to index
    %c0_274 = arith.constant 0 : index
    %981 = vector.load %arg2[%c53, %980, %c0_274] : memref<64x16x128xbf16, #tpu.memory_space<vmem>>, vector<1x16x128xbf16>
    %982 = vector.shape_cast %981 : vector<1x16x128xbf16> to vector<16x128xbf16>
    %983 = arith.maximumf %979, %982 : vector<16x128xbf16>
    %c54 = arith.constant 54 : index
    %984 = arith.index_cast %3 : i32 to index
    %c0_275 = arith.constant 0 : index
    %985 = vector.load %arg2[%c54, %984, %c0_275] : memref<64x16x128xbf16, #tpu.memory_space<vmem>>, vector<1x16x128xbf16>
    %986 = vector.shape_cast %985 : vector<1x16x128xbf16> to vector<16x128xbf16>
    %987 = arith.maximumf %983, %986 : vector<16x128xbf16>
    %c55 = arith.constant 55 : index
    %988 = arith.index_cast %3 : i32 to index
    %c0_276 = arith.constant 0 : index
    %989 = vector.load %arg2[%c55, %988, %c0_276] : memref<64x16x128xbf16, #tpu.memory_space<vmem>>, vector<1x16x128xbf16>
    %990 = vector.shape_cast %989 : vector<1x16x128xbf16> to vector<16x128xbf16>
    %991 = arith.maximumf %987, %990 : vector<16x128xbf16>
    %c56 = arith.constant 56 : index
    %992 = arith.index_cast %3 : i32 to index
    %c0_277 = arith.constant 0 : index
    %993 = vector.load %arg2[%c56, %992, %c0_277] : memref<64x16x128xbf16, #tpu.memory_space<vmem>>, vector<1x16x128xbf16>
    %994 = vector.shape_cast %993 : vector<1x16x128xbf16> to vector<16x128xbf16>
    %995 = arith.maximumf %991, %994 : vector<16x128xbf16>
    %c57 = arith.constant 57 : index
    %996 = arith.index_cast %3 : i32 to index
    %c0_278 = arith.constant 0 : index
    %997 = vector.load %arg2[%c57, %996, %c0_278] : memref<64x16x128xbf16, #tpu.memory_space<vmem>>, vector<1x16x128xbf16>
    %998 = vector.shape_cast %997 : vector<1x16x128xbf16> to vector<16x128xbf16>
    %999 = arith.maximumf %995, %998 : vector<16x128xbf16>
    %c58 = arith.constant 58 : index
    %1000 = arith.index_cast %3 : i32 to index
    %c0_279 = arith.constant 0 : index
    %1001 = vector.load %arg2[%c58, %1000, %c0_279] : memref<64x16x128xbf16, #tpu.memory_space<vmem>>, vector<1x16x128xbf16>
    %1002 = vector.shape_cast %1001 : vector<1x16x128xbf16> to vector<16x128xbf16>
    %1003 = arith.maximumf %999, %1002 : vector<16x128xbf16>
    %c59 = arith.constant 59 : index
    %1004 = arith.index_cast %3 : i32 to index
    %c0_280 = arith.constant 0 : index
    %1005 = vector.load %arg2[%c59, %1004, %c0_280] : memref<64x16x128xbf16, #tpu.memory_space<vmem>>, vector<1x16x128xbf16>
    %1006 = vector.shape_cast %1005 : vector<1x16x128xbf16> to vector<16x128xbf16>
    %1007 = arith.maximumf %1003, %1006 : vector<16x128xbf16>
    %c60 = arith.constant 60 : index
    %1008 = arith.index_cast %3 : i32 to index
    %c0_281 = arith.constant 0 : index
    %1009 = vector.load %arg2[%c60, %1008, %c0_281] : memref<64x16x128xbf16, #tpu.memory_space<vmem>>, vector<1x16x128xbf16>
    %1010 = vector.shape_cast %1009 : vector<1x16x128xbf16> to vector<16x128xbf16>
    %1011 = arith.maximumf %1007, %1010 : vector<16x128xbf16>
    %c61 = arith.constant 61 : index
    %1012 = arith.index_cast %3 : i32 to index
    %c0_282 = arith.constant 0 : index
    %1013 = vector.load %arg2[%c61, %1012, %c0_282] : memref<64x16x128xbf16, #tpu.memory_space<vmem>>, vector<1x16x128xbf16>
    %1014 = vector.shape_cast %1013 : vector<1x16x128xbf16> to vector<16x128xbf16>
    %1015 = arith.maximumf %1011, %1014 : vector<16x128xbf16>
    %c62 = arith.constant 62 : index
    %1016 = arith.index_cast %3 : i32 to index
    %c0_283 = arith.constant 0 : index
    %1017 = vector.load %arg2[%c62, %1016, %c0_283] : memref<64x16x128xbf16, #tpu.memory_space<vmem>>, vector<1x16x128xbf16>
    %1018 = vector.shape_cast %1017 : vector<1x16x128xbf16> to vector<16x128xbf16>
    %1019 = arith.maximumf %1015, %1018 : vector<16x128xbf16>
    %c63 = arith.constant 63 : index
    %1020 = arith.index_cast %3 : i32 to index
    %c0_284 = arith.constant 0 : index
    %1021 = vector.load %arg2[%c63, %1020, %c0_284] : memref<64x16x128xbf16, #tpu.memory_space<vmem>>, vector<1x16x128xbf16>
    %1022 = vector.shape_cast %1021 : vector<1x16x128xbf16> to vector<16x128xbf16>
    %1023 = arith.maximumf %1019, %1022 : vector<16x128xbf16>
    %1024 = arith.extf %1023 : vector<16x128xbf16> to vector<16x128xf32>
    %cst_285 = arith.constant 0.000000e+00 : f32
    %1025 = vector.broadcast %cst_285 : f32 to vector<16x128xf32>
    %cst_286 = arith.constant 0.000000e+00 : f32
    %1026 = vector.broadcast %cst_286 : f32 to vector<16x128xf32>
    %cst_287 = arith.constant 0.000000e+00 : f32
    %1027 = vector.broadcast %cst_287 : f32 to vector<16x128xf32>
    %c48_288 = arith.constant 48 : index
    %1028 = arith.index_cast %3 : i32 to index
    %c0_289 = arith.constant 0 : index
    %1029 = vector.load %arg2[%c48_288, %1028, %c0_289] : memref<64x16x128xbf16, #tpu.memory_space<vmem>>, vector<1x16x128xbf16>
    %1030 = vector.shape_cast %1029 : vector<1x16x128xbf16> to vector<16x128xbf16>
    %1031 = arith.extf %1030 : vector<16x128xbf16> to vector<16x128xf32>
    %1032 = arith.subf %1031, %1024 : vector<16x128xf32>
    %1033 = math.exp %1032 : vector<16x128xf32>
    %1034 = arith.addf %1025, %1033 : vector<16x128xf32>
    %cst_290 = arith.constant 0.000000e+00 : f32
    %1035 = vector.broadcast %cst_290 : f32 to vector<16x128xf32>
    %1036 = arith.cmpf oeq, %957, %1035 : vector<16x128xf32>
    %1037 = arith.select %1036, %1031, %1026 : vector<16x128xi1>, vector<16x128xf32>
    %c49_291 = arith.constant 49 : index
    %1038 = arith.index_cast %3 : i32 to index
    %c0_292 = arith.constant 0 : index
    %1039 = vector.load %arg2[%c49_291, %1038, %c0_292] : memref<64x16x128xbf16, #tpu.memory_space<vmem>>, vector<1x16x128xbf16>
    %1040 = vector.shape_cast %1039 : vector<1x16x128xbf16> to vector<16x128xbf16>
    %1041 = arith.extf %1040 : vector<16x128xbf16> to vector<16x128xf32>
    %1042 = arith.subf %1041, %1024 : vector<16x128xf32>
    %1043 = math.exp %1042 : vector<16x128xf32>
    %1044 = arith.addf %1034, %1043 : vector<16x128xf32>
    %cst_293 = arith.constant 1.000000e+00 : f32
    %1045 = vector.broadcast %cst_293 : f32 to vector<16x128xf32>
    %1046 = arith.cmpf oeq, %957, %1045 : vector<16x128xf32>
    %1047 = arith.select %1046, %1041, %1037 : vector<16x128xi1>, vector<16x128xf32>
    %1048 = arith.select %1036, %1041, %1027 : vector<16x128xi1>, vector<16x128xf32>
    %c50_294 = arith.constant 50 : index
    %1049 = arith.index_cast %3 : i32 to index
    %c0_295 = arith.constant 0 : index
    %1050 = vector.load %arg2[%c50_294, %1049, %c0_295] : memref<64x16x128xbf16, #tpu.memory_space<vmem>>, vector<1x16x128xbf16>
    %1051 = vector.shape_cast %1050 : vector<1x16x128xbf16> to vector<16x128xbf16>
    %1052 = arith.extf %1051 : vector<16x128xbf16> to vector<16x128xf32>
    %1053 = arith.subf %1052, %1024 : vector<16x128xf32>
    %1054 = math.exp %1053 : vector<16x128xf32>
    %1055 = arith.addf %1044, %1054 : vector<16x128xf32>
    %cst_296 = arith.constant 2.000000e+00 : f32
    %1056 = vector.broadcast %cst_296 : f32 to vector<16x128xf32>
    %1057 = arith.cmpf oeq, %957, %1056 : vector<16x128xf32>
    %1058 = arith.select %1057, %1052, %1047 : vector<16x128xi1>, vector<16x128xf32>
    %1059 = arith.select %1046, %1052, %1048 : vector<16x128xi1>, vector<16x128xf32>
    %c51_297 = arith.constant 51 : index
    %1060 = arith.index_cast %3 : i32 to index
    %c0_298 = arith.constant 0 : index
    %1061 = vector.load %arg2[%c51_297, %1060, %c0_298] : memref<64x16x128xbf16, #tpu.memory_space<vmem>>, vector<1x16x128xbf16>
    %1062 = vector.shape_cast %1061 : vector<1x16x128xbf16> to vector<16x128xbf16>
    %1063 = arith.extf %1062 : vector<16x128xbf16> to vector<16x128xf32>
    %1064 = arith.subf %1063, %1024 : vector<16x128xf32>
    %1065 = math.exp %1064 : vector<16x128xf32>
    %1066 = arith.addf %1055, %1065 : vector<16x128xf32>
    %cst_299 = arith.constant 3.000000e+00 : f32
    %1067 = vector.broadcast %cst_299 : f32 to vector<16x128xf32>
    %1068 = arith.cmpf oeq, %957, %1067 : vector<16x128xf32>
    %1069 = arith.select %1068, %1063, %1058 : vector<16x128xi1>, vector<16x128xf32>
    %1070 = arith.select %1057, %1063, %1059 : vector<16x128xi1>, vector<16x128xf32>
    %c52_300 = arith.constant 52 : index
    %1071 = arith.index_cast %3 : i32 to index
    %c0_301 = arith.constant 0 : index
    %1072 = vector.load %arg2[%c52_300, %1071, %c0_301] : memref<64x16x128xbf16, #tpu.memory_space<vmem>>, vector<1x16x128xbf16>
    %1073 = vector.shape_cast %1072 : vector<1x16x128xbf16> to vector<16x128xbf16>
    %1074 = arith.extf %1073 : vector<16x128xbf16> to vector<16x128xf32>
    %1075 = arith.subf %1074, %1024 : vector<16x128xf32>
    %1076 = math.exp %1075 : vector<16x128xf32>
    %1077 = arith.addf %1066, %1076 : vector<16x128xf32>
    %cst_302 = arith.constant 4.000000e+00 : f32
    %1078 = vector.broadcast %cst_302 : f32 to vector<16x128xf32>
    %1079 = arith.cmpf oeq, %957, %1078 : vector<16x128xf32>
    %1080 = arith.select %1079, %1074, %1069 : vector<16x128xi1>, vector<16x128xf32>
    %1081 = arith.select %1068, %1074, %1070 : vector<16x128xi1>, vector<16x128xf32>
    %c53_303 = arith.constant 53 : index
    %1082 = arith.index_cast %3 : i32 to index
    %c0_304 = arith.constant 0 : index
    %1083 = vector.load %arg2[%c53_303, %1082, %c0_304] : memref<64x16x128xbf16, #tpu.memory_space<vmem>>, vector<1x16x128xbf16>
    %1084 = vector.shape_cast %1083 : vector<1x16x128xbf16> to vector<16x128xbf16>
    %1085 = arith.extf %1084 : vector<16x128xbf16> to vector<16x128xf32>
    %1086 = arith.subf %1085, %1024 : vector<16x128xf32>
    %1087 = math.exp %1086 : vector<16x128xf32>
    %1088 = arith.addf %1077, %1087 : vector<16x128xf32>
    %cst_305 = arith.constant 5.000000e+00 : f32
    %1089 = vector.broadcast %cst_305 : f32 to vector<16x128xf32>
    %1090 = arith.cmpf oeq, %957, %1089 : vector<16x128xf32>
    %1091 = arith.select %1090, %1085, %1080 : vector<16x128xi1>, vector<16x128xf32>
    %1092 = arith.select %1079, %1085, %1081 : vector<16x128xi1>, vector<16x128xf32>
    %c54_306 = arith.constant 54 : index
    %1093 = arith.index_cast %3 : i32 to index
    %c0_307 = arith.constant 0 : index
    %1094 = vector.load %arg2[%c54_306, %1093, %c0_307] : memref<64x16x128xbf16, #tpu.memory_space<vmem>>, vector<1x16x128xbf16>
    %1095 = vector.shape_cast %1094 : vector<1x16x128xbf16> to vector<16x128xbf16>
    %1096 = arith.extf %1095 : vector<16x128xbf16> to vector<16x128xf32>
    %1097 = arith.subf %1096, %1024 : vector<16x128xf32>
    %1098 = math.exp %1097 : vector<16x128xf32>
    %1099 = arith.addf %1088, %1098 : vector<16x128xf32>
    %cst_308 = arith.constant 6.000000e+00 : f32
    %1100 = vector.broadcast %cst_308 : f32 to vector<16x128xf32>
    %1101 = arith.cmpf oeq, %957, %1100 : vector<16x128xf32>
    %1102 = arith.select %1101, %1096, %1091 : vector<16x128xi1>, vector<16x128xf32>
    %1103 = arith.select %1090, %1096, %1092 : vector<16x128xi1>, vector<16x128xf32>
    %c55_309 = arith.constant 55 : index
    %1104 = arith.index_cast %3 : i32 to index
    %c0_310 = arith.constant 0 : index
    %1105 = vector.load %arg2[%c55_309, %1104, %c0_310] : memref<64x16x128xbf16, #tpu.memory_space<vmem>>, vector<1x16x128xbf16>
    %1106 = vector.shape_cast %1105 : vector<1x16x128xbf16> to vector<16x128xbf16>
    %1107 = arith.extf %1106 : vector<16x128xbf16> to vector<16x128xf32>
    %1108 = arith.subf %1107, %1024 : vector<16x128xf32>
    %1109 = math.exp %1108 : vector<16x128xf32>
    %1110 = arith.addf %1099, %1109 : vector<16x128xf32>
    %cst_311 = arith.constant 7.000000e+00 : f32
    %1111 = vector.broadcast %cst_311 : f32 to vector<16x128xf32>
    %1112 = arith.cmpf oeq, %957, %1111 : vector<16x128xf32>
    %1113 = arith.select %1112, %1107, %1102 : vector<16x128xi1>, vector<16x128xf32>
    %1114 = arith.select %1101, %1107, %1103 : vector<16x128xi1>, vector<16x128xf32>
    %c56_312 = arith.constant 56 : index
    %1115 = arith.index_cast %3 : i32 to index
    %c0_313 = arith.constant 0 : index
    %1116 = vector.load %arg2[%c56_312, %1115, %c0_313] : memref<64x16x128xbf16, #tpu.memory_space<vmem>>, vector<1x16x128xbf16>
    %1117 = vector.shape_cast %1116 : vector<1x16x128xbf16> to vector<16x128xbf16>
    %1118 = arith.extf %1117 : vector<16x128xbf16> to vector<16x128xf32>
    %1119 = arith.subf %1118, %1024 : vector<16x128xf32>
    %1120 = math.exp %1119 : vector<16x128xf32>
    %1121 = arith.addf %1110, %1120 : vector<16x128xf32>
    %cst_314 = arith.constant 8.000000e+00 : f32
    %1122 = vector.broadcast %cst_314 : f32 to vector<16x128xf32>
    %1123 = arith.cmpf oeq, %957, %1122 : vector<16x128xf32>
    %1124 = arith.select %1123, %1118, %1113 : vector<16x128xi1>, vector<16x128xf32>
    %1125 = arith.select %1112, %1118, %1114 : vector<16x128xi1>, vector<16x128xf32>
    %c57_315 = arith.constant 57 : index
    %1126 = arith.index_cast %3 : i32 to index
    %c0_316 = arith.constant 0 : index
    %1127 = vector.load %arg2[%c57_315, %1126, %c0_316] : memref<64x16x128xbf16, #tpu.memory_space<vmem>>, vector<1x16x128xbf16>
    %1128 = vector.shape_cast %1127 : vector<1x16x128xbf16> to vector<16x128xbf16>
    %1129 = arith.extf %1128 : vector<16x128xbf16> to vector<16x128xf32>
    %1130 = arith.subf %1129, %1024 : vector<16x128xf32>
    %1131 = math.exp %1130 : vector<16x128xf32>
    %1132 = arith.addf %1121, %1131 : vector<16x128xf32>
    %cst_317 = arith.constant 9.000000e+00 : f32
    %1133 = vector.broadcast %cst_317 : f32 to vector<16x128xf32>
    %1134 = arith.cmpf oeq, %957, %1133 : vector<16x128xf32>
    %1135 = arith.select %1134, %1129, %1124 : vector<16x128xi1>, vector<16x128xf32>
    %1136 = arith.select %1123, %1129, %1125 : vector<16x128xi1>, vector<16x128xf32>
    %c58_318 = arith.constant 58 : index
    %1137 = arith.index_cast %3 : i32 to index
    %c0_319 = arith.constant 0 : index
    %1138 = vector.load %arg2[%c58_318, %1137, %c0_319] : memref<64x16x128xbf16, #tpu.memory_space<vmem>>, vector<1x16x128xbf16>
    %1139 = vector.shape_cast %1138 : vector<1x16x128xbf16> to vector<16x128xbf16>
    %1140 = arith.extf %1139 : vector<16x128xbf16> to vector<16x128xf32>
    %1141 = arith.subf %1140, %1024 : vector<16x128xf32>
    %1142 = math.exp %1141 : vector<16x128xf32>
    %1143 = arith.addf %1132, %1142 : vector<16x128xf32>
    %cst_320 = arith.constant 1.000000e+01 : f32
    %1144 = vector.broadcast %cst_320 : f32 to vector<16x128xf32>
    %1145 = arith.cmpf oeq, %957, %1144 : vector<16x128xf32>
    %1146 = arith.select %1145, %1140, %1135 : vector<16x128xi1>, vector<16x128xf32>
    %1147 = arith.select %1134, %1140, %1136 : vector<16x128xi1>, vector<16x128xf32>
    %c59_321 = arith.constant 59 : index
    %1148 = arith.index_cast %3 : i32 to index
    %c0_322 = arith.constant 0 : index
    %1149 = vector.load %arg2[%c59_321, %1148, %c0_322] : memref<64x16x128xbf16, #tpu.memory_space<vmem>>, vector<1x16x128xbf16>
    %1150 = vector.shape_cast %1149 : vector<1x16x128xbf16> to vector<16x128xbf16>
    %1151 = arith.extf %1150 : vector<16x128xbf16> to vector<16x128xf32>
    %1152 = arith.subf %1151, %1024 : vector<16x128xf32>
    %1153 = math.exp %1152 : vector<16x128xf32>
    %1154 = arith.addf %1143, %1153 : vector<16x128xf32>
    %cst_323 = arith.constant 1.100000e+01 : f32
    %1155 = vector.broadcast %cst_323 : f32 to vector<16x128xf32>
    %1156 = arith.cmpf oeq, %957, %1155 : vector<16x128xf32>
    %1157 = arith.select %1156, %1151, %1146 : vector<16x128xi1>, vector<16x128xf32>
    %1158 = arith.select %1145, %1151, %1147 : vector<16x128xi1>, vector<16x128xf32>
    %c60_324 = arith.constant 60 : index
    %1159 = arith.index_cast %3 : i32 to index
    %c0_325 = arith.constant 0 : index
    %1160 = vector.load %arg2[%c60_324, %1159, %c0_325] : memref<64x16x128xbf16, #tpu.memory_space<vmem>>, vector<1x16x128xbf16>
    %1161 = vector.shape_cast %1160 : vector<1x16x128xbf16> to vector<16x128xbf16>
    %1162 = arith.extf %1161 : vector<16x128xbf16> to vector<16x128xf32>
    %1163 = arith.subf %1162, %1024 : vector<16x128xf32>
    %1164 = math.exp %1163 : vector<16x128xf32>
    %1165 = arith.addf %1154, %1164 : vector<16x128xf32>
    %cst_326 = arith.constant 1.200000e+01 : f32
    %1166 = vector.broadcast %cst_326 : f32 to vector<16x128xf32>
    %1167 = arith.cmpf oeq, %957, %1166 : vector<16x128xf32>
    %1168 = arith.select %1167, %1162, %1157 : vector<16x128xi1>, vector<16x128xf32>
    %1169 = arith.select %1156, %1162, %1158 : vector<16x128xi1>, vector<16x128xf32>
    %c61_327 = arith.constant 61 : index
    %1170 = arith.index_cast %3 : i32 to index
    %c0_328 = arith.constant 0 : index
    %1171 = vector.load %arg2[%c61_327, %1170, %c0_328] : memref<64x16x128xbf16, #tpu.memory_space<vmem>>, vector<1x16x128xbf16>
    %1172 = vector.shape_cast %1171 : vector<1x16x128xbf16> to vector<16x128xbf16>
    %1173 = arith.extf %1172 : vector<16x128xbf16> to vector<16x128xf32>
    %1174 = arith.subf %1173, %1024 : vector<16x128xf32>
    %1175 = math.exp %1174 : vector<16x128xf32>
    %1176 = arith.addf %1165, %1175 : vector<16x128xf32>
    %cst_329 = arith.constant 1.300000e+01 : f32
    %1177 = vector.broadcast %cst_329 : f32 to vector<16x128xf32>
    %1178 = arith.cmpf oeq, %957, %1177 : vector<16x128xf32>
    %1179 = arith.select %1178, %1173, %1168 : vector<16x128xi1>, vector<16x128xf32>
    %1180 = arith.select %1167, %1173, %1169 : vector<16x128xi1>, vector<16x128xf32>
    %c62_330 = arith.constant 62 : index
    %1181 = arith.index_cast %3 : i32 to index
    %c0_331 = arith.constant 0 : index
    %1182 = vector.load %arg2[%c62_330, %1181, %c0_331] : memref<64x16x128xbf16, #tpu.memory_space<vmem>>, vector<1x16x128xbf16>
    %1183 = vector.shape_cast %1182 : vector<1x16x128xbf16> to vector<16x128xbf16>
    %1184 = arith.extf %1183 : vector<16x128xbf16> to vector<16x128xf32>
    %1185 = arith.subf %1184, %1024 : vector<16x128xf32>
    %1186 = math.exp %1185 : vector<16x128xf32>
    %1187 = arith.addf %1176, %1186 : vector<16x128xf32>
    %cst_332 = arith.constant 1.400000e+01 : f32
    %1188 = vector.broadcast %cst_332 : f32 to vector<16x128xf32>
    %1189 = arith.cmpf oeq, %957, %1188 : vector<16x128xf32>
    %1190 = arith.select %1189, %1184, %1179 : vector<16x128xi1>, vector<16x128xf32>
    %1191 = arith.select %1178, %1184, %1180 : vector<16x128xi1>, vector<16x128xf32>
    %c63_333 = arith.constant 63 : index
    %1192 = arith.index_cast %3 : i32 to index
    %c0_334 = arith.constant 0 : index
    %1193 = vector.load %arg2[%c63_333, %1192, %c0_334] : memref<64x16x128xbf16, #tpu.memory_space<vmem>>, vector<1x16x128xbf16>
    %1194 = vector.shape_cast %1193 : vector<1x16x128xbf16> to vector<16x128xbf16>
    %1195 = arith.extf %1194 : vector<16x128xbf16> to vector<16x128xf32>
    %1196 = arith.subf %1195, %1024 : vector<16x128xf32>
    %1197 = math.exp %1196 : vector<16x128xf32>
    %1198 = arith.addf %1187, %1197 : vector<16x128xf32>
    %cst_335 = arith.constant 1.500000e+01 : f32
    %1199 = vector.broadcast %cst_335 : f32 to vector<16x128xf32>
    %1200 = arith.cmpf oeq, %957, %1199 : vector<16x128xf32>
    %1201 = arith.select %1200, %1195, %1190 : vector<16x128xi1>, vector<16x128xf32>
    %1202 = arith.select %1189, %1195, %1191 : vector<16x128xi1>, vector<16x128xf32>
    %1203 = math.log %1198 : vector<16x128xf32>
    %1204 = arith.addf %1024, %1203 : vector<16x128xf32>
    %1205 = arith.subf %1204, %1201 : vector<16x128xf32>
    %1206 = arith.mulf %1205, %960 : vector<16x128xf32>
    %1207 = arith.addf %952, %1206 : vector<16x128xf32>
    %1208 = arith.subf %1204, %1202 : vector<16x128xf32>
    %cst_336 = arith.constant 1.000000e+00 : f32
    %1209 = vector.broadcast %cst_336 : f32 to vector<16x128xf32>
    %1210 = arith.subf %1209, %960 : vector<16x128xf32>
    %1211 = arith.mulf %1208, %1210 : vector<16x128xf32>
    %1212 = arith.addf %1207, %1211 : vector<16x128xf32>
    %c12_337 = arith.constant 12 : index
    %1213 = arith.index_cast %3 : i32 to index
    %c0_338 = arith.constant 0 : index
    %1214 = vector.load %arg1[%c12_337, %1213, %c0_338] : memref<14x16x128xf32, #tpu.memory_space<vmem>>, vector<1x16x128xf32>
    %1215 = vector.shape_cast %1214 : vector<1x16x128xf32> to vector<16x128xf32>
    %c13_339 = arith.constant 13 : index
    %1216 = arith.index_cast %3 : i32 to index
    %c0_340 = arith.constant 0 : index
    %1217 = vector.load %arg1[%c13_339, %1216, %c0_340] : memref<14x16x128xf32, #tpu.memory_space<vmem>>, vector<1x16x128xf32>
    %1218 = vector.shape_cast %1217 : vector<1x16x128xf32> to vector<16x128xf32>
    %cst_341 = arith.constant 0.000000e+00 : f32
    %1219 = vector.broadcast %cst_341 : f32 to vector<16x128xf32>
    %1220 = arith.cmpf ogt, %1218, %1219 : vector<16x128xf32>
    %cst_342 = arith.constant 2.500000e-01 : f32
    %1221 = vector.broadcast %cst_342 : f32 to vector<16x128xf32>
    %1222 = arith.mulf %1212, %1221 : vector<16x128xf32>
    %1223 = arith.mulf %1222, %1215 : vector<16x128xf32>
    %cst_343 = arith.constant 0.000000e+00 : f32
    %1224 = vector.broadcast %cst_343 : f32 to vector<16x128xf32>
    %1225 = arith.select %1220, %1223, %1224 : vector<16x128xi1>, vector<16x128xf32>
    %1226 = vector.extract_strided_slice %1225 {offsets = [0, 0], sizes = [8, 128], strides = [1, 1]} : vector<16x128xf32> to vector<8x128xf32>
    %1227 = arith.addf %1, %1226 : vector<8x128xf32>
    %1228 = vector.extract_strided_slice %1225 {offsets = [8, 0], sizes = [8, 128], strides = [1, 1]} : vector<16x128xf32> to vector<8x128xf32>
    %1229 = arith.addf %1227, %1228 : vector<8x128xf32>
    %c1_i32 = arith.constant 1 : i32
    %c0_344 = arith.constant 0 : index
    %c0_345 = arith.constant 0 : index
    %c0_346 = arith.constant 0 : index
    %1230 = vector.load %arg3[%c0_344, %c0_345, %c0_346] : memref<1x8x128xf32, #tpu.memory_space<vmem>>, vector<1x8x128xf32>
    %1231 = vector.shape_cast %1230 : vector<1x8x128xf32> to vector<8x128xf32>
    %1232 = vector.shape_cast %159 : vector<8x128xf32> to vector<1x8x128xf32>
    tpu.vector_store %arg3[%c0_344, %c0_345, %c0_346], %1232 {strides = array<i32>} : memref<1x8x128xf32, #tpu.memory_space<vmem>>, vector<1x8x128xf32>,
    %c0_347 = arith.constant 0 : index
    %c0_348 = arith.constant 0 : index
    %c0_349 = arith.constant 0 : index
    %1233 = vector.load %arg4[%c0_347, %c0_348, %c0_349] : memref<1x8x128xf32, #tpu.memory_space<vmem>>, vector<1x8x128xf32>
    %1234 = vector.shape_cast %1233 : vector<1x8x128xf32> to vector<8x128xf32>
    %1235 = vector.shape_cast %1229 : vector<8x128xf32> to vector<1x8x128xf32>
    tpu.vector_store %arg4[%c0_347, %c0_348, %c0_349], %1235 {strides = array<i32>} : memref<1x8x128xf32, #tpu.memory_space<vmem>>, vector<1x8x128xf32>,
    return
  }
  func.func @transform_0(%arg0: i32) -> (i32, i32, i32) {
    %c0_i32 = arith.constant 0 : i32
    %c0_i32_0 = arith.constant 0 : i32
    %c0_i32_1 = arith.constant 0 : i32
    return %c0_i32, %arg0, %c0_i32_0 : i32, i32, i32
  }
  func.func @transform_1(%arg0: i32) -> (i32, i32, i32) {
    %c0_i32 = arith.constant 0 : i32
    %c0_i32_0 = arith.constant 0 : i32
    %c0_i32_1 = arith.constant 0 : i32
    return %c0_i32, %arg0, %c0_i32_0 : i32, i32, i32
  }
  func.func @transform_2(%arg0: i32) -> (i32, i32, i32) {
    %c0_i32 = arith.constant 0 : i32
    %c0_i32_0 = arith.constant 0 : i32
    %c0_i32_1 = arith.constant 0 : i32
    return %arg0, %c0_i32, %c0_i32_0 : i32, i32, i32
  }
  func.func @transform_3(%arg0: i32) -> (i32, i32, i32) {
    %c0_i32 = arith.constant 0 : i32
    %c0_i32_0 = arith.constant 0 : i32
    %c0_i32_1 = arith.constant 0 : i32
    return %arg0, %c0_i32, %c0_i32_0 : i32, i32, i32
  }
}

</mosaic_0001>

<llo_original>
// kernel: rotated_bbox_loss.1
$region0: #{rotated_bbox_loss.1}
  #allocation0 [shape = 'u32[]', space=smem, size = 0x4, offset = 0x4, fixed_abs, tag = 'smem constant byte address 0x4 - core index']
  #allocation1 [shape = 'u32[144,128]{1,0:T(1,128)}', space=vmem, size = 0x12000, scoped, tag = 'internal scratch']
  %s0 = inlined_call_operand.vmem [shape: f32[14,16,128], index: 0, kind: input, shape index: {}]
  %s1 = inlined_call_operand.vmem [shape: bf16[64,16,128], index: 1, kind: input, shape index: {}]
  %s2 = inlined_call_operand.vmem [shape: f32[1,8,128], index: 2, kind: output, shape index: {0}]
  %s3 = inlined_call_operand.vmem [shape: f32[1,8,128], index: 3, kind: output, shape index: {1}]
  %4 = xla_tuple %s2, %s3
  %s5 = sld [smem:[#allocation0]]
  $region26: #{rotated_bbox_loss.1} parent=0
    _
  %s7 = ssub.s32 1, %s5
  %s8 = scalar_select 0, %s7, %s5
  // Predicated region
  $region2: #{rotated_bbox_loss.1} parent=0 // pred_check
    _
  $region3: #{rotated_bbox_loss.1} parent=0 // pred_check_branch
    %10 = sbr.rel (0) target = $region5
  $region4: #{rotated_bbox_loss.1} parent=0 // pred_region
    _
  $region5: #{rotated_bbox_loss.1} parent=0 // pred_fallthru
    _
  // Predicated region
  $region6: #{rotated_bbox_loss.1} parent=0 // pred_check
    _
  $region7: #{rotated_bbox_loss.1} parent=0 // pred_check_branch
    %12 = sbr.rel (0) target = $region9
  $region8: #{rotated_bbox_loss.1} parent=0 // pred_region
    _
  $region9: #{rotated_bbox_loss.1} parent=0 // pred_fallthru
    _
  %v13 = vld [vmem:[%s0] sm:$0xff]
  %v14 = vld [vmem:[%s0 + $0x8] sm:$0xff]
  %s15 = sadd.s32 0, 16
  %s16 = scalar_lea.vmem %s0, %s15
  %v17 = vld [vmem:[%s16] sm:$0xff]
  %v18 = vld [vmem:[%s16 + $0x8] sm:$0xff]
  %s19 = sadd.s32 0, 32
  %s20 = scalar_lea.vmem %s0, %s19
  %v21 = vld [vmem:[%s20] sm:$0xff]
  %v22 = vld [vmem:[%s20 + $0x8] sm:$0xff]
  %s23 = sadd.s32 0, 48
  %s24 = scalar_lea.vmem %s0, %s23
  %v25 = vld [vmem:[%s24] sm:$0xff]
  %v26 = vld [vmem:[%s24 + $0x8] sm:$0xff]
  %s27 = sadd.s32 0, 64
  %s28 = scalar_lea.vmem %s0, %s27
  %v29 = vld [vmem:[%s28] sm:$0xff]
  %v30 = vld [vmem:[%s28 + $0x8] sm:$0xff]
  %s31 = sadd.s32 0, 80
  %s32 = scalar_lea.vmem %s0, %s31
  %v33 = vld [vmem:[%s32] sm:$0xff]
  %v34 = vld [vmem:[%s32 + $0x8] sm:$0xff]
  %s35 = sadd.s32 0, 96
  %s36 = scalar_lea.vmem %s0, %s35
  %v37 = vld [vmem:[%s36] sm:$0xff]
  %v38 = vld [vmem:[%s36 + $0x8] sm:$0xff]
  %s39 = sadd.s32 0, 112
  %s40 = scalar_lea.vmem %s0, %s39
  %v41 = vld [vmem:[%s40] sm:$0xff]
  %v42 = vld [vmem:[%s40 + $0x8] sm:$0xff]
  %s43 = sadd.s32 0, 128
  %s44 = scalar_lea.vmem %s0, %s43
  %v45 = vld [vmem:[%s44] sm:$0xff]
  %v46 = vld [vmem:[%s44 + $0x8] sm:$0xff]
  %s47 = sadd.s32 0, 144
  %s48 = scalar_lea.vmem %s0, %s47
  %v49 = vld [vmem:[%s48] sm:$0xff]
  %v50 = vld [vmem:[%s48 + $0x8] sm:$0xff]
  %s51 = sadd.s32 0, 160
  %s52 = scalar_lea.vmem %s0, %s51
  %v53 = vld [vmem:[%s52] sm:$0xff]
  %v54 = vld [vmem:[%s52 + $0x8] sm:$0xff]
  %s55 = sadd.s32 0, 176
  %s56 = scalar_lea.vmem %s0, %s55
  %v57 = vld [vmem:[%s56] sm:$0xff]
  %v58 = vld [vmem:[%s56 + $0x8] sm:$0xff]
  %v59 = vmul.f32 %v21, %v21
  %v60 = vmul.f32 %v22, %v22
  %v61 = vmul.f32 %v59, 0.083333336
  %v62 = vmul.f32 %v60, 0.083333336
  %v63 = vmul.f32 %v25, %v25
  %v64 = vmul.f32 %v26, %v26
  %v65 = vmul.f32 %v63, 0.083333336
  %v66 = vmul.f32 %v64, 0.083333336
  %v67 = vand.u32 2147483647, %v29
  %vm68 = vcmp.le.f32.partialorder %v67, 0.7853982
  %vm69 = vcmp.lt.s32.totalorder %v29, 0
  %v70 = vand.u32 %v29, 2139095040
  %v71 = vshrl.u32 %v70, 23
  %v72 = vsub.s32 %v71, 127
  %v73 = vand.u32 2147483647, %v29
  %v74 = vand.u32 %v73, 8388607
  %v75 = vor.u32 %v74, 8388608
  %v76 = vsub.s32 0, %v75
  %v77 = vadd.s32 %v72, 1
  %vm78 = vcmp.gt.s32.totalorder %v77, 0
  %v79 = vsel %vm78, %v77, 0
  %v80 = vshrl.u32 %v79, 5
  %v81 = vand.u32 %v79, 31
  %v82 = vsub.s32 32, %v81
  %v83 = vshrl.u32 683565275, %v82
  %v84 = vshll.u32 683565275, %v81
  %v85 = vshrl.u32 2475754826, %v82
  %v86 = vor.u32 %v84, %v85
  %v87 = vshll.u32 2475754826, %v81
  %v88 = vshrl.u32 2131351028, %v82
  %v89 = vor.u32 %v87, %v88
  %v90 = vshll.u32 2131351028, %v81
  %v91 = vshrl.u32 2102212464, %v82
  %v92 = vor.u32 %v90, %v91
  %v93 = vshll.u32 2102212464, %v81
  %v94 = vshrl.u32 920167782, %v82
  %v95 = vor.u32 %v93, %v94
  %v96 = vshll.u32 920167782, %v81
  %v97 = vshrl.u32 1326507024, %v82
  %v98 = vor.u32 %v96, %v97
  %vm99 = vcmp.lt.s32.totalorder %v80, 1
  %vm100 = vcmp.lt.s32.totalorder %v80, 2
  %vm101 = vcmp.lt.s32.totalorder %v80, 3
  %vm102 = vcmp.lt.s32.totalorder %v80, 4
  %v103 = vsel %vm99, %v83, %v86
  %v104 = vsel %vm102, %v92, 2102212464
  %v105 = vsel %vm101, %v89, %v104
  %v106 = vsel %vm100, %v103, %v105
  %v107 = vsel %vm99, %v86, %v89
  %v108 = vsel %vm102, %v95, 920167782
  %v109 = vsel %vm101, %v92, %v108
  %v110 = vsel %vm100, %v107, %v109
  %v111 = vsel %vm99, %v89, %v92
  %v112 = vsel %vm102, %v98, 1326507024
  %v113 = vsel %vm101, %v95, %v112
  %v114 = vsel %vm100, %v111, %v113
  %v115 = vshll.u32 %v75, 8
  %v116 = vmul.u32.u64.compose %v115, %v114
  %v117 = vextract.low.u32 %v116
  %v118 = vextract.high.u32 %v116
  %v119 = vmul.u32.u64.compose %v115, %v110
  %v120 = vextract.low.u32 %v119
  %v121 = vextract.high.u32 %v119
  %v122 = vmul.u32 %v115, %v106
  %v123 = vadd.s32 %v118, %v120
  %vm124 = vc.u32 %v118, %v120
  %v125 = vadd.s32 %v121, 1
  %v126 = vsel %vm124, %v125, %v121
  %v127 = vadd.s32 %v122, %v126
  %v128 = vadd.s32 %v127, 536870912
  %v129 = vshrl.u32 %v128, 30
  %v130 = vshll.u32 %v129, 30
  %v131 = vsub.s32 %v127, %v130
  %vm132 = vcmp.lt.s32.totalorder %v131, 0
  %v133 = vsub.s32 0, %v131
  %v134 = vsel %vm132, %v133, %v131
  %v135 = vclz %v134
  %v136 = vsub.s32 %v135, 2
  %vm137 = vcmp.gt.s32.totalorder 0, %v136
  %v138 = vsel %vm137, 0, %v136
  %v139 = vsub.s32 32, %v138
  %v140 = vshll.u32 %v131, %v138
  %v141 = vshrl.u32 %v123, %v139
  %v142 = vor.u32 %v140, %v141
  %v143 = vsub.s32 4294967266, %v138
  %v144 = vadd.s32 %v143, 127
  %v145 = vshll.u32 %v144, 23
  %v146 = vor.u32 4788187, %v145
  %v147 = vand.u32 2147483647, %v146
  %v149 = vcvt.s32.f32 %v142
  %v150 = vmul.f32 %v149, %v147
  %v151 = vxor.u32 %v150, 2147483648
  %v152 = vsel %vm69, %v151, %v150
  %v153 = vsub.s32 4, %v129
  %v154 = vsel %vm69, %v153, %v129
  %v155 = vsel %vm68, %v29, %v152
  %v156 = vsel %vm68, 0, %v154
  %v157 = vcosq.f32.pop %v155
  %v158 = vsinq.f32.pop %v155
  %vm159 = vweird.f32 %v29
  %v160 = vand.u32 %v156, 3
  %vm161 = vcmp.lt.s32.totalorder %v160, 2
  %vm162 = vcmp.eq.s32.totalorder %v160, 0
  %v163 = vxor.u32 %v158, 2147483648
  %v164 = vsel %vm162, %v157, %v163
  %vm165 = vcmp.eq.s32.totalorder %v160, 2
  %v166 = vxor.u32 %v157, 2147483648
  %v167 = vsel %vm165, %v166, %v158
  %v168 = vsel %vm161, %v164, %v167
  %v169 = vsel %vm159, nan, %v168
  %v170 = vand.u32 2147483647, %v30
  %vm171 = vcmp.le.f32.partialorder %v170, 0.7853982
  %vm172 = vcmp.lt.s32.totalorder %v30, 0
  %v173 = vand.u32 %v30, 2139095040
  %v174 = vshrl.u32 %v173, 23
  %v175 = vsub.s32 %v174, 127
  %v176 = vand.u32 2147483647, %v30
  %v177 = vand.u32 %v176, 8388607
  %v178 = vor.u32 %v177, 8388608
  %v179 = vsub.s32 0, %v178
  %v180 = vadd.s32 %v175, 1
  %vm181 = vcmp.gt.s32.totalorder %v180, 0
  %v182 = vsel %vm181, %v180, 0
  %v183 = vshrl.u32 %v182, 5
  %v184 = vand.u32 %v182, 31
  %v185 = vsub.s32 32, %v184
  %v186 = vshrl.u32 683565275, %v185
  %v187 = vshll.u32 683565275, %v184
  %v188 = vshrl.u32 2475754826, %v185
  %v189 = vor.u32 %v187, %v188
  %v190 = vshll.u32 2475754826, %v184
  %v191 = vshrl.u32 2131351028, %v185
  %v192 = vor.u32 %v190, %v191
  %v193 = vshll.u32 2131351028, %v184
  %v194 = vshrl.u32 2102212464, %v185
  %v195 = vor.u32 %v193, %v194
  %v196 = vshll.u32 2102212464, %v184
  %v197 = vshrl.u32 920167782, %v185
  %v198 = vor.u32 %v196, %v197
  %v199 = vshll.u32 920167782, %v184
  %v200 = vshrl.u32 1326507024, %v185
  %v201 = vor.u32 %v199, %v200
  %vm202 = vcmp.lt.s32.totalorder %v183, 1
  %vm203 = vcmp.lt.s32.totalorder %v183, 2
  %vm204 = vcmp.lt.s32.totalorder %v183, 3
  %vm205 = vcmp.lt.s32.totalorder %v183, 4
  %v206 = vsel %vm202, %v186, %v189
  %v207 = vsel %vm205, %v195, 2102212464
  %v208 = vsel %vm204, %v192, %v207
  %v209 = vsel %vm203, %v206, %v208
  %v210 = vsel %vm202, %v189, %v192
  %v211 = vsel %vm205, %v198, 920167782
  %v212 = vsel %vm204, %v195, %v211
  %v213 = vsel %vm203, %v210, %v212
  %v214 = vsel %vm202, %v192, %v195
  %v215 = vsel %vm205, %v201, 1326507024
  %v216 = vsel %vm204, %v198, %v215
  %v217 = vsel %vm203, %v214, %v216
  %v218 = vshll.u32 %v178, 8
  %v219 = vmul.u32.u64.compose %v218, %v217
  %v220 = vextract.low.u32 %v219
  %v221 = vextract.high.u32 %v219
  %v222 = vmul.u32.u64.compose %v218, %v213
  %v223 = vextract.low.u32 %v222
  %v224 = vextract.high.u32 %v222
  %v225 = vmul.u32 %v218, %v209
  %v226 = vadd.s32 %v221, %v223
  %vm227 = vc.u32 %v221, %v223
  %v228 = vadd.s32 %v224, 1
  %v229 = vsel %vm227, %v228, %v224
  %v230 = vadd.s32 %v225, %v229
  %v231 = vadd.s32 %v230, 536870912
  %v232 = vshrl.u32 %v231, 30
  %v233 = vshll.u32 %v232, 30
  %v234 = vsub.s32 %v230, %v233
  %vm235 = vcmp.lt.s32.totalorder %v234, 0
  %v236 = vsub.s32 0, %v234
  %v237 = vsel %vm235, %v236, %v234
  %v238 = vclz %v237
  %v239 = vsub.s32 %v238, 2
  %vm240 = vcmp.gt.s32.totalorder 0, %v239
  %v241 = vsel %vm240, 0, %v239
  %v242 = vsub.s32 32, %v241
  %v243 = vshll.u32 %v234, %v241
  %v244 = vshrl.u32 %v226, %v242
  %v245 = vor.u32 %v243, %v244
  %v246 = vsub.s32 4294967266, %v241
  %v247 = vadd.s32 %v246, 127
  %v248 = vshll.u32 %v247, 23
  %v249 = vor.u32 4788187, %v248
  %v250 = vand.u32 2147483647, %v249
  %v252 = vcvt.s32.f32 %v245
  %v253 = vmul.f32 %v252, %v250
  %v254 = vxor.u32 %v253, 2147483648
  %v255 = vsel %vm172, %v254, %v253
  %v256 = vsub.s32 4, %v232
  %v257 = vsel %vm172, %v256, %v232
  %v258 = vsel %vm171, %v30, %v255
  %v259 = vsel %vm171, 0, %v257
  %v260 = vcosq.f32.pop %v258
  %v261 = vsinq.f32.pop %v258
  %vm262 = vweird.f32 %v30
  %v263 = vand.u32 %v259, 3
  %vm264 = vcmp.lt.s32.totalorder %v263, 2
  %vm265 = vcmp.eq.s32.totalorder %v263, 0
  %v266 = vxor.u32 %v261, 2147483648
  %v267 = vsel %vm265, %v260, %v266
  %vm268 = vcmp.eq.s32.totalorder %v263, 2
  %v269 = vxor.u32 %v260, 2147483648
  %v270 = vsel %vm268, %v269, %v261
  %v271 = vsel %vm264, %v267, %v270
  %v272 = vsel %vm262, nan, %v271
  %v273 = vand.u32 2147483647, %v29
  %vm274 = vcmp.le.f32.partialorder %v273, 0.7853982
  %vm275 = vcmp.lt.s32.totalorder %v29, 0
  %v276 = vand.u32 %v29, 2139095040
  %v277 = vshrl.u32 %v276, 23
  %v278 = vsub.s32 %v277, 127
  %v279 = vand.u32 2147483647, %v29
  %v280 = vand.u32 %v279, 8388607
  %v281 = vor.u32 %v280, 8388608
  %v282 = vsub.s32 0, %v281
  %v283 = vadd.s32 %v278, 1
  %vm284 = vcmp.gt.s32.totalorder %v283, 0
  %v285 = vsel %vm284, %v283, 0
  %v286 = vshrl.u32 %v285, 5
  %v287 = vand.u32 %v285, 31
  %v288 = vsub.s32 32, %v287
  %v289 = vshrl.u32 683565275, %v288
  %v290 = vshll.u32 683565275, %v287
  %v291 = vshrl.u32 2475754826, %v288
  %v292 = vor.u32 %v290, %v291
  %v293 = vshll.u32 2475754826, %v287
  %v294 = vshrl.u32 2131351028, %v288
  %v295 = vor.u32 %v293, %v294
  %v296 = vshll.u32 2131351028, %v287
  %v297 = vshrl.u32 2102212464, %v288
  %v298 = vor.u32 %v296, %v297
  %v299 = vshll.u32 2102212464, %v287
  %v300 = vshrl.u32 920167782, %v288
  %v301 = vor.u32 %v299, %v300
  %v302 = vshll.u32 920167782, %v287
  %v303 = vshrl.u32 1326507024, %v288
  %v304 = vor.u32 %v302, %v303
  %vm305 = vcmp.lt.s32.totalorder %v286, 1
  %vm306 = vcmp.lt.s32.totalorder %v286, 2
  %vm307 = vcmp.lt.s32.totalorder %v286, 3
  %vm308 = vcmp.lt.s32.totalorder %v286, 4
  %v309 = vsel %vm305, %v289, %v292
  %v310 = vsel %vm308, %v298, 2102212464
  %v311 = vsel %vm307, %v295, %v310
  %v312 = vsel %vm306, %v309, %v311
  %v313 = vsel %vm305, %v292, %v295
  %v314 = vsel %vm308, %v301, 920167782
  %v315 = vsel %vm307, %v298, %v314
  %v316 = vsel %vm306, %v313, %v315
  %v317 = vsel %vm305, %v295, %v298
  %v318 = vsel %vm308, %v304, 1326507024
  %v319 = vsel %vm307, %v301, %v318
  %v320 = vsel %vm306, %v317, %v319
  %v321 = vshll.u32 %v281, 8
  %v322 = vmul.u32.u64.compose %v321, %v320
  %v323 = vextract.low.u32 %v322
  %v324 = vextract.high.u32 %v322
  %v325 = vmul.u32.u64.compose %v321, %v316
  %v326 = vextract.low.u32 %v325
  %v327 = vextract.high.u32 %v325
  %v328 = vmul.u32 %v321, %v312
  %v329 = vadd.s32 %v324, %v326
  %vm330 = vc.u32 %v324, %v326
  %v331 = vadd.s32 %v327, 1
  %v332 = vsel %vm330, %v331, %v327
  %v333 = vadd.s32 %v328, %v332
  %v334 = vadd.s32 %v333, 536870912
  %v335 = vshrl.u32 %v334, 30
  %v336 = vshll.u32 %v335, 30
  %v337 = vsub.s32 %v333, %v336
  %vm338 = vcmp.lt.s32.totalorder %v337, 0
  %v339 = vsub.s32 0, %v337
  %v340 = vsel %vm338, %v339, %v337
  %v341 = vclz %v340
  %v342 = vsub.s32 %v341, 2
  %vm343 = vcmp.gt.s32.totalorder 0, %v342
  %v344 = vsel %vm343, 0, %v342
  %v345 = vsub.s32 32, %v344
  %v346 = vshll.u32 %v337, %v344
  %v347 = vshrl.u32 %v329, %v345
  %v348 = vor.u32 %v346, %v347
  %v349 = vsub.s32 4294967266, %v344
  %v350 = vadd.s32 %v349, 127
  %v351 = vshll.u32 %v350, 23
  %v352 = vor.u32 4788187, %v351
  %v353 = vand.u32 2147483647, %v352
  %v355 = vcvt.s32.f32 %v348
  %v356 = vmul.f32 %v355, %v353
  %v357 = vxor.u32 %v356, 2147483648
  %v358 = vsel %vm275, %v357, %v356
  %v359 = vsub.s32 4, %v335
  %v360 = vsel %vm275, %v359, %v335
  %v361 = vsel %vm274, %v29, %v358
  %v362 = vsel %vm274, 0, %v360
  %v363 = vcosq.f32.pop %v361
  %v364 = vsinq.f32.pop %v361
  %vm365 = vweird.f32 %v29
  %v366 = vadd.s32 %v362, 3
  %v367 = vand.u32 %v366, 3
  %vm368 = vcmp.lt.s32.totalorder %v367, 2
  %vm369 = vcmp.eq.s32.totalorder %v367, 0
  %v370 = vxor.u32 %v364, 2147483648
  %v371 = vsel %vm369, %v363, %v370
  %vm372 = vcmp.eq.s32.totalorder %v367, 2
  %v373 = vxor.u32 %v363, 2147483648
  %v374 = vsel %vm372, %v373, %v364
  %v375 = vsel %vm368, %v371, %v374
  %v376 = vsel %vm365, nan, %v375
  %v377 = vand.u32 2147483647, %v30
  %vm378 = vcmp.le.f32.partialorder %v377, 0.7853982
  %vm379 = vcmp.lt.s32.totalorder %v30, 0
  %v380 = vand.u32 %v30, 2139095040
  %v381 = vshrl.u32 %v380, 23
  %v382 = vsub.s32 %v381, 127
  %v383 = vand.u32 2147483647, %v30
  %v384 = vand.u32 %v383, 8388607
  %v385 = vor.u32 %v384, 8388608
  %v386 = vsub.s32 0, %v385
  %v387 = vadd.s32 %v382, 1
  %vm388 = vcmp.gt.s32.totalorder %v387, 0
  %v389 = vsel %vm388, %v387, 0
  %v390 = vshrl.u32 %v389, 5
  %v391 = vand.u32 %v389, 31
  %v392 = vsub.s32 32, %v391
  %v393 = vshrl.u32 683565275, %v392
  %v394 = vshll.u32 683565275, %v391
  %v395 = vshrl.u32 2475754826, %v392
  %v396 = vor.u32 %v394, %v395
  %v397 = vshll.u32 2475754826, %v391
  %v398 = vshrl.u32 2131351028, %v392
  %v399 = vor.u32 %v397, %v398
  %v400 = vshll.u32 2131351028, %v391
  %v401 = vshrl.u32 2102212464, %v392
  %v402 = vor.u32 %v400, %v401
  %v403 = vshll.u32 2102212464, %v391
  %v404 = vshrl.u32 920167782, %v392
  %v405 = vor.u32 %v403, %v404
  %v406 = vshll.u32 920167782, %v391
  %v407 = vshrl.u32 1326507024, %v392
  %v408 = vor.u32 %v406, %v407
  %vm409 = vcmp.lt.s32.totalorder %v390, 1
  %vm410 = vcmp.lt.s32.totalorder %v390, 2
  %vm411 = vcmp.lt.s32.totalorder %v390, 3
  %vm412 = vcmp.lt.s32.totalorder %v390, 4
  %v413 = vsel %vm409, %v393, %v396
  %v414 = vsel %vm412, %v402, 2102212464
  %v415 = vsel %vm411, %v399, %v414
  %v416 = vsel %vm410, %v413, %v415
  %v417 = vsel %vm409, %v396, %v399
  %v418 = vsel %vm412, %v405, 920167782
  %v419 = vsel %vm411, %v402, %v418
  %v420 = vsel %vm410, %v417, %v419
  %v421 = vsel %vm409, %v399, %v402
  %v422 = vsel %vm412, %v408, 1326507024
  %v423 = vsel %vm411, %v405, %v422
  %v424 = vsel %vm410, %v421, %v423
  %v425 = vshll.u32 %v385, 8
  %v426 = vmul.u32.u64.compose %v425, %v424
  %v427 = vextract.low.u32 %v426
  %v428 = vextract.high.u32 %v426
  %v429 = vmul.u32.u64.compose %v425, %v420
  %v430 = vextract.low.u32 %v429
  %v431 = vextract.high.u32 %v429
  %v432 = vmul.u32 %v425, %v416
  %v433 = vadd.s32 %v428, %v430
  %vm434 = vc.u32 %v428, %v430
  %v435 = vadd.s32 %v431, 1
  %v436 = vsel %vm434, %v435, %v431
  %v437 = vadd.s32 %v432, %v436
  %v438 = vadd.s32 %v437, 536870912
  %v439 = vshrl.u32 %v438, 30
  %v440 = vshll.u32 %v439, 30
  %v441 = vsub.s32 %v437, %v440
  %vm442 = vcmp.lt.s32.totalorder %v441, 0
  %v443 = vsub.s32 0, %v441
  %v444 = vsel %vm442, %v443, %v441
  %v445 = vclz %v444
  %v446 = vsub.s32 %v445, 2
  %vm447 = vcmp.gt.s32.totalorder 0, %v446
  %v448 = vsel %vm447, 0, %v446
  %v449 = vsub.s32 32, %v448
  %v450 = vshll.u32 %v441, %v448
  %v451 = vshrl.u32 %v433, %v449
  %v452 = vor.u32 %v450, %v451
  %v453 = vsub.s32 4294967266, %v448
  %v454 = vadd.s32 %v453, 127
  %v455 = vshll.u32 %v454, 23
  %v456 = vor.u32 4788187, %v455
  %v457 = vand.u32 2147483647, %v456
  %v459 = vcvt.s32.f32 %v452
  %v460 = vmul.f32 %v459, %v457
  %v461 = vxor.u32 %v460, 2147483648
  %v462 = vsel %vm379, %v461, %v460
  %v463 = vsub.s32 4, %v439
  %v464 = vsel %vm379, %v463, %v439
  %v465 = vsel %vm378, %v30, %v462
  %v466 = vsel %vm378, 0, %v464
  %v467 = vcosq.f32.pop %v465
  %v468 = vsinq.f32.pop %v465
  %vm469 = vweird.f32 %v30
  %v470 = vadd.s32 %v466, 3
  %v471 = vand.u32 %v470, 3
  %vm472 = vcmp.lt.s32.totalorder %v471, 2
  %vm473 = vcmp.eq.s32.totalorder %v471, 0
  %v474 = vxor.u32 %v468, 2147483648
  %v475 = vsel %vm473, %v467, %v474
  %vm476 = vcmp.eq.s32.totalorder %v471, 2
  %v477 = vxor.u32 %v467, 2147483648
  %v478 = vsel %vm476, %v477, %v468
  %v479 = vsel %vm472, %v475, %v478
  %v480 = vsel %vm469, nan, %v479
  %v481 = vmul.f32 %v61, %v169
  %v482 = vmul.f32 %v62, %v272
  %v483 = vmul.f32 %v481, %v169
  %v484 = vmul.f32 %v482, %v272
  %v485 = vmul.f32 %v65, %v376
  %v486 = vmul.f32 %v66, %v480
  %v487 = vmul.f32 %v485, %v376
  %v488 = vmul.f32 %v486, %v480
  %v489 = vadd.f32 %v483, %v487
  %v490 = vadd.f32 %v484, %v488
  %v491 = vmul.f32 %v61, %v376
  %v492 = vmul.f32 %v62, %v480
  %v493 = vmul.f32 %v491, %v376
  %v494 = vmul.f32 %v492, %v480
  %v495 = vmul.f32 %v65, %v169
  %v496 = vmul.f32 %v66, %v272
  %v497 = vmul.f32 %v495, %v169
  %v498 = vmul.f32 %v496, %v272
  %v499 = vadd.f32 %v493, %v497
  %v500 = vadd.f32 %v494, %v498
  %v501 = vsub.f32 %v61, %v65
  %v502 = vsub.f32 %v62, %v66
  %v503 = vmul.f32 %v501, %v169
  %v504 = vmul.f32 %v502, %v272
  %v505 = vmul.f32 %v503, %v376
  %v506 = vmul.f32 %v504, %v480
  %v507 = vmul.f32 %v41, %v41
  %v508 = vmul.f32 %v42, %v42
  %v509 = vmul.f32 %v507, 0.083333336
  %v510 = vmul.f32 %v508, 0.083333336
  %v511 = vmul.f32 %v45, %v45
  %v512 = vmul.f32 %v46, %v46
  %v513 = vmul.f32 %v511, 0.083333336
  %v514 = vmul.f32 %v512, 0.083333336
  %v515 = vand.u32 2147483647, %v49
  %vm516 = vcmp.le.f32.partialorder %v515, 0.7853982
  %vm517 = vcmp.lt.s32.totalorder %v49, 0
  %v518 = vand.u32 %v49, 2139095040
  %v519 = vshrl.u32 %v518, 23
  %v520 = vsub.s32 %v519, 127
  %v521 = vand.u32 2147483647, %v49
  %v522 = vand.u32 %v521, 8388607
  %v523 = vor.u32 %v522, 8388608
  %v524 = vsub.s32 0, %v523
  %v525 = vadd.s32 %v520, 1
  %vm526 = vcmp.gt.s32.totalorder %v525, 0
  %v527 = vsel %vm526, %v525, 0
  %v528 = vshrl.u32 %v527, 5
  %v529 = vand.u32 %v527, 31
  %v530 = vsub.s32 32, %v529
  %v531 = vshrl.u32 683565275, %v530
  %v532 = vshll.u32 683565275, %v529
  %v533 = vshrl.u32 2475754826, %v530
  %v534 = vor.u32 %v532, %v533
  %v535 = vshll.u32 2475754826, %v529
  %v536 = vshrl.u32 2131351028, %v530
  %v537 = vor.u32 %v535, %v536
  %v538 = vshll.u32 2131351028, %v529
  %v539 = vshrl.u32 2102212464, %v530
  %v540 = vor.u32 %v538, %v539
  %v541 = vshll.u32 2102212464, %v529
  %v542 = vshrl.u32 920167782, %v530
  %v543 = vor.u32 %v541, %v542
  %v544 = vshll.u32 920167782, %v529
  %v545 = vshrl.u32 1326507024, %v530
  %v546 = vor.u32 %v544, %v545
  %vm547 = vcmp.lt.s32.totalorder %v528, 1
  %vm548 = vcmp.lt.s32.totalorder %v528, 2
  %vm549 = vcmp.lt.s32.totalorder %v528, 3
  %vm550 = vcmp.lt.s32.totalorder %v528, 4
  %v551 = vsel %vm547, %v531, %v534
  %v552 = vsel %vm550, %v540, 2102212464
  %v553 = vsel %vm549, %v537, %v552
  %v554 = vsel %vm548, %v551, %v553
  %v555 = vsel %vm547, %v534, %v537
  %v556 = vsel %vm550, %v543, 920167782
  %v557 = vsel %vm549, %v540, %v556
  %v558 = vsel %vm548, %v555, %v557
  %v559 = vsel %vm547, %v537, %v540
  %v560 = vsel %vm550, %v546, 1326507024
  %v561 = vsel %vm549, %v543, %v560
  %v562 = vsel %vm548, %v559, %v561
  %v563 = vshll.u32 %v523, 8
  %v564 = vmul.u32.u64.compose %v563, %v562
  %v565 = vextract.low.u32 %v564
  %v566 = vextract.high.u32 %v564
  %v567 = vmul.u32.u64.compose %v563, %v558
  %v568 = vextract.low.u32 %v567
  %v569 = vextract.high.u32 %v567
  %v570 = vmul.u32 %v563, %v554
  %v571 = vadd.s32 %v566, %v568
  %vm572 = vc.u32 %v566, %v568
  %v573 = vadd.s32 %v569, 1
  %v574 = vsel %vm572, %v573, %v569
  %v575 = vadd.s32 %v570, %v574
  %v576 = vadd.s32 %v575, 536870912
  %v577 = vshrl.u32 %v576, 30
  %v578 = vshll.u32 %v577, 30
  %v579 = vsub.s32 %v575, %v578
  %vm580 = vcmp.lt.s32.totalorder %v579, 0
  %v581 = vsub.s32 0, %v579
  %v582 = vsel %vm580, %v581, %v579
  %v583 = vclz %v582
  %v584 = vsub.s32 %v583, 2
  %vm585 = vcmp.gt.s32.totalorder 0, %v584
  %v586 = vsel %vm585, 0, %v584
  %v587 = vsub.s32 32, %v586
  %v588 = vshll.u32 %v579, %v586
  %v589 = vshrl.u32 %v571, %v587
  %v590 = vor.u32 %v588, %v589
  %v591 = vsub.s32 4294967266, %v586
  %v592 = vadd.s32 %v591, 127
  %v593 = vshll.u32 %v592, 23
  %v594 = vor.u32 4788187, %v593
  %v595 = vand.u32 2147483647, %v594
  %v597 = vcvt.s32.f32 %v590
  %v598 = vmul.f32 %v597, %v595
  %v599 = vxor.u32 %v598, 2147483648
  %v600 = vsel %vm517, %v599, %v598
  %v601 = vsub.s32 4, %v577
  %v602 = vsel %vm517, %v601, %v577
  %v603 = vsel %vm516, %v49, %v600
  %v604 = vsel %vm516, 0, %v602
  %v605 = vcosq.f32.pop %v603
  %v606 = vsinq.f32.pop %v603
  %vm607 = vweird.f32 %v49
  %v608 = vand.u32 %v604, 3
  %vm609 = vcmp.lt.s32.totalorder %v608, 2
  %vm610 = vcmp.eq.s32.totalorder %v608, 0
  %v611 = vxor.u32 %v606, 2147483648
  %v612 = vsel %vm610, %v605, %v611
  %vm613 = vcmp.eq.s32.totalorder %v608, 2
  %v614 = vxor.u32 %v605, 2147483648
  %v615 = vsel %vm613, %v614, %v606
  %v616 = vsel %vm609, %v612, %v615
  %v617 = vsel %vm607, nan, %v616
  %v618 = vand.u32 2147483647, %v50
  %vm619 = vcmp.le.f32.partialorder %v618, 0.7853982
  %vm620 = vcmp.lt.s32.totalorder %v50, 0
  %v621 = vand.u32 %v50, 2139095040
  %v622 = vshrl.u32 %v621, 23
  %v623 = vsub.s32 %v622, 127
  %v624 = vand.u32 2147483647, %v50
  %v625 = vand.u32 %v624, 8388607
  %v626 = vor.u32 %v625, 8388608
  %v627 = vsub.s32 0, %v626
  %v628 = vadd.s32 %v623, 1
  %vm629 = vcmp.gt.s32.totalorder %v628, 0
  %v630 = vsel %vm629, %v628, 0
  %v631 = vshrl.u32 %v630, 5
  %v632 = vand.u32 %v630, 31
  %v633 = vsub.s32 32, %v632
  %v634 = vshrl.u32 683565275, %v633
  %v635 = vshll.u32 683565275, %v632
  %v636 = vshrl.u32 2475754826, %v633
  %v637 = vor.u32 %v635, %v636
  %v638 = vshll.u32 2475754826, %v632
  %v639 = vshrl.u32 2131351028, %v633
  %v640 = vor.u32 %v638, %v639
  %v641 = vshll.u32 2131351028, %v632
  %v642 = vshrl.u32 2102212464, %v633
  %v643 = vor.u32 %v641, %v642
  %v644 = vshll.u32 2102212464, %v632
  %v645 = vshrl.u32 920167782, %v633
  %v646 = vor.u32 %v644, %v645
  %v647 = vshll.u32 920167782, %v632
  %v648 = vshrl.u32 1326507024, %v633
  %v649 = vor.u32 %v647, %v648
  %vm650 = vcmp.lt.s32.totalorder %v631, 1
  %vm651 = vcmp.lt.s32.totalorder %v631, 2
  %vm652 = vcmp.lt.s32.totalorder %v631, 3
  %vm653 = vcmp.lt.s32.totalorder %v631, 4
  %v654 = vsel %vm650, %v634, %v637
  %v655 = vsel %vm653, %v643, 2102212464
  %v656 = vsel %vm652, %v640, %v655
  %v657 = vsel %vm651, %v654, %v656
  %v658 = vsel %vm650, %v637, %v640
  %v659 = vsel %vm653, %v646, 920167782
  %v660 = vsel %vm652, %v643, %v659
  %v661 = vsel %vm651, %v658, %v660
  %v662 = vsel %vm650, %v640, %v643
  %v663 = vsel %vm653, %v649, 1326507024
  %v664 = vsel %vm652, %v646, %v663
  %v665 = vsel %vm651, %v662, %v664
  %v666 = vshll.u32 %v626, 8
  %v667 = vmul.u32.u64.compose %v666, %v665
  %v668 = vextract.low.u32 %v667
  %v669 = vextract.high.u32 %v667
  %v670 = vmul.u32.u64.compose %v666, %v661
  %v671 = vextract.low.u32 %v670
  %v672 = vextract.high.u32 %v670
  %v673 = vmul.u32 %v666, %v657
  %v674 = vadd.s32 %v669, %v671
  %vm675 = vc.u32 %v669, %v671
  %v676 = vadd.s32 %v672, 1
  %v677 = vsel %vm675, %v676, %v672
  %v678 = vadd.s32 %v673, %v677
  %v679 = vadd.s32 %v678, 536870912
  %v680 = vshrl.u32 %v679, 30
  %v681 = vshll.u32 %v680, 30
  %v682 = vsub.s32 %v678, %v681
  %vm683 = vcmp.lt.s32.totalorder %v682, 0
  %v684 = vsub.s32 0, %v682
  %v685 = vsel %vm683, %v684, %v682
  %v686 = vclz %v685
  %v687 = vsub.s32 %v686, 2
  %vm688 = vcmp.gt.s32.totalorder 0, %v687
  %v689 = vsel %vm688, 0, %v687
  %v690 = vsub.s32 32, %v689
  %v691 = vshll.u32 %v682, %v689
  %v692 = vshrl.u32 %v674, %v690
  %v693 = vor.u32 %v691, %v692
  %v694 = vsub.s32 4294967266, %v689
  %v695 = vadd.s32 %v694, 127
  %v696 = vshll.u32 %v695, 23
  %v697 = vor.u32 4788187, %v696
  %v698 = vand.u32 2147483647, %v697
  %v700 = vcvt.s32.f32 %v693
  %v701 = vmul.f32 %v700, %v698
  %v702 = vxor.u32 %v701, 2147483648
  %v703 = vsel %vm620, %v702, %v701
  %v704 = vsub.s32 4, %v680
  %v705 = vsel %vm620, %v704, %v680
  %v706 = vsel %vm619, %v50, %v703
  %v707 = vsel %vm619, 0, %v705
  %v708 = vcosq.f32.pop %v706
  %v709 = vsinq.f32.pop %v706
  %vm710 = vweird.f32 %v50
  %v711 = vand.u32 %v707, 3
  %vm712 = vcmp.lt.s32.totalorder %v711, 2
  %vm713 = vcmp.eq.s32.totalorder %v711, 0
  %v714 = vxor.u32 %v709, 2147483648
  %v715 = vsel %vm713, %v708, %v714
  %vm716 = vcmp.eq.s32.totalorder %v711, 2
  %v717 = vxor.u32 %v708, 2147483648
  %v718 = vsel %vm716, %v717, %v709
  %v719 = vsel %vm712, %v715, %v718
  %v720 = vsel %vm710, nan, %v719
  %v721 = vand.u32 2147483647, %v49
  %vm722 = vcmp.le.f32.partialorder %v721, 0.7853982
  %vm723 = vcmp.lt.s32.totalorder %v49, 0
  %v724 = vand.u32 %v49, 2139095040
  %v725 = vshrl.u32 %v724, 23
  %v726 = vsub.s32 %v725, 127
  %v727 = vand.u32 2147483647, %v49
  %v728 = vand.u32 %v727, 8388607
  %v729 = vor.u32 %v728, 8388608
  %v730 = vsub.s32 0, %v729
  %v731 = vadd.s32 %v726, 1
  %vm732 = vcmp.gt.s32.totalorder %v731, 0
  %v733 = vsel %vm732, %v731, 0
  %v734 = vshrl.u32 %v733, 5
  %v735 = vand.u32 %v733, 31
  %v736 = vsub.s32 32, %v735
  %v737 = vshrl.u32 683565275, %v736
  %v738 = vshll.u32 683565275, %v735
  %v739 = vshrl.u32 2475754826, %v736
  %v740 = vor.u32 %v738, %v739
  %v741 = vshll.u32 2475754826, %v735
  %v742 = vshrl.u32 2131351028, %v736
  %v743 = vor.u32 %v741, %v742
  %v744 = vshll.u32 2131351028, %v735
  %v745 = vshrl.u32 2102212464, %v736
  %v746 = vor.u32 %v744, %v745
  %v747 = vshll.u32 2102212464, %v735
  %v748 = vshrl.u32 920167782, %v736
  %v749 = vor.u32 %v747, %v748
  %v750 = vshll.u32 920167782, %v735
  %v751 = vshrl.u32 1326507024, %v736
  %v752 = vor.u32 %v750, %v751
  %vm753 = vcmp.lt.s32.totalorder %v734, 1
  %vm754 = vcmp.lt.s32.totalorder %v734, 2
  %vm755 = vcmp.lt.s32.totalorder %v734, 3
  %vm756 = vcmp.lt.s32.totalorder %v734, 4
  %v757 = vsel %vm753, %v737, %v740
  %v758 = vsel %vm756, %v746, 2102212464
  %v759 = vsel %vm755, %v743, %v758
  %v760 = vsel %vm754, %v757, %v759
  %v761 = vsel %vm753, %v740, %v743
  %v762 = vsel %vm756, %v749, 920167782
  %v763 = vsel %vm755, %v746, %v762
  %v764 = vsel %vm754, %v761, %v763
  %v765 = vsel %vm753, %v743, %v746
  %v766 = vsel %vm756, %v752, 1326507024
  %v767 = vsel %vm755, %v749, %v766
  %v768 = vsel %vm754, %v765, %v767
  %v769 = vshll.u32 %v729, 8
  %v770 = vmul.u32.u64.compose %v769, %v768
  %v771 = vextract.low.u32 %v770
  %v772 = vextract.high.u32 %v770
  %v773 = vmul.u32.u64.compose %v769, %v764
  %v774 = vextract.low.u32 %v773
  %v775 = vextract.high.u32 %v773
  %v776 = vmul.u32 %v769, %v760
  %v777 = vadd.s32 %v772, %v774
  %vm778 = vc.u32 %v772, %v774
  %v779 = vadd.s32 %v775, 1
  %v780 = vsel %vm778, %v779, %v775
  %v781 = vadd.s32 %v776, %v780
  %v782 = vadd.s32 %v781, 536870912
  %v783 = vshrl.u32 %v782, 30
  %v784 = vshll.u32 %v783, 30
  %v785 = vsub.s32 %v781, %v784
  %vm786 = vcmp.lt.s32.totalorder %v785, 0
  %v787 = vsub.s32 0, %v785
  %v788 = vsel %vm786, %v787, %v785
  %v789 = vclz %v788
  %v790 = vsub.s32 %v789, 2
  %vm791 = vcmp.gt.s32.totalorder 0, %v790
  %v792 = vsel %vm791, 0, %v790
  %v793 = vsub.s32 32, %v792
  %v794 = vshll.u32 %v785, %v792
  %v795 = vshrl.u32 %v777, %v793
  %v796 = vor.u32 %v794, %v795
  %v797 = vsub.s32 4294967266, %v792
  %v798 = vadd.s32 %v797, 127
  %v799 = vshll.u32 %v798, 23
  %v800 = vor.u32 4788187, %v799
  %v801 = vand.u32 2147483647, %v800
  %v803 = vcvt.s32.f32 %v796
  %v804 = vmul.f32 %v803, %v801
  %v805 = vxor.u32 %v804, 2147483648
  %v806 = vsel %vm723, %v805, %v804
  %v807 = vsub.s32 4, %v783
  %v808 = vsel %vm723, %v807, %v783
  %v809 = vsel %vm722, %v49, %v806
  %v810 = vsel %vm722, 0, %v808
  %v811 = vcosq.f32.pop %v809
  %v812 = vsinq.f32.pop %v809
  %vm813 = vweird.f32 %v49
  %v814 = vadd.s32 %v810, 3
  %v815 = vand.u32 %v814, 3
  %vm816 = vcmp.lt.s32.totalorder %v815, 2
  %vm817 = vcmp.eq.s32.totalorder %v815, 0
  %v818 = vxor.u32 %v812, 2147483648
  %v819 = vsel %vm817, %v811, %v818
  %vm820 = vcmp.eq.s32.totalorder %v815, 2
  %v821 = vxor.u32 %v811, 2147483648
  %v822 = vsel %vm820, %v821, %v812
  %v823 = vsel %vm816, %v819, %v822
  %v824 = vsel %vm813, nan, %v823
  %v825 = vand.u32 2147483647, %v50
  %vm826 = vcmp.le.f32.partialorder %v825, 0.7853982
  %vm827 = vcmp.lt.s32.totalorder %v50, 0
  %v828 = vand.u32 %v50, 2139095040
  %v829 = vshrl.u32 %v828, 23
  %v830 = vsub.s32 %v829, 127
  %v831 = vand.u32 2147483647, %v50
  %v832 = vand.u32 %v831, 8388607
  %v833 = vor.u32 %v832, 8388608
  %v834 = vsub.s32 0, %v833
  %v835 = vadd.s32 %v830, 1
  %vm836 = vcmp.gt.s32.totalorder %v835, 0
  %v837 = vsel %vm836, %v835, 0
  %v838 = vshrl.u32 %v837, 5
  %v839 = vand.u32 %v837, 31
  %v840 = vsub.s32 32, %v839
  %v841 = vshrl.u32 683565275, %v840
  %v842 = vshll.u32 683565275, %v839
  %v843 = vshrl.u32 2475754826, %v840
  %v844 = vor.u32 %v842, %v843
  %v845 = vshll.u32 2475754826, %v839
  %v846 = vshrl.u32 2131351028, %v840
  %v847 = vor.u32 %v845, %v846
  %v848 = vshll.u32 2131351028, %v839
  %v849 = vshrl.u32 2102212464, %v840
  %v850 = vor.u32 %v848, %v849
  %v851 = vshll.u32 2102212464, %v839
  %v852 = vshrl.u32 920167782, %v840
  %v853 = vor.u32 %v851, %v852
  %v854 = vshll.u32 920167782, %v839
  %v855 = vshrl.u32 1326507024, %v840
  %v856 = vor.u32 %v854, %v855
  %vm857 = vcmp.lt.s32.totalorder %v838, 1
  %vm858 = vcmp.lt.s32.totalorder %v838, 2
  %vm859 = vcmp.lt.s32.totalorder %v838, 3
  %vm860 = vcmp.lt.s32.totalorder %v838, 4
  %v861 = vsel %vm857, %v841, %v844
  %v862 = vsel %vm860, %v850, 2102212464
  %v863 = vsel %vm859, %v847, %v862
  %v864 = vsel %vm858, %v861, %v863
  %v865 = vsel %vm857, %v844, %v847
  %v866 = vsel %vm860, %v853, 920167782
  %v867 = vsel %vm859, %v850, %v866
  %v868 = vsel %vm858, %v865, %v867
  %v869 = vsel %vm857, %v847, %v850
  %v870 = vsel %vm860, %v856, 1326507024
  %v871 = vsel %vm859, %v853, %v870
  %v872 = vsel %vm858, %v869, %v871
  %v873 = vshll.u32 %v833, 8
  %v874 = vmul.u32.u64.compose %v873, %v872
  %v875 = vextract.low.u32 %v874
  %v876 = vextract.high.u32 %v874
  %v877 = vmul.u32.u64.compose %v873, %v868
  %v878 = vextract.low.u32 %v877
  %v879 = vextract.high.u32 %v877
  %v880 = vmul.u32 %v873, %v864
  %v881 = vadd.s32 %v876, %v878
  %vm882 = vc.u32 %v876, %v878
  %v883 = vadd.s32 %v879, 1
  %v884 = vsel %vm882, %v883, %v879
  %v885 = vadd.s32 %v880, %v884
  %v886 = vadd.s32 %v885, 536870912
  %v887 = vshrl.u32 %v886, 30
  %v888 = vshll.u32 %v887, 30
  %v889 = vsub.s32 %v885, %v888
  %vm890 = vcmp.lt.s32.totalorder %v889, 0
  %v891 = vsub.s32 0, %v889
  %v892 = vsel %vm890, %v891, %v889
  %v893 = vclz %v892
  %v894 = vsub.s32 %v893, 2
  %vm895 = vcmp.gt.s32.totalorder 0, %v894
  %v896 = vsel %vm895, 0, %v894
  %v897 = vsub.s32 32, %v896
  %v898 = vshll.u32 %v889, %v896
  %v899 = vshrl.u32 %v881, %v897
  %v900 = vor.u32 %v898, %v899
  %v901 = vsub.s32 4294967266, %v896
  %v902 = vadd.s32 %v901, 127
  %v903 = vshll.u32 %v902, 23
  %v904 = vor.u32 4788187, %v903
  %v905 = vand.u32 2147483647, %v904
  %v907 = vcvt.s32.f32 %v900
  %v908 = vmul.f32 %v907, %v905
  %v909 = vxor.u32 %v908, 2147483648
  %v910 = vsel %vm827, %v909, %v908
  %v911 = vsub.s32 4, %v887
  %v912 = vsel %vm827, %v911, %v887
  %v913 = vsel %vm826, %v50, %v910
  %v914 = vsel %vm826, 0, %v912
  %v915 = vcosq.f32.pop %v913
  %v916 = vsinq.f32.pop %v913
  %vm917 = vweird.f32 %v50
  %v918 = vadd.s32 %v914, 3
  %v919 = vand.u32 %v918, 3
  %vm920 = vcmp.lt.s32.totalorder %v919, 2
  %vm921 = vcmp.eq.s32.totalorder %v919, 0
  %v922 = vxor.u32 %v916, 2147483648
  %v923 = vsel %vm921, %v915, %v922
  %vm924 = vcmp.eq.s32.totalorder %v919, 2
  %v925 = vxor.u32 %v915, 2147483648
  %v926 = vsel %vm924, %v925, %v916
  %v927 = vsel %vm920, %v923, %v926
  %v928 = vsel %vm917, nan, %v927
  %v929 = vmul.f32 %v509, %v617
  %v930 = vmul.f32 %v510, %v720
  %v931 = vmul.f32 %v929, %v617
  %v932 = vmul.f32 %v930, %v720
  %v933 = vmul.f32 %v513, %v824
  %v934 = vmul.f32 %v514, %v928
  %v935 = vmul.f32 %v933, %v824
  %v936 = vmul.f32 %v934, %v928
  %v937 = vadd.f32 %v931, %v935
  %v938 = vadd.f32 %v932, %v936
  %v939 = vmul.f32 %v509, %v824
  %v940 = vmul.f32 %v510, %v928
  %v941 = vmul.f32 %v939, %v824
  %v942 = vmul.f32 %v940, %v928
  %v943 = vmul.f32 %v513, %v617
  %v944 = vmul.f32 %v514, %v720
  %v945 = vmul.f32 %v943, %v617
  %v946 = vmul.f32 %v944, %v720
  %v947 = vadd.f32 %v941, %v945
  %v948 = vadd.f32 %v942, %v946
  %v949 = vsub.f32 %v509, %v513
  %v950 = vsub.f32 %v510, %v514
  %v951 = vmul.f32 %v949, %v617
  %v952 = vmul.f32 %v950, %v720
  %v953 = vmul.f32 %v951, %v824
  %v954 = vmul.f32 %v952, %v928
  %v955 = vadd.f32 %v489, %v937
  %v956 = vadd.f32 %v490, %v938
  %v957 = vadd.f32 %v499, %v947
  %v958 = vadd.f32 %v500, %v948
  %v959 = vadd.f32 %v505, %v953
  %v960 = vadd.f32 %v506, %v954
  %v961 = vsub.f32 %v13, %v33
  %v962 = vsub.f32 %v14, %v34
  %v963 = vsub.f32 %v17, %v37
  %v964 = vsub.f32 %v18, %v38
  %v965 = vmul.f32 %v955, %v957
  %v966 = vmul.f32 %v956, %v958
  %v967 = vmul.f32 %v959, %v959
  %v968 = vmul.f32 %v960, %v960
  %v969 = vsub.f32 %v965, %v967
  %v970 = vsub.f32 %v966, %v968
  %v971 = vadd.f32 %v969, 1e-07
  %v972 = vadd.f32 %v970, 1e-07
  %v973 = vrcp.pop %v971
  %v974 = vrcp.pop %v972
  %v975 = vmul.f32 %v955, %v963
  %v976 = vmul.f32 %v956, %v964
  %v977 = vmul.f32 %v975, %v963
  %v978 = vmul.f32 %v976, %v964
  %v979 = vmul.f32 %v957, %v961
  %v980 = vmul.f32 %v958, %v962
  %v981 = vmul.f32 %v979, %v961
  %v982 = vmul.f32 %v980, %v962
  %v983 = vadd.f32 %v977, %v981
  %v984 = vadd.f32 %v978, %v982
  %v985 = vmul.f32 %v983, %v973
  %v986 = vmul.f32 %v984, %v974
  %v987 = vmul.f32 %v985, 0.25
  %v988 = vmul.f32 %v986, 0.25
  %v989 = vsub.f32 0.0, %v961
  %v990 = vsub.f32 0.0, %v962
  %v991 = vmul.f32 %v959, %v989
  %v992 = vmul.f32 %v960, %v990
  %v993 = vmul.f32 %v991, %v963
  %v994 = vmul.f32 %v992, %v964
  %v995 = vmul.f32 %v993, %v973
  %v996 = vmul.f32 %v994, %v974
  %v997 = vmul.f32 %v995, 0.5
  %v998 = vmul.f32 %v996, 0.5
  %v999 = vmul.f32 %v489, %v499
  %v1000 = vmul.f32 %v490, %v500
  %v1001 = vmul.f32 %v505, %v505
  %v1002 = vmul.f32 %v506, %v506
  %v1003 = vsub.f32 %v999, %v1001
  %v1004 = vsub.f32 %v1000, %v1002
  %v1005 = vmax.f32 %v1003, 0.0
  %v1006 = vmax.f32 %v1004, 0.0
  %v1007 = vmul.f32 %v937, %v947
  %v1008 = vmul.f32 %v938, %v948
  %v1009 = vmul.f32 %v953, %v953
  %v1010 = vmul.f32 %v954, %v954
  %v1011 = vsub.f32 %v1007, %v1009
  %v1012 = vsub.f32 %v1008, %v1010
  %v1013 = vmax.f32 %v1011, 0.0
  %v1014 = vmax.f32 %v1012, 0.0
  %v1015 = vmul.f32 %v1005, %v1013
  %v1016 = vmul.f32 %v1006, %v1014
  %v1017 = vrsqrt.pop %v1015
  %v1018 = vmul.f32 %v1015, %v1017
  %vm1019 = vcmp.eq.f32.partialorder %v1015, inf
  %v1020 = vsel %vm1019, %v1015, %v1018
  %vm1021 = vcmp.eq.f32.partialorder %v1015, 0.0
  %v1022 = vand.u32 %v1015, 2147483648
  %v1023 = vsel %vm1021, %v1022, %v1020
  %v1024 = vrsqrt.pop %v1016
  %v1025 = vmul.f32 %v1016, %v1024
  %vm1026 = vcmp.eq.f32.partialorder %v1016, inf
  %v1027 = vsel %vm1026, %v1016, %v1025
  %vm1028 = vcmp.eq.f32.partialorder %v1016, 0.0
  %v1029 = vand.u32 %v1016, 2147483648
  %v1030 = vsel %vm1028, %v1029, %v1027
  %v1031 = vmul.f32 %v1023, 4.0
  %v1032 = vmul.f32 %v1030, 4.0
  %v1033 = vadd.f32 %v1031, 1e-07
  %v1034 = vadd.f32 %v1032, 1e-07
  %v1035 = vrcp.pop %v1033
  %v1036 = vrcp.pop %v1034
  %v1037 = vmul.f32 %v969, %v1035
  %v1038 = vmul.f32 %v970, %v1036
  %v1039 = vadd.f32 %v1037, 1e-07
  %v1040 = vadd.f32 %v1038, 1e-07
  %v1041 = vlog2.pop %v1039
  %v1042 = vmul.f32 %v1041, 0.6931472
  %v1043 = vlog2.pop %v1040
  %v1044 = vmul.f32 %v1043, 0.6931472
  %v1045 = vmul.f32 %v1042, 0.5
  %v1046 = vmul.f32 %v1044, 0.5
  %v1047 = vadd.f32 %v987, %v997
  %v1048 = vadd.f32 %v988, %v998
  %v1049 = vadd.f32 %v1047, %v1045
  %v1050 = vadd.f32 %v1048, %v1046
  %v1051 = vmax.f32 %v1049, 1e-07
  %v1052 = vmax.f32 %v1050, 1e-07
  %v1053 = vmin.f32 %v1051, 100.0
  %v1054 = vmin.f32 %v1052, 100.0
  %v1055 = vsub.f32 0.0, %v1053
  %v1056 = vsub.f32 0.0, %v1054
  %v1057 = vmul.f32 %v1055, 1.442695
  %v1058 = vpow.pop %v1057
  %v1059 = vmul.f32 %v1056, 1.442695
  %v1060 = vpow.pop %v1059
  %v1061 = vsub.f32 1.0, %v1058
  %v1062 = vsub.f32 1.0, %v1060
  %v1063 = vadd.f32 %v1061, 1e-07
  %v1064 = vadd.f32 %v1062, 1e-07
  %v1065 = vrsqrt.pop %v1063
  %v1066 = vmul.f32 %v1063, %v1065
  %vm1067 = vcmp.eq.f32.partialorder %v1063, inf
  %v1068 = vsel %vm1067, %v1063, %v1066
  %vm1069 = vcmp.eq.f32.partialorder %v1063, 0.0
  %v1070 = vand.u32 %v1063, 2147483648
  %v1071 = vsel %vm1069, %v1070, %v1068
  %v1072 = vrsqrt.pop %v1064
  %v1073 = vmul.f32 %v1064, %v1072
  %vm1074 = vcmp.eq.f32.partialorder %v1064, inf
  %v1075 = vsel %vm1074, %v1064, %v1073
  %vm1076 = vcmp.eq.f32.partialorder %v1064, 0.0
  %v1077 = vand.u32 %v1064, 2147483648
  %v1078 = vsel %vm1076, %v1077, %v1075
  %s1079 = sadd.s32 0, 192
  %s1080 = scalar_lea.vmem %s0, %s1079
  %v1081 = vld [vmem:[%s1080] sm:$0xff]
  %v1082 = vld [vmem:[%s1080 + $0x8] sm:$0xff]
  %s1083 = sadd.s32 0, 208
  %s1084 = scalar_lea.vmem %s0, %s1083
  %v1085 = vld [vmem:[%s1084] sm:$0xff]
  %v1086 = vld [vmem:[%s1084 + $0x8] sm:$0xff]
  %vm1087 = vcmp.gt.f32.partialorder %v1085, 0.0
  %vm1088 = vcmp.gt.f32.partialorder %v1086, 0.0
  %v1089 = vmul.f32 %v1071, %v1081
  %v1090 = vmul.f32 %v1078, %v1082
  %v1091 = vsel %vm1087, %v1089, 0.0
  %v1092 = vsel %vm1088, %v1090, 0.0
  %v1093 = vadd.f32 %v1091, 0.0
  %v1094 = vadd.f32 %v1093, %v1092
  %v1095 = vmul.f32 %v41, 0.5
  %v1096 = vmul.f32 %v42, 0.5
  %v1097 = vmul.f32 %v45, 0.5
  %v1098 = vmul.f32 %v46, 0.5
  %v1099 = vsub.f32 %v33, %v1095
  %v1100 = vsub.f32 %v34, %v1096
  %v1101 = vsub.f32 %v53, %v1099
  %v1102 = vsub.f32 %v54, %v1100
  %v1103 = vsub.f32 %v37, %v1097
  %v1104 = vsub.f32 %v38, %v1098
  %v1105 = vsub.f32 %v57, %v1103
  %v1106 = vsub.f32 %v58, %v1104
  %v1107 = vadd.f32 %v33, %v1095
  %v1108 = vadd.f32 %v34, %v1096
  %v1109 = vsub.f32 %v1107, %v53
  %v1110 = vsub.f32 %v1108, %v54
  %v1111 = vadd.f32 %v37, %v1097
  %v1112 = vadd.f32 %v38, %v1098
  %v1113 = vsub.f32 %v1111, %v57
  %v1114 = vsub.f32 %v1112, %v58
  %v1115 = vmax.f32 %v1101, 0.0
  %v1116 = vmax.f32 %v1102, 0.0
  %v1117 = vmin.f32 %v1115, 14.99
  %v1118 = vmin.f32 %v1116, 14.99
  %v1119 = vfloor.f32 %v1117
  %v1120 = vfloor.f32 %v1118
  %v1121 = vadd.f32 %v1119, 1.0
  %v1122 = vadd.f32 %v1120, 1.0
  %v1123 = vsub.f32 %v1121, %v1117
  %v1124 = vsub.f32 %v1122, %v1118
  %v1125 = vld [vmem:[%s1] sm:$0xf]
  %v1126 = vld [vmem:[%s1 + $0x4] sm:$0xf]
  %s1127 = sadd.s32 0, 2
  %s1128 = smul.addr %s1127, 4
  %s1129 = scalar_lea.vmem %s1, %s1128
  %v1130 = vld [vmem:[%s1129] sm:$0xf]
  %v1131 = vld [vmem:[%s1129 + $0x4] sm:$0xf]
  %v1132 = vmax.bf16 %v1125, %v1130
  %v1133 = vmax.bf16 %v1126, %v1131
  %s1134 = sadd.s32 0, 4
  %s1135 = smul.addr %s1134, 4
  %s1136 = scalar_lea.vmem %s1, %s1135
  %v1137 = vld [vmem:[%s1136] sm:$0xf]
  %v1138 = vld [vmem:[%s1136 + $0x4] sm:$0xf]
  %v1139 = vmax.bf16 %v1132, %v1137
  %v1140 = vmax.bf16 %v1133, %v1138
  %s1141 = sadd.s32 0, 6
  %s1142 = smul.addr %s1141, 4
  %s1143 = scalar_lea.vmem %s1, %s1142
  %v1144 = vld [vmem:[%s1143] sm:$0xf]
  %v1145 = vld [vmem:[%s1143 + $0x4] sm:$0xf]
  %v1146 = vmax.bf16 %v1139, %v1144
  %v1147 = vmax.bf16 %v1140, %v1145
  %s1148 = sadd.s32 0, 8
  %s1149 = smul.addr %s1148, 4
  %s1150 = scalar_lea.vmem %s1, %s1149
  %v1151 = vld [vmem:[%s1150] sm:$0xf]
  %v1152 = vld [vmem:[%s1150 + $0x4] sm:$0xf]
  %v1153 = vmax.bf16 %v1146, %v1151
  %v1154 = vmax.bf16 %v1147, %v1152
  %s1155 = sadd.s32 0, 10
  %s1156 = smul.addr %s1155, 4
  %s1157 = scalar_lea.vmem %s1, %s1156
  %v1158 = vld [vmem:[%s1157] sm:$0xf]
  %v1159 = vld [vmem:[%s1157 + $0x4] sm:$0xf]
  %v1160 = vmax.bf16 %v1153, %v1158
  %v1161 = vmax.bf16 %v1154, %v1159
  %s1162 = sadd.s32 0, 12
  %s1163 = smul.addr %s1162, 4
  %s1164 = scalar_lea.vmem %s1, %s1163
  %v1165 = vld [vmem:[%s1164] sm:$0xf]
  %v1166 = vld [vmem:[%s1164 + $0x4] sm:$0xf]
  %v1167 = vmax.bf16 %v1160, %v1165
  %v1168 = vmax.bf16 %v1161, %v1166
  %s1169 = sadd.s32 0, 14
  %s1170 = smul.addr %s1169, 4
  %s1171 = scalar_lea.vmem %s1, %s1170
  %v1172 = vld [vmem:[%s1171] sm:$0xf]
  %v1173 = vld [vmem:[%s1171 + $0x4] sm:$0xf]
  %v1174 = vmax.bf16 %v1167, %v1172
  %v1175 = vmax.bf16 %v1168, %v1173
  %s1176 = sadd.s32 0, 16
  %s1177 = smul.addr %s1176, 4
  %s1178 = scalar_lea.vmem %s1, %s1177
  %v1179 = vld [vmem:[%s1178] sm:$0xf]
  %v1180 = vld [vmem:[%s1178 + $0x4] sm:$0xf]
  %v1181 = vmax.bf16 %v1174, %v1179
  %v1182 = vmax.bf16 %v1175, %v1180
  %s1183 = sadd.s32 0, 18
  %s1184 = smul.addr %s1183, 4
  %s1185 = scalar_lea.vmem %s1, %s1184
  %v1186 = vld [vmem:[%s1185] sm:$0xf]
  %v1187 = vld [vmem:[%s1185 + $0x4] sm:$0xf]
  %v1188 = vmax.bf16 %v1181, %v1186
  %v1189 = vmax.bf16 %v1182, %v1187
  %s1190 = sadd.s32 0, 20
  %s1191 = smul.addr %s1190, 4
  %s1192 = scalar_lea.vmem %s1, %s1191
  %v1193 = vld [vmem:[%s1192] sm:$0xf]
  %v1194 = vld [vmem:[%s1192 + $0x4] sm:$0xf]
  %v1195 = vmax.bf16 %v1188, %v1193
  %v1196 = vmax.bf16 %v1189, %v1194
  %s1197 = sadd.s32 0, 22
  %s1198 = smul.addr %s1197, 4
  %s1199 = scalar_lea.vmem %s1, %s1198
  %v1200 = vld [vmem:[%s1199] sm:$0xf]
  %v1201 = vld [vmem:[%s1199 + $0x4] sm:$0xf]
  %v1202 = vmax.bf16 %v1195, %v1200
  %v1203 = vmax.bf16 %v1196, %v1201
  %s1204 = sadd.s32 0, 24
  %s1205 = smul.addr %s1204, 4
  %s1206 = scalar_lea.vmem %s1, %s1205
  %v1207 = vld [vmem:[%s1206] sm:$0xf]
  %v1208 = vld [vmem:[%s1206 + $0x4] sm:$0xf]
  %v1209 = vmax.bf16 %v1202, %v1207
  %v1210 = vmax.bf16 %v1203, %v1208
  %s1211 = sadd.s32 0, 26
  %s1212 = smul.addr %s1211, 4
  %s1213 = scalar_lea.vmem %s1, %s1212
  %v1214 = vld [vmem:[%s1213] sm:$0xf]
  %v1215 = vld [vmem:[%s1213 + $0x4] sm:$0xf]
  %v1216 = vmax.bf16 %v1209, %v1214
  %v1217 = vmax.bf16 %v1210, %v1215
  %s1218 = sadd.s32 0, 28
  %s1219 = smul.addr %s1218, 4
  %s1220 = scalar_lea.vmem %s1, %s1219
  %v1221 = vld [vmem:[%s1220] sm:$0xf]
  %v1222 = vld [vmem:[%s1220 + $0x4] sm:$0xf]
  %v1223 = vmax.bf16 %v1216, %v1221
  %v1224 = vmax.bf16 %v1217, %v1222
  %s1225 = sadd.s32 0, 30
  %s1226 = smul.addr %s1225, 4
  %s1227 = scalar_lea.vmem %s1, %s1226
  %v1228 = vld [vmem:[%s1227] sm:$0xf]
  %v1229 = vld [vmem:[%s1227 + $0x4] sm:$0xf]
  %v1230 = vmax.bf16 %v1223, %v1228
  %v1231 = vmax.bf16 %v1224, %v1229
  %v1232 = vunpack.c.l.bf16 %v1230
  %v1233 = vunpack.c.l.bf16 %v1231
  %v1234 = vunpack.c.l.bf16 %v1125
  %v1235 = vunpack.c.l.bf16 %v1126
  %v1236 = vsub.f32 %v1234, %v1232
  %v1237 = vsub.f32 %v1235, %v1233
  %v1238 = vmul.f32 %v1236, 1.442695
  %v1239 = vpow.pop %v1238
  %v1240 = vmul.f32 %v1237, 1.442695
  %v1241 = vpow.pop %v1240
  %v1242 = vadd.f32 %v1239, 0.0
  %v1243 = vadd.f32 %v1241, 0.0
  %vm1244 = vcmp.eq.f32.partialorder %v1119, 0.0
  %vm1245 = vcmp.eq.f32.partialorder %v1120, 0.0
  %v1246 = vsel %vm1244, %v1234, 0.0
  %v1247 = vsel %vm1245, %v1235, 0.0
  %v1248 = vunpack.c.l.bf16 %v1130
  %v1249 = vunpack.c.l.bf16 %v1131
  %v1250 = vsub.f32 %v1248, %v1232
  %v1251 = vsub.f32 %v1249, %v1233
  %v1252 = vmul.f32 %v1250, 1.442695
  %v1253 = vpow.pop %v1252
  %v1254 = vmul.f32 %v1251, 1.442695
  %v1255 = vpow.pop %v1254
  %v1256 = vadd.f32 %v1242, %v1253
  %v1257 = vadd.f32 %v1243, %v1255
  %vm1258 = vcmp.eq.f32.partialorder %v1119, 1.0
  %vm1259 = vcmp.eq.f32.partialorder %v1120, 1.0
  %v1260 = vsel %vm1258, %v1248, %v1246
  %v1261 = vsel %vm1259, %v1249, %v1247
  %v1262 = vsel %vm1244, %v1248, 0.0
  %v1263 = vsel %vm1245, %v1249, 0.0
  %v1264 = vunpack.c.l.bf16 %v1137
  %v1265 = vunpack.c.l.bf16 %v1138
  %v1266 = vsub.f32 %v1264, %v1232
  %v1267 = vsub.f32 %v1265, %v1233
  %v1268 = vmul.f32 %v1266, 1.442695
  %v1269 = vpow.pop %v1268
  %v1270 = vmul.f32 %v1267, 1.442695
  %v1271 = vpow.pop %v1270
  %v1272 = vadd.f32 %v1256, %v1269
  %v1273 = vadd.f32 %v1257, %v1271
  %vm1274 = vcmp.eq.f32.partialorder %v1119, 2.0
  %vm1275 = vcmp.eq.f32.partialorder %v1120, 2.0
  %v1276 = vsel %vm1274, %v1264, %v1260
  %v1277 = vsel %vm1275, %v1265, %v1261
  %v1278 = vsel %vm1258, %v1264, %v1262
  %v1279 = vsel %vm1259, %v1265, %v1263
  %v1280 = vunpack.c.l.bf16 %v1144
  %v1281 = vunpack.c.l.bf16 %v1145
  %v1282 = vsub.f32 %v1280, %v1232
  %v1283 = vsub.f32 %v1281, %v1233
  %v1284 = vmul.f32 %v1282, 1.442695
  %v1285 = vpow.pop %v1284
  %v1286 = vmul.f32 %v1283, 1.442695
  %v1287 = vpow.pop %v1286
  %v1288 = vadd.f32 %v1272, %v1285
  %v1289 = vadd.f32 %v1273, %v1287
  %vm1290 = vcmp.eq.f32.partialorder %v1119, 3.0
  %vm1291 = vcmp.eq.f32.partialorder %v1120, 3.0
  %v1292 = vsel %vm1290, %v1280, %v1276
  %v1293 = vsel %vm1291, %v1281, %v1277
  %v1294 = vsel %vm1274, %v1280, %v1278
  %v1295 = vsel %vm1275, %v1281, %v1279
  %v1296 = vunpack.c.l.bf16 %v1151
  %v1297 = vunpack.c.l.bf16 %v1152
  %v1298 = vsub.f32 %v1296, %v1232
  %v1299 = vsub.f32 %v1297, %v1233
  %v1300 = vmul.f32 %v1298, 1.442695
  %v1301 = vpow.pop %v1300
  %v1302 = vmul.f32 %v1299, 1.442695
  %v1303 = vpow.pop %v1302
  %v1304 = vadd.f32 %v1288, %v1301
  %v1305 = vadd.f32 %v1289, %v1303
  %vm1306 = vcmp.eq.f32.partialorder %v1119, 4.0
  %vm1307 = vcmp.eq.f32.partialorder %v1120, 4.0
  %v1308 = vsel %vm1306, %v1296, %v1292
  %v1309 = vsel %vm1307, %v1297, %v1293
  %v1310 = vsel %vm1290, %v1296, %v1294
  %v1311 = vsel %vm1291, %v1297, %v1295
  %v1312 = vunpack.c.l.bf16 %v1158
  %v1313 = vunpack.c.l.bf16 %v1159
  %v1314 = vsub.f32 %v1312, %v1232
  %v1315 = vsub.f32 %v1313, %v1233
  %v1316 = vmul.f32 %v1314, 1.442695
  %v1317 = vpow.pop %v1316
  %v1318 = vmul.f32 %v1315, 1.442695
  %v1319 = vpow.pop %v1318
  %v1320 = vadd.f32 %v1304, %v1317
  %v1321 = vadd.f32 %v1305, %v1319
  %vm1322 = vcmp.eq.f32.partialorder %v1119, 5.0
  %vm1323 = vcmp.eq.f32.partialorder %v1120, 5.0
  %v1324 = vsel %vm1322, %v1312, %v1308
  %v1325 = vsel %vm1323, %v1313, %v1309
  %v1326 = vsel %vm1306, %v1312, %v1310
  %v1327 = vsel %vm1307, %v1313, %v1311
  %v1328 = vunpack.c.l.bf16 %v1165
  %v1329 = vunpack.c.l.bf16 %v1166
  %v1330 = vsub.f32 %v1328, %v1232
  %v1331 = vsub.f32 %v1329, %v1233
  %v1332 = vmul.f32 %v1330, 1.442695
  %v1333 = vpow.pop %v1332
  %v1334 = vmul.f32 %v1331, 1.442695
  %v1335 = vpow.pop %v1334
  %v1336 = vadd.f32 %v1320, %v1333
  %v1337 = vadd.f32 %v1321, %v1335
  %vm1338 = vcmp.eq.f32.partialorder %v1119, 6.0
  %vm1339 = vcmp.eq.f32.partialorder %v1120, 6.0
  %v1340 = vsel %vm1338, %v1328, %v1324
  %v1341 = vsel %vm1339, %v1329, %v1325
  %v1342 = vsel %vm1322, %v1328, %v1326
  %v1343 = vsel %vm1323, %v1329, %v1327
  %v1344 = vunpack.c.l.bf16 %v1172
  %v1345 = vunpack.c.l.bf16 %v1173
  %v1346 = vsub.f32 %v1344, %v1232
  %v1347 = vsub.f32 %v1345, %v1233
  %v1348 = vmul.f32 %v1346, 1.442695
  %v1349 = vpow.pop %v1348
  %v1350 = vmul.f32 %v1347, 1.442695
  %v1351 = vpow.pop %v1350
  %v1352 = vadd.f32 %v1336, %v1349
  %v1353 = vadd.f32 %v1337, %v1351
  %vm1354 = vcmp.eq.f32.partialorder %v1119, 7.0
  %vm1355 = vcmp.eq.f32.partialorder %v1120, 7.0
  %v1356 = vsel %vm1354, %v1344, %v1340
  %v1357 = vsel %vm1355, %v1345, %v1341
  %v1358 = vsel %vm1338, %v1344, %v1342
  %v1359 = vsel %vm1339, %v1345, %v1343
  %v1360 = vunpack.c.l.bf16 %v1179
  %v1361 = vunpack.c.l.bf16 %v1180
  %v1362 = vsub.f32 %v1360, %v1232
  %v1363 = vsub.f32 %v1361, %v1233
  %v1364 = vmul.f32 %v1362, 1.442695
  %v1365 = vpow.pop %v1364
  %v1366 = vmul.f32 %v1363, 1.442695
  %v1367 = vpow.pop %v1366
  %v1368 = vadd.f32 %v1352, %v1365
  %v1369 = vadd.f32 %v1353, %v1367
  %vm1370 = vcmp.eq.f32.partialorder %v1119, 8.0
  %vm1371 = vcmp.eq.f32.partialorder %v1120, 8.0
  %v1372 = vsel %vm1370, %v1360, %v1356
  %v1373 = vsel %vm1371, %v1361, %v1357
  %v1374 = vsel %vm1354, %v1360, %v1358
  %v1375 = vsel %vm1355, %v1361, %v1359
  %v1376 = vunpack.c.l.bf16 %v1186
  %v1377 = vunpack.c.l.bf16 %v1187
  %v1378 = vsub.f32 %v1376, %v1232
  %v1379 = vsub.f32 %v1377, %v1233
  %v1380 = vmul.f32 %v1378, 1.442695
  %v1381 = vpow.pop %v1380
  %v1382 = vmul.f32 %v1379, 1.442695
  %v1383 = vpow.pop %v1382
  %v1384 = vadd.f32 %v1368, %v1381
  %v1385 = vadd.f32 %v1369, %v1383
  %vm1386 = vcmp.eq.f32.partialorder %v1119, 9.0
  %vm1387 = vcmp.eq.f32.partialorder %v1120, 9.0
  %v1388 = vsel %vm1386, %v1376, %v1372
  %v1389 = vsel %vm1387, %v1377, %v1373
  %v1390 = vsel %vm1370, %v1376, %v1374
  %v1391 = vsel %vm1371, %v1377, %v1375
  %v1392 = vunpack.c.l.bf16 %v1193
  %v1393 = vunpack.c.l.bf16 %v1194
  %v1394 = vsub.f32 %v1392, %v1232
  %v1395 = vsub.f32 %v1393, %v1233
  %v1396 = vmul.f32 %v1394, 1.442695
  %v1397 = vpow.pop %v1396
  %v1398 = vmul.f32 %v1395, 1.442695
  %v1399 = vpow.pop %v1398
  %v1400 = vadd.f32 %v1384, %v1397
  %v1401 = vadd.f32 %v1385, %v1399
  %vm1402 = vcmp.eq.f32.partialorder %v1119, 10.0
  %vm1403 = vcmp.eq.f32.partialorder %v1120, 10.0
  %v1404 = vsel %vm1402, %v1392, %v1388
  %v1405 = vsel %vm1403, %v1393, %v1389
  %v1406 = vsel %vm1386, %v1392, %v1390
  %v1407 = vsel %vm1387, %v1393, %v1391
  %v1408 = vunpack.c.l.bf16 %v1200
  %v1409 = vunpack.c.l.bf16 %v1201
  %v1410 = vsub.f32 %v1408, %v1232
  %v1411 = vsub.f32 %v1409, %v1233
  %v1412 = vmul.f32 %v1410, 1.442695
  %v1413 = vpow.pop %v1412
  %v1414 = vmul.f32 %v1411, 1.442695
  %v1415 = vpow.pop %v1414
  %v1416 = vadd.f32 %v1400, %v1413
  %v1417 = vadd.f32 %v1401, %v1415
  %vm1418 = vcmp.eq.f32.partialorder %v1119, 11.0
  %vm1419 = vcmp.eq.f32.partialorder %v1120, 11.0
  %v1420 = vsel %vm1418, %v1408, %v1404
  %v1421 = vsel %vm1419, %v1409, %v1405
  %v1422 = vsel %vm1402, %v1408, %v1406
  %v1423 = vsel %vm1403, %v1409, %v1407
  %v1424 = vunpack.c.l.bf16 %v1207
  %v1425 = vunpack.c.l.bf16 %v1208
  %v1426 = vsub.f32 %v1424, %v1232
  %v1427 = vsub.f32 %v1425, %v1233
  %v1428 = vmul.f32 %v1426, 1.442695
  %v1429 = vpow.pop %v1428
  %v1430 = vmul.f32 %v1427, 1.442695
  %v1431 = vpow.pop %v1430
  %v1432 = vadd.f32 %v1416, %v1429
  %v1433 = vadd.f32 %v1417, %v1431
  %vm1434 = vcmp.eq.f32.partialorder %v1119, 12.0
  %vm1435 = vcmp.eq.f32.partialorder %v1120, 12.0
  %v1436 = vsel %vm1434, %v1424, %v1420
  %v1437 = vsel %vm1435, %v1425, %v1421
  %v1438 = vsel %vm1418, %v1424, %v1422
  %v1439 = vsel %vm1419, %v1425, %v1423
  %v1440 = vunpack.c.l.bf16 %v1214
  %v1441 = vunpack.c.l.bf16 %v1215
  %v1442 = vsub.f32 %v1440, %v1232
  %v1443 = vsub.f32 %v1441, %v1233
  %v1444 = vmul.f32 %v1442, 1.442695
  %v1445 = vpow.pop %v1444
  %v1446 = vmul.f32 %v1443, 1.442695
  %v1447 = vpow.pop %v1446
  %v1448 = vadd.f32 %v1432, %v1445
  %v1449 = vadd.f32 %v1433, %v1447
  %vm1450 = vcmp.eq.f32.partialorder %v1119, 13.0
  %vm1451 = vcmp.eq.f32.partialorder %v1120, 13.0
  %v1452 = vsel %vm1450, %v1440, %v1436
  %v1453 = vsel %vm1451, %v1441, %v1437
  %v1454 = vsel %vm1434, %v1440, %v1438
  %v1455 = vsel %vm1435, %v1441, %v1439
  %v1456 = vunpack.c.l.bf16 %v1221
  %v1457 = vunpack.c.l.bf16 %v1222
  %v1458 = vsub.f32 %v1456, %v1232
  %v1459 = vsub.f32 %v1457, %v1233
  %v1460 = vmul.f32 %v1458, 1.442695
  %v1461 = vpow.pop %v1460
  %v1462 = vmul.f32 %v1459, 1.442695
  %v1463 = vpow.pop %v1462
  %v1464 = vadd.f32 %v1448, %v1461
  %v1465 = vadd.f32 %v1449, %v1463
  %vm1466 = vcmp.eq.f32.partialorder %v1119, 14.0
  %vm1467 = vcmp.eq.f32.partialorder %v1120, 14.0
  %v1468 = vsel %vm1466, %v1456, %v1452
  %v1469 = vsel %vm1467, %v1457, %v1453
  %v1470 = vsel %vm1450, %v1456, %v1454
  %v1471 = vsel %vm1451, %v1457, %v1455
  %v1472 = vunpack.c.l.bf16 %v1228
  %v1473 = vunpack.c.l.bf16 %v1229
  %v1474 = vsub.f32 %v1472, %v1232
  %v1475 = vsub.f32 %v1473, %v1233
  %v1476 = vmul.f32 %v1474, 1.442695
  %v1477 = vpow.pop %v1476
  %v1478 = vmul.f32 %v1475, 1.442695
  %v1479 = vpow.pop %v1478
  %v1480 = vadd.f32 %v1464, %v1477
  %v1481 = vadd.f32 %v1465, %v1479
  %vm1482 = vcmp.eq.f32.partialorder %v1119, 15.0
  %vm1483 = vcmp.eq.f32.partialorder %v1120, 15.0
  %v1484 = vsel %vm1482, %v1472, %v1468
  %v1485 = vsel %vm1483, %v1473, %v1469
  %v1486 = vsel %vm1466, %v1472, %v1470
  %v1487 = vsel %vm1467, %v1473, %v1471
  %v1488 = vlog2.pop %v1480
  %v1489 = vmul.f32 %v1488, 0.6931472
  %v1490 = vlog2.pop %v1481
  %v1491 = vmul.f32 %v1490, 0.6931472
  %v1492 = vadd.f32 %v1232, %v1489
  %v1493 = vadd.f32 %v1233, %v1491
  %v1494 = vsub.f32 %v1492, %v1484
  %v1495 = vsub.f32 %v1493, %v1485
  %v1496 = vmul.f32 %v1494, %v1123
  %v1497 = vmul.f32 %v1495, %v1124
  %v1498 = vadd.f32 %v1496, 0.0
  %v1499 = vadd.f32 %v1497, 0.0
  %v1500 = vsub.f32 %v1492, %v1486
  %v1501 = vsub.f32 %v1493, %v1487
  %v1502 = vsub.f32 1.0, %v1123
  %v1503 = vsub.f32 1.0, %v1124
  %v1504 = vmul.f32 %v1500, %v1502
  %v1505 = vmul.f32 %v1501, %v1503
  %v1506 = vadd.f32 %v1498, %v1504
  %v1507 = vadd.f32 %v1499, %v1505
  %v1508 = vmax.f32 %v1105, 0.0
  %v1509 = vmax.f32 %v1106, 0.0
  %v1510 = vmin.f32 %v1508, 14.99
  %v1511 = vmin.f32 %v1509, 14.99
  %v1512 = vfloor.f32 %v1510
  %v1513 = vfloor.f32 %v1511
  %v1514 = vadd.f32 %v1512, 1.0
  %v1515 = vadd.f32 %v1513, 1.0
  %v1516 = vsub.f32 %v1514, %v1510
  %v1517 = vsub.f32 %v1515, %v1511
  %s1518 = sadd.s32 0, 32
  %s1519 = smul.addr %s1518, 4
  %s1520 = scalar_lea.vmem %s1, %s1519
  %v1521 = vld [vmem:[%s1520] sm:$0xf]
  %v1522 = vld [vmem:[%s1520 + $0x4] sm:$0xf]
  %s1523 = sadd.s32 0, 34
  %s1524 = smul.addr %s1523, 4
  %s1525 = scalar_lea.vmem %s1, %s1524
  %v1526 = vld [vmem:[%s1525] sm:$0xf]
  %v1527 = vld [vmem:[%s1525 + $0x4] sm:$0xf]
  %v1528 = vmax.bf16 %v1521, %v1526
  %v1529 = vmax.bf16 %v1522, %v1527
  %s1530 = sadd.s32 0, 36
  %s1531 = smul.addr %s1530, 4
  %s1532 = scalar_lea.vmem %s1, %s1531
  %v1533 = vld [vmem:[%s1532] sm:$0xf]
  %v1534 = vld [vmem:[%s1532 + $0x4] sm:$0xf]
  %v1535 = vmax.bf16 %v1528, %v1533
  %v1536 = vmax.bf16 %v1529, %v1534
  %s1537 = sadd.s32 0, 38
  %s1538 = smul.addr %s1537, 4
  %s1539 = scalar_lea.vmem %s1, %s1538
  %v1540 = vld [vmem:[%s1539] sm:$0xf]
  %v1541 = vld [vmem:[%s1539 + $0x4] sm:$0xf]
  %v1542 = vmax.bf16 %v1535, %v1540
  %v1543 = vmax.bf16 %v1536, %v1541
  %s1544 = sadd.s32 0, 40
  %s1545 = smul.addr %s1544, 4
  %s1546 = scalar_lea.vmem %s1, %s1545
  %v1547 = vld [vmem:[%s1546] sm:$0xf]
  %v1548 = vld [vmem:[%s1546 + $0x4] sm:$0xf]
  %v1549 = vmax.bf16 %v1542, %v1547
  %v1550 = vmax.bf16 %v1543, %v1548
  %s1551 = sadd.s32 0, 42
  %s1552 = smul.addr %s1551, 4
  %s1553 = scalar_lea.vmem %s1, %s1552
  %v1554 = vld [vmem:[%s1553] sm:$0xf]
  %v1555 = vld [vmem:[%s1553 + $0x4] sm:$0xf]
  %v1556 = vmax.bf16 %v1549, %v1554
  %v1557 = vmax.bf16 %v1550, %v1555
  %s1558 = sadd.s32 0, 44
  %s1559 = smul.addr %s1558, 4
  %s1560 = scalar_lea.vmem %s1, %s1559
  %v1561 = vld [vmem:[%s1560] sm:$0xf]
  %v1562 = vld [vmem:[%s1560 + $0x4] sm:$0xf]
  %v1563 = vmax.bf16 %v1556, %v1561
  %v1564 = vmax.bf16 %v1557, %v1562
  %s1565 = sadd.s32 0, 46
  %s1566 = smul.addr %s1565, 4
  %s1567 = scalar_lea.vmem %s1, %s1566
  %v1568 = vld [vmem:[%s1567] sm:$0xf]
  %v1569 = vld [vmem:[%s1567 + $0x4] sm:$0xf]
  %v1570 = vmax.bf16 %v1563, %v1568
  %v1571 = vmax.bf16 %v1564, %v1569
  %s1572 = sadd.s32 0, 48
  %s1573 = smul.addr %s1572, 4
  %s1574 = scalar_lea.vmem %s1, %s1573
  %v1575 = vld [vmem:[%s1574] sm:$0xf]
  %v1576 = vld [vmem:[%s1574 + $0x4] sm:$0xf]
  %v1577 = vmax.bf16 %v1570, %v1575
  %v1578 = vmax.bf16 %v1571, %v1576
  %s1579 = sadd.s32 0, 50
  %s1580 = smul.addr %s1579, 4
  %s1581 = scalar_lea.vmem %s1, %s1580
  %v1582 = vld [vmem:[%s1581] sm:$0xf]
  %v1583 = vld [vmem:[%s1581 + $0x4] sm:$0xf]
  %v1584 = vmax.bf16 %v1577, %v1582
  %v1585 = vmax.bf16 %v1578, %v1583
  %s1586 = sadd.s32 0, 52
  %s1587 = smul.addr %s1586, 4
  %s1588 = scalar_lea.vmem %s1, %s1587
  %v1589 = vld [vmem:[%s1588] sm:$0xf]
  %v1590 = vld [vmem:[%s1588 + $0x4] sm:$0xf]
  %v1591 = vmax.bf16 %v1584, %v1589
  %v1592 = vmax.bf16 %v1585, %v1590
  %s1593 = sadd.s32 0, 54
  %s1594 = smul.addr %s1593, 4
  %s1595 = scalar_lea.vmem %s1, %s1594
  %v1596 = vld [vmem:[%s1595] sm:$0xf]
  %v1597 = vld [vmem:[%s1595 + $0x4] sm:$0xf]
  %v1598 = vmax.bf16 %v1591, %v1596
  %v1599 = vmax.bf16 %v1592, %v1597
  %s1600 = sadd.s32 0, 56
  %s1601 = smul.addr %s1600, 4
  %s1602 = scalar_lea.vmem %s1, %s1601
  %v1603 = vld [vmem:[%s1602] sm:$0xf]
  %v1604 = vld [vmem:[%s1602 + $0x4] sm:$0xf]
  %v1605 = vmax.bf16 %v1598, %v1603
  %v1606 = vmax.bf16 %v1599, %v1604
  %s1607 = sadd.s32 0, 58
  %s1608 = smul.addr %s1607, 4
  %s1609 = scalar_lea.vmem %s1, %s1608
  %v1610 = vld [vmem:[%s1609] sm:$0xf]
  %v1611 = vld [vmem:[%s1609 + $0x4] sm:$0xf]
  %v1612 = vmax.bf16 %v1605, %v1610
  %v1613 = vmax.bf16 %v1606, %v1611
  %s1614 = sadd.s32 0, 60
  %s1615 = smul.addr %s1614, 4
  %s1616 = scalar_lea.vmem %s1, %s1615
  %v1617 = vld [vmem:[%s1616] sm:$0xf]
  %v1618 = vld [vmem:[%s1616 + $0x4] sm:$0xf]
  %v1619 = vmax.bf16 %v1612, %v1617
  %v1620 = vmax.bf16 %v1613, %v1618
  %s1621 = sadd.s32 0, 62
  %s1622 = smul.addr %s1621, 4
  %s1623 = scalar_lea.vmem %s1, %s1622
  %v1624 = vld [vmem:[%s1623] sm:$0xf]
  %v1625 = vld [vmem:[%s1623 + $0x4] sm:$0xf]
  %v1626 = vmax.bf16 %v1619, %v1624
  %v1627 = vmax.bf16 %v1620, %v1625
  %v1628 = vunpack.c.l.bf16 %v1626
  %v1629 = vunpack.c.l.bf16 %v1627
  %v1630 = vunpack.c.l.bf16 %v1521
  %v1631 = vunpack.c.l.bf16 %v1522
  %v1632 = vsub.f32 %v1630, %v1628
  %v1633 = vsub.f32 %v1631, %v1629
  %v1634 = vmul.f32 %v1632, 1.442695
  %v1635 = vpow.pop %v1634
  %v1636 = vmul.f32 %v1633, 1.442695
  %v1637 = vpow.pop %v1636
  %v1638 = vadd.f32 %v1635, 0.0
  %v1639 = vadd.f32 %v1637, 0.0
  %vm1640 = vcmp.eq.f32.partialorder %v1512, 0.0
  %vm1641 = vcmp.eq.f32.partialorder %v1513, 0.0
  %v1642 = vsel %vm1640, %v1630, 0.0
  %v1643 = vsel %vm1641, %v1631, 0.0
  %v1644 = vunpack.c.l.bf16 %v1526
  %v1645 = vunpack.c.l.bf16 %v1527
  %v1646 = vsub.f32 %v1644, %v1628
  %v1647 = vsub.f32 %v1645, %v1629
  %v1648 = vmul.f32 %v1646, 1.442695
  %v1649 = vpow.pop %v1648
  %v1650 = vmul.f32 %v1647, 1.442695
  %v1651 = vpow.pop %v1650
  %v1652 = vadd.f32 %v1638, %v1649
  %v1653 = vadd.f32 %v1639, %v1651
  %vm1654 = vcmp.eq.f32.partialorder %v1512, 1.0
  %vm1655 = vcmp.eq.f32.partialorder %v1513, 1.0
  %v1656 = vsel %vm1654, %v1644, %v1642
  %v1657 = vsel %vm1655, %v1645, %v1643
  %v1658 = vsel %vm1640, %v1644, 0.0
  %v1659 = vsel %vm1641, %v1645, 0.0
  %v1660 = vunpack.c.l.bf16 %v1533
  %v1661 = vunpack.c.l.bf16 %v1534
  %v1662 = vsub.f32 %v1660, %v1628
  %v1663 = vsub.f32 %v1661, %v1629
  %v1664 = vmul.f32 %v1662, 1.442695
  %v1665 = vpow.pop %v1664
  %v1666 = vmul.f32 %v1663, 1.442695
  %v1667 = vpow.pop %v1666
  %v1668 = vadd.f32 %v1652, %v1665
  %v1669 = vadd.f32 %v1653, %v1667
  %vm1670 = vcmp.eq.f32.partialorder %v1512, 2.0
  %vm1671 = vcmp.eq.f32.partialorder %v1513, 2.0
  %v1672 = vsel %vm1670, %v1660, %v1656
  %v1673 = vsel %vm1671, %v1661, %v1657
  %v1674 = vsel %vm1654, %v1660, %v1658
  %v1675 = vsel %vm1655, %v1661, %v1659
  %v1676 = vunpack.c.l.bf16 %v1540
  %v1677 = vunpack.c.l.bf16 %v1541
  %v1678 = vsub.f32 %v1676, %v1628
  %v1679 = vsub.f32 %v1677, %v1629
  %v1680 = vmul.f32 %v1678, 1.442695
  %v1681 = vpow.pop %v1680
  %v1682 = vmul.f32 %v1679, 1.442695
  %v1683 = vpow.pop %v1682
  %v1684 = vadd.f32 %v1668, %v1681
  %v1685 = vadd.f32 %v1669, %v1683
  %vm1686 = vcmp.eq.f32.partialorder %v1512, 3.0
  %vm1687 = vcmp.eq.f32.partialorder %v1513, 3.0
  %v1688 = vsel %vm1686, %v1676, %v1672
  %v1689 = vsel %vm1687, %v1677, %v1673
  %v1690 = vsel %vm1670, %v1676, %v1674
  %v1691 = vsel %vm1671, %v1677, %v1675
  %v1692 = vunpack.c.l.bf16 %v1547
  %v1693 = vunpack.c.l.bf16 %v1548
  %v1694 = vsub.f32 %v1692, %v1628
  %v1695 = vsub.f32 %v1693, %v1629
  %v1696 = vmul.f32 %v1694, 1.442695
  %v1697 = vpow.pop %v1696
  %v1698 = vmul.f32 %v1695, 1.442695
  %v1699 = vpow.pop %v1698
  %v1700 = vadd.f32 %v1684, %v1697
  %v1701 = vadd.f32 %v1685, %v1699
  %vm1702 = vcmp.eq.f32.partialorder %v1512, 4.0
  %vm1703 = vcmp.eq.f32.partialorder %v1513, 4.0
  %v1704 = vsel %vm1702, %v1692, %v1688
  %v1705 = vsel %vm1703, %v1693, %v1689
  %v1706 = vsel %vm1686, %v1692, %v1690
  %v1707 = vsel %vm1687, %v1693, %v1691
  %v1708 = vunpack.c.l.bf16 %v1554
  %v1709 = vunpack.c.l.bf16 %v1555
  %v1710 = vsub.f32 %v1708, %v1628
  %v1711 = vsub.f32 %v1709, %v1629
  %v1712 = vmul.f32 %v1710, 1.442695
  %v1713 = vpow.pop %v1712
  %v1714 = vmul.f32 %v1711, 1.442695
  %v1715 = vpow.pop %v1714
  %v1716 = vadd.f32 %v1700, %v1713
  %v1717 = vadd.f32 %v1701, %v1715
  %vm1718 = vcmp.eq.f32.partialorder %v1512, 5.0
  %vm1719 = vcmp.eq.f32.partialorder %v1513, 5.0
  %v1720 = vsel %vm1718, %v1708, %v1704
  %v1721 = vsel %vm1719, %v1709, %v1705
  %v1722 = vsel %vm1702, %v1708, %v1706
  %v1723 = vsel %vm1703, %v1709, %v1707
  %v1724 = vunpack.c.l.bf16 %v1561
  %v1725 = vunpack.c.l.bf16 %v1562
  %v1726 = vsub.f32 %v1724, %v1628
  %v1727 = vsub.f32 %v1725, %v1629
  %v1728 = vmul.f32 %v1726, 1.442695
  %v1729 = vpow.pop %v1728
  %v1730 = vmul.f32 %v1727, 1.442695
  %v1731 = vpow.pop %v1730
  %v1732 = vadd.f32 %v1716, %v1729
  %v1733 = vadd.f32 %v1717, %v1731
  %vm1734 = vcmp.eq.f32.partialorder %v1512, 6.0
  %vm1735 = vcmp.eq.f32.partialorder %v1513, 6.0
  %v1736 = vsel %vm1734, %v1724, %v1720
  %v1737 = vsel %vm1735, %v1725, %v1721
  %v1738 = vsel %vm1718, %v1724, %v1722
  %v1739 = vsel %vm1719, %v1725, %v1723
  %v1740 = vunpack.c.l.bf16 %v1568
  %v1741 = vunpack.c.l.bf16 %v1569
  %v1742 = vsub.f32 %v1740, %v1628
  %v1743 = vsub.f32 %v1741, %v1629
  %v1744 = vmul.f32 %v1742, 1.442695
  %v1745 = vpow.pop %v1744
  %v1746 = vmul.f32 %v1743, 1.442695
  %v1747 = vpow.pop %v1746
  %v1748 = vadd.f32 %v1732, %v1745
  %v1749 = vadd.f32 %v1733, %v1747
  %vm1750 = vcmp.eq.f32.partialorder %v1512, 7.0
  %vm1751 = vcmp.eq.f32.partialorder %v1513, 7.0
  %v1752 = vsel %vm1750, %v1740, %v1736
  %v1753 = vsel %vm1751, %v1741, %v1737
  %v1754 = vsel %vm1734, %v1740, %v1738
  %v1755 = vsel %vm1735, %v1741, %v1739
  %v1756 = vunpack.c.l.bf16 %v1575
  %v1757 = vunpack.c.l.bf16 %v1576
  %v1758 = vsub.f32 %v1756, %v1628
  %v1759 = vsub.f32 %v1757, %v1629
  %v1760 = vmul.f32 %v1758, 1.442695
  %v1761 = vpow.pop %v1760
  %v1762 = vmul.f32 %v1759, 1.442695
  %v1763 = vpow.pop %v1762
  %v1764 = vadd.f32 %v1748, %v1761
  %v1765 = vadd.f32 %v1749, %v1763
  %vm1766 = vcmp.eq.f32.partialorder %v1512, 8.0
  %vm1767 = vcmp.eq.f32.partialorder %v1513, 8.0
  %v1768 = vsel %vm1766, %v1756, %v1752
  %v1769 = vsel %vm1767, %v1757, %v1753
  %v1770 = vsel %vm1750, %v1756, %v1754
  %v1771 = vsel %vm1751, %v1757, %v1755
  %v1772 = vunpack.c.l.bf16 %v1582
  %v1773 = vunpack.c.l.bf16 %v1583
  %v1774 = vsub.f32 %v1772, %v1628
  %v1775 = vsub.f32 %v1773, %v1629
  %v1776 = vmul.f32 %v1774, 1.442695
  %v1777 = vpow.pop %v1776
  %v1778 = vmul.f32 %v1775, 1.442695
  %v1779 = vpow.pop %v1778
  %v1780 = vadd.f32 %v1764, %v1777
  %v1781 = vadd.f32 %v1765, %v1779
  %vm1782 = vcmp.eq.f32.partialorder %v1512, 9.0
  %vm1783 = vcmp.eq.f32.partialorder %v1513, 9.0
  %v1784 = vsel %vm1782, %v1772, %v1768
  %v1785 = vsel %vm1783, %v1773, %v1769
  %v1786 = vsel %vm1766, %v1772, %v1770
  %v1787 = vsel %vm1767, %v1773, %v1771
  %v1788 = vunpack.c.l.bf16 %v1589
  %v1789 = vunpack.c.l.bf16 %v1590
  %v1790 = vsub.f32 %v1788, %v1628
  %v1791 = vsub.f32 %v1789, %v1629
  %v1792 = vmul.f32 %v1790, 1.442695
  %v1793 = vpow.pop %v1792
  %v1794 = vmul.f32 %v1791, 1.442695
  %v1795 = vpow.pop %v1794
  %v1796 = vadd.f32 %v1780, %v1793
  %v1797 = vadd.f32 %v1781, %v1795
  %vm1798 = vcmp.eq.f32.partialorder %v1512, 10.0
  %vm1799 = vcmp.eq.f32.partialorder %v1513, 10.0
  %v1800 = vsel %vm1798, %v1788, %v1784
  %v1801 = vsel %vm1799, %v1789, %v1785
  %v1802 = vsel %vm1782, %v1788, %v1786
  %v1803 = vsel %vm1783, %v1789, %v1787
  %v1804 = vunpack.c.l.bf16 %v1596
  %v1805 = vunpack.c.l.bf16 %v1597
  %v1806 = vsub.f32 %v1804, %v1628
  %v1807 = vsub.f32 %v1805, %v1629
  %v1808 = vmul.f32 %v1806, 1.442695
  %v1809 = vpow.pop %v1808
  %v1810 = vmul.f32 %v1807, 1.442695
  %v1811 = vpow.pop %v1810
  %v1812 = vadd.f32 %v1796, %v1809
  %v1813 = vadd.f32 %v1797, %v1811
  %vm1814 = vcmp.eq.f32.partialorder %v1512, 11.0
  %vm1815 = vcmp.eq.f32.partialorder %v1513, 11.0
  %v1816 = vsel %vm1814, %v1804, %v1800
  %v1817 = vsel %vm1815, %v1805, %v1801
  %v1818 = vsel %vm1798, %v1804, %v1802
  %v1819 = vsel %vm1799, %v1805, %v1803
  %v1820 = vunpack.c.l.bf16 %v1603
  %v1821 = vunpack.c.l.bf16 %v1604
  %v1822 = vsub.f32 %v1820, %v1628
  %v1823 = vsub.f32 %v1821, %v1629
  %v1824 = vmul.f32 %v1822, 1.442695
  %v1825 = vpow.pop %v1824
  %v1826 = vmul.f32 %v1823, 1.442695
  %v1827 = vpow.pop %v1826
  %v1828 = vadd.f32 %v1812, %v1825
  %v1829 = vadd.f32 %v1813, %v1827
  %vm1830 = vcmp.eq.f32.partialorder %v1512, 12.0
  %vm1831 = vcmp.eq.f32.partialorder %v1513, 12.0
  %v1832 = vsel %vm1830, %v1820, %v1816
  %v1833 = vsel %vm1831, %v1821, %v1817
  %v1834 = vsel %vm1814, %v1820, %v1818
  %v1835 = vsel %vm1815, %v1821, %v1819
  %v1836 = vunpack.c.l.bf16 %v1610
  %v1837 = vunpack.c.l.bf16 %v1611
  %v1838 = vsub.f32 %v1836, %v1628
  %v1839 = vsub.f32 %v1837, %v1629
  %v1840 = vmul.f32 %v1838, 1.442695
  %v1841 = vpow.pop %v1840
  %v1842 = vmul.f32 %v1839, 1.442695
  %v1843 = vpow.pop %v1842
  %v1844 = vadd.f32 %v1828, %v1841
  %v1845 = vadd.f32 %v1829, %v1843
  %vm1846 = vcmp.eq.f32.partialorder %v1512, 13.0
  %vm1847 = vcmp.eq.f32.partialorder %v1513, 13.0
  %v1848 = vsel %vm1846, %v1836, %v1832
  %v1849 = vsel %vm1847, %v1837, %v1833
  %v1850 = vsel %vm1830, %v1836, %v1834
  %v1851 = vsel %vm1831, %v1837, %v1835
  %v1852 = vunpack.c.l.bf16 %v1617
  %v1853 = vunpack.c.l.bf16 %v1618
  %v1854 = vsub.f32 %v1852, %v1628
  %v1855 = vsub.f32 %v1853, %v1629
  %v1856 = vmul.f32 %v1854, 1.442695
  %v1857 = vpow.pop %v1856
  %v1858 = vmul.f32 %v1855, 1.442695
  %v1859 = vpow.pop %v1858
  %v1860 = vadd.f32 %v1844, %v1857
  %v1861 = vadd.f32 %v1845, %v1859
  %vm1862 = vcmp.eq.f32.partialorder %v1512, 14.0
  %vm1863 = vcmp.eq.f32.partialorder %v1513, 14.0
  %v1864 = vsel %vm1862, %v1852, %v1848
  %v1865 = vsel %vm1863, %v1853, %v1849
  %v1866 = vsel %vm1846, %v1852, %v1850
  %v1867 = vsel %vm1847, %v1853, %v1851
  %v1868 = vunpack.c.l.bf16 %v1624
  %v1869 = vunpack.c.l.bf16 %v1625
  %v1870 = vsub.f32 %v1868, %v1628
  %v1871 = vsub.f32 %v1869, %v1629
  %v1872 = vmul.f32 %v1870, 1.442695
  %v1873 = vpow.pop %v1872
  %v1874 = vmul.f32 %v1871, 1.442695
  %v1875 = vpow.pop %v1874
  %v1876 = vadd.f32 %v1860, %v1873
  %v1877 = vadd.f32 %v1861, %v1875
  %vm1878 = vcmp.eq.f32.partialorder %v1512, 15.0
  %vm1879 = vcmp.eq.f32.partialorder %v1513, 15.0
  %v1880 = vsel %vm1878, %v1868, %v1864
  %v1881 = vsel %vm1879, %v1869, %v1865
  %v1882 = vsel %vm1862, %v1868, %v1866
  %v1883 = vsel %vm1863, %v1869, %v1867
  %v1884 = vlog2.pop %v1876
  %v1885 = vmul.f32 %v1884, 0.6931472
  %v1886 = vlog2.pop %v1877
  %v1887 = vmul.f32 %v1886, 0.6931472
  %v1888 = vadd.f32 %v1628, %v1885
  %v1889 = vadd.f32 %v1629, %v1887
  %v1890 = vsub.f32 %v1888, %v1880
  %v1891 = vsub.f32 %v1889, %v1881
  %v1892 = vmul.f32 %v1890, %v1516
  %v1893 = vmul.f32 %v1891, %v1517
  %v1894 = vadd.f32 %v1506, %v1892
  %v1895 = vadd.f32 %v1507, %v1893
  %v1896 = vsub.f32 %v1888, %v1882
  %v1897 = vsub.f32 %v1889, %v1883
  %v1898 = vsub.f32 1.0, %v1516
  %v1899 = vsub.f32 1.0, %v1517
  %v1900 = vmul.f32 %v1896, %v1898
  %v1901 = vmul.f32 %v1897, %v1899
  %v1902 = vadd.f32 %v1894, %v1900
  %v1903 = vadd.f32 %v1895, %v1901
  %v1904 = vmax.f32 %v1109, 0.0
  %v1905 = vmax.f32 %v1110, 0.0
  %v1906 = vmin.f32 %v1904, 14.99
  %v1907 = vmin.f32 %v1905, 14.99
  %v1908 = vfloor.f32 %v1906
  %v1909 = vfloor.f32 %v1907
  %v1910 = vadd.f32 %v1908, 1.0
  %v1911 = vadd.f32 %v1909, 1.0
  %v1912 = vsub.f32 %v1910, %v1906
  %v1913 = vsub.f32 %v1911, %v1907
  %s1914 = sadd.s32 0, 64
  %s1915 = smul.addr %s1914, 4
  %s1916 = scalar_lea.vmem %s1, %s1915
  %v1917 = vld [vmem:[%s1916] sm:$0xf]
  %v1918 = vld [vmem:[%s1916 + $0x4] sm:$0xf]
  %s1919 = sadd.s32 0, 66
  %s1920 = smul.addr %s1919, 4
  %s1921 = scalar_lea.vmem %s1, %s1920
  %v1922 = vld [vmem:[%s1921] sm:$0xf]
  %v1923 = vld [vmem:[%s1921 + $0x4] sm:$0xf]
  %v1924 = vmax.bf16 %v1917, %v1922
  %v1925 = vmax.bf16 %v1918, %v1923
  %s1926 = sadd.s32 0, 68
  %s1927 = smul.addr %s1926, 4
  %s1928 = scalar_lea.vmem %s1, %s1927
  %v1929 = vld [vmem:[%s1928] sm:$0xf]
  %v1930 = vld [vmem:[%s1928 + $0x4] sm:$0xf]
  %v1931 = vmax.bf16 %v1924, %v1929
  %v1932 = vmax.bf16 %v1925, %v1930
  %s1933 = sadd.s32 0, 70
  %s1934 = smul.addr %s1933, 4
  %s1935 = scalar_lea.vmem %s1, %s1934
  %v1936 = vld [vmem:[%s1935] sm:$0xf]
  %v1937 = vld [vmem:[%s1935 + $0x4] sm:$0xf]
  %v1938 = vmax.bf16 %v1931, %v1936
  %v1939 = vmax.bf16 %v1932, %v1937
  %s1940 = sadd.s32 0, 72
  %s1941 = smul.addr %s1940, 4
  %s1942 = scalar_lea.vmem %s1, %s1941
  %v1943 = vld [vmem:[%s1942] sm:$0xf]
  %v1944 = vld [vmem:[%s1942 + $0x4] sm:$0xf]
  %v1945 = vmax.bf16 %v1938, %v1943
  %v1946 = vmax.bf16 %v1939, %v1944
  %s1947 = sadd.s32 0, 74
  %s1948 = smul.addr %s1947, 4
  %s1949 = scalar_lea.vmem %s1, %s1948
  %v1950 = vld [vmem:[%s1949] sm:$0xf]
  %v1951 = vld [vmem:[%s1949 + $0x4] sm:$0xf]
  %v1952 = vmax.bf16 %v1945, %v1950
  %v1953 = vmax.bf16 %v1946, %v1951
  %s1954 = sadd.s32 0, 76
  %s1955 = smul.addr %s1954, 4
  %s1956 = scalar_lea.vmem %s1, %s1955
  %v1957 = vld [vmem:[%s1956] sm:$0xf]
  %v1958 = vld [vmem:[%s1956 + $0x4] sm:$0xf]
  %v1959 = vmax.bf16 %v1952, %v1957
  %v1960 = vmax.bf16 %v1953, %v1958
  %s1961 = sadd.s32 0, 78
  %s1962 = smul.addr %s1961, 4
  %s1963 = scalar_lea.vmem %s1, %s1962
  %v1964 = vld [vmem:[%s1963] sm:$0xf]
  %v1965 = vld [vmem:[%s1963 + $0x4] sm:$0xf]
  %v1966 = vmax.bf16 %v1959, %v1964
  %v1967 = vmax.bf16 %v1960, %v1965
  %s1968 = sadd.s32 0, 80
  %s1969 = smul.addr %s1968, 4
  %s1970 = scalar_lea.vmem %s1, %s1969
  %v1971 = vld [vmem:[%s1970] sm:$0xf]
  %v1972 = vld [vmem:[%s1970 + $0x4] sm:$0xf]
  %v1973 = vmax.bf16 %v1966, %v1971
  %v1974 = vmax.bf16 %v1967, %v1972
  %s1975 = sadd.s32 0, 82
  %s1976 = smul.addr %s1975, 4
  %s1977 = scalar_lea.vmem %s1, %s1976
  %v1978 = vld [vmem:[%s1977] sm:$0xf]
  %v1979 = vld [vmem:[%s1977 + $0x4] sm:$0xf]
  %v1980 = vmax.bf16 %v1973, %v1978
  %v1981 = vmax.bf16 %v1974, %v1979
  %s1982 = sadd.s32 0, 84
  %s1983 = smul.addr %s1982, 4
  %s1984 = scalar_lea.vmem %s1, %s1983
  %v1985 = vld [vmem:[%s1984] sm:$0xf]
  %v1986 = vld [vmem:[%s1984 + $0x4] sm:$0xf]
  %v1987 = vmax.bf16 %v1980, %v1985
  %v1988 = vmax.bf16 %v1981, %v1986
  %s1989 = sadd.s32 0, 86
  %s1990 = smul.addr %s1989, 4
  %s1991 = scalar_lea.vmem %s1, %s1990
  %v1992 = vld [vmem:[%s1991] sm:$0xf]
  %v1993 = vld [vmem:[%s1991 + $0x4] sm:$0xf]
  %v1994 = vmax.bf16 %v1987, %v1992
  %v1995 = vmax.bf16 %v1988, %v1993
  %s1996 = sadd.s32 0, 88
  %s1997 = smul.addr %s1996, 4
  %s1998 = scalar_lea.vmem %s1, %s1997
  %v1999 = vld [vmem:[%s1998] sm:$0xf]
  %v2000 = vld [vmem:[%s1998 + $0x4] sm:$0xf]
  %v2001 = vmax.bf16 %v1994, %v1999
  %v2002 = vmax.bf16 %v1995, %v2000
  %s2003 = sadd.s32 0, 90
  %s2004 = smul.addr %s2003, 4
  %s2005 = scalar_lea.vmem %s1, %s2004
  %v2006 = vld [vmem:[%s2005] sm:$0xf]
  %v2007 = vld [vmem:[%s2005 + $0x4] sm:$0xf]
  %v2008 = vmax.bf16 %v2001, %v2006
  %v2009 = vmax.bf16 %v2002, %v2007
  %s2010 = sadd.s32 0, 92
  %s2011 = smul.addr %s2010, 4
  %s2012 = scalar_lea.vmem %s1, %s2011
  %v2013 = vld [vmem:[%s2012] sm:$0xf]
  %v2014 = vld [vmem:[%s2012 + $0x4] sm:$0xf]
  %v2015 = vmax.bf16 %v2008, %v2013
  %v2016 = vmax.bf16 %v2009, %v2014
  %s2017 = sadd.s32 0, 94
  %s2018 = smul.addr %s2017, 4
  %s2019 = scalar_lea.vmem %s1, %s2018
  %v2020 = vld [vmem:[%s2019] sm:$0xf]
  %v2021 = vld [vmem:[%s2019 + $0x4] sm:$0xf]
  %v2022 = vmax.bf16 %v2015, %v2020
  %v2023 = vmax.bf16 %v2016, %v2021
  %v2024 = vunpack.c.l.bf16 %v2022
  %v2025 = vunpack.c.l.bf16 %v2023
  %v2026 = vunpack.c.l.bf16 %v1917
  %v2027 = vunpack.c.l.bf16 %v1918
  %v2028 = vsub.f32 %v2026, %v2024
  %v2029 = vsub.f32 %v2027, %v2025
  %v2030 = vmul.f32 %v2028, 1.442695
  %v2031 = vpow.pop %v2030
  %v2032 = vmul.f32 %v2029, 1.442695
  %v2033 = vpow.pop %v2032
  %v2034 = vadd.f32 %v2031, 0.0
  %v2035 = vadd.f32 %v2033, 0.0
  %vm2036 = vcmp.eq.f32.partialorder %v1908, 0.0
  %vm2037 = vcmp.eq.f32.partialorder %v1909, 0.0
  %v2038 = vsel %vm2036, %v2026, 0.0
  %v2039 = vsel %vm2037, %v2027, 0.0
  %v2040 = vunpack.c.l.bf16 %v1922
  %v2041 = vunpack.c.l.bf16 %v1923
  %v2042 = vsub.f32 %v2040, %v2024
  %v2043 = vsub.f32 %v2041, %v2025
  %v2044 = vmul.f32 %v2042, 1.442695
  %v2045 = vpow.pop %v2044
  %v2046 = vmul.f32 %v2043, 1.442695
  %v2047 = vpow.pop %v2046
  %v2048 = vadd.f32 %v2034, %v2045
  %v2049 = vadd.f32 %v2035, %v2047
  %vm2050 = vcmp.eq.f32.partialorder %v1908, 1.0
  %vm2051 = vcmp.eq.f32.partialorder %v1909, 1.0
  %v2052 = vsel %vm2050, %v2040, %v2038
  %v2053 = vsel %vm2051, %v2041, %v2039
  %v2054 = vsel %vm2036, %v2040, 0.0
  %v2055 = vsel %vm2037, %v2041, 0.0
  %v2056 = vunpack.c.l.bf16 %v1929
  %v2057 = vunpack.c.l.bf16 %v1930
  %v2058 = vsub.f32 %v2056, %v2024
  %v2059 = vsub.f32 %v2057, %v2025
  %v2060 = vmul.f32 %v2058, 1.442695
  %v2061 = vpow.pop %v2060
  %v2062 = vmul.f32 %v2059, 1.442695
  %v2063 = vpow.pop %v2062
  %v2064 = vadd.f32 %v2048, %v2061
  %v2065 = vadd.f32 %v2049, %v2063
  %vm2066 = vcmp.eq.f32.partialorder %v1908, 2.0
  %vm2067 = vcmp.eq.f32.partialorder %v1909, 2.0
  %v2068 = vsel %vm2066, %v2056, %v2052
  %v2069 = vsel %vm2067, %v2057, %v2053
  %v2070 = vsel %vm2050, %v2056, %v2054
  %v2071 = vsel %vm2051, %v2057, %v2055
  %v2072 = vunpack.c.l.bf16 %v1936
  %v2073 = vunpack.c.l.bf16 %v1937
  %v2074 = vsub.f32 %v2072, %v2024
  %v2075 = vsub.f32 %v2073, %v2025
  %v2076 = vmul.f32 %v2074, 1.442695
  %v2077 = vpow.pop %v2076
  %v2078 = vmul.f32 %v2075, 1.442695
  %v2079 = vpow.pop %v2078
  %v2080 = vadd.f32 %v2064, %v2077
  %v2081 = vadd.f32 %v2065, %v2079
  %vm2082 = vcmp.eq.f32.partialorder %v1908, 3.0
  %vm2083 = vcmp.eq.f32.partialorder %v1909, 3.0
  %v2084 = vsel %vm2082, %v2072, %v2068
  %v2085 = vsel %vm2083, %v2073, %v2069
  %v2086 = vsel %vm2066, %v2072, %v2070
  %v2087 = vsel %vm2067, %v2073, %v2071
  %v2088 = vunpack.c.l.bf16 %v1943
  %v2089 = vunpack.c.l.bf16 %v1944
  %v2090 = vsub.f32 %v2088, %v2024
  %v2091 = vsub.f32 %v2089, %v2025
  %v2092 = vmul.f32 %v2090, 1.442695
  %v2093 = vpow.pop %v2092
  %v2094 = vmul.f32 %v2091, 1.442695
  %v2095 = vpow.pop %v2094
  %v2096 = vadd.f32 %v2080, %v2093
  %v2097 = vadd.f32 %v2081, %v2095
  %vm2098 = vcmp.eq.f32.partialorder %v1908, 4.0
  %vm2099 = vcmp.eq.f32.partialorder %v1909, 4.0
  %v2100 = vsel %vm2098, %v2088, %v2084
  %v2101 = vsel %vm2099, %v2089, %v2085
  %v2102 = vsel %vm2082, %v2088, %v2086
  %v2103 = vsel %vm2083, %v2089, %v2087
  %v2104 = vunpack.c.l.bf16 %v1950
  %v2105 = vunpack.c.l.bf16 %v1951
  %v2106 = vsub.f32 %v2104, %v2024
  %v2107 = vsub.f32 %v2105, %v2025
  %v2108 = vmul.f32 %v2106, 1.442695
  %v2109 = vpow.pop %v2108
  %v2110 = vmul.f32 %v2107, 1.442695
  %v2111 = vpow.pop %v2110
  %v2112 = vadd.f32 %v2096, %v2109
  %v2113 = vadd.f32 %v2097, %v2111
  %vm2114 = vcmp.eq.f32.partialorder %v1908, 5.0
  %vm2115 = vcmp.eq.f32.partialorder %v1909, 5.0
  %v2116 = vsel %vm2114, %v2104, %v2100
  %v2117 = vsel %vm2115, %v2105, %v2101
  %v2118 = vsel %vm2098, %v2104, %v2102
  %v2119 = vsel %vm2099, %v2105, %v2103
  %v2120 = vunpack.c.l.bf16 %v1957
  %v2121 = vunpack.c.l.bf16 %v1958
  %v2122 = vsub.f32 %v2120, %v2024
  %v2123 = vsub.f32 %v2121, %v2025
  %v2124 = vmul.f32 %v2122, 1.442695
  %v2125 = vpow.pop %v2124
  %v2126 = vmul.f32 %v2123, 1.442695
  %v2127 = vpow.pop %v2126
  %v2128 = vadd.f32 %v2112, %v2125
  %v2129 = vadd.f32 %v2113, %v2127
  %vm2130 = vcmp.eq.f32.partialorder %v1908, 6.0
  %vm2131 = vcmp.eq.f32.partialorder %v1909, 6.0
  %v2132 = vsel %vm2130, %v2120, %v2116
  %v2133 = vsel %vm2131, %v2121, %v2117
  %v2134 = vsel %vm2114, %v2120, %v2118
  %v2135 = vsel %vm2115, %v2121, %v2119
  %v2136 = vunpack.c.l.bf16 %v1964
  %v2137 = vunpack.c.l.bf16 %v1965
  %v2138 = vsub.f32 %v2136, %v2024
  %v2139 = vsub.f32 %v2137, %v2025
  %v2140 = vmul.f32 %v2138, 1.442695
  %v2141 = vpow.pop %v2140
  %v2142 = vmul.f32 %v2139, 1.442695
  %v2143 = vpow.pop %v2142
  %v2144 = vadd.f32 %v2128, %v2141
  %v2145 = vadd.f32 %v2129, %v2143
  %vm2146 = vcmp.eq.f32.partialorder %v1908, 7.0
  %vm2147 = vcmp.eq.f32.partialorder %v1909, 7.0
  %v2148 = vsel %vm2146, %v2136, %v2132
  %v2149 = vsel %vm2147, %v2137, %v2133
  %v2150 = vsel %vm2130, %v2136, %v2134
  %v2151 = vsel %vm2131, %v2137, %v2135
  %v2152 = vunpack.c.l.bf16 %v1971
  %v2153 = vunpack.c.l.bf16 %v1972
  %v2154 = vsub.f32 %v2152, %v2024
  %v2155 = vsub.f32 %v2153, %v2025
  %v2156 = vmul.f32 %v2154, 1.442695
  %v2157 = vpow.pop %v2156
  %v2158 = vmul.f32 %v2155, 1.442695
  %v2159 = vpow.pop %v2158
  %v2160 = vadd.f32 %v2144, %v2157
  %v2161 = vadd.f32 %v2145, %v2159
  %vm2162 = vcmp.eq.f32.partialorder %v1908, 8.0
  %vm2163 = vcmp.eq.f32.partialorder %v1909, 8.0
  %v2164 = vsel %vm2162, %v2152, %v2148
  %v2165 = vsel %vm2163, %v2153, %v2149
  %v2166 = vsel %vm2146, %v2152, %v2150
  %v2167 = vsel %vm2147, %v2153, %v2151
  %v2168 = vunpack.c.l.bf16 %v1978
  %v2169 = vunpack.c.l.bf16 %v1979
  %v2170 = vsub.f32 %v2168, %v2024
  %v2171 = vsub.f32 %v2169, %v2025
  %v2172 = vmul.f32 %v2170, 1.442695
  %v2173 = vpow.pop %v2172
  %v2174 = vmul.f32 %v2171, 1.442695
  %v2175 = vpow.pop %v2174
  %v2176 = vadd.f32 %v2160, %v2173
  %v2177 = vadd.f32 %v2161, %v2175
  %vm2178 = vcmp.eq.f32.partialorder %v1908, 9.0
  %vm2179 = vcmp.eq.f32.partialorder %v1909, 9.0
  %v2180 = vsel %vm2178, %v2168, %v2164
  %v2181 = vsel %vm2179, %v2169, %v2165
  %v2182 = vsel %vm2162, %v2168, %v2166
  %v2183 = vsel %vm2163, %v2169, %v2167
  %v2184 = vunpack.c.l.bf16 %v1985
  %v2185 = vunpack.c.l.bf16 %v1986
  %v2186 = vsub.f32 %v2184, %v2024
  %v2187 = vsub.f32 %v2185, %v2025
  %v2188 = vmul.f32 %v2186, 1.442695
  %v2189 = vpow.pop %v2188
  %v2190 = vmul.f32 %v2187, 1.442695
  %v2191 = vpow.pop %v2190
  %v2192 = vadd.f32 %v2176, %v2189
  %v2193 = vadd.f32 %v2177, %v2191
  %vm2194 = vcmp.eq.f32.partialorder %v1908, 10.0
  %vm2195 = vcmp.eq.f32.partialorder %v1909, 10.0
  %v2196 = vsel %vm2194, %v2184, %v2180
  %v2197 = vsel %vm2195, %v2185, %v2181
  %v2198 = vsel %vm2178, %v2184, %v2182
  %v2199 = vsel %vm2179, %v2185, %v2183
  %v2200 = vunpack.c.l.bf16 %v1992
  %v2201 = vunpack.c.l.bf16 %v1993
  %v2202 = vsub.f32 %v2200, %v2024
  %v2203 = vsub.f32 %v2201, %v2025
  %v2204 = vmul.f32 %v2202, 1.442695
  %v2205 = vpow.pop %v2204
  %v2206 = vmul.f32 %v2203, 1.442695
  %v2207 = vpow.pop %v2206
  %v2208 = vadd.f32 %v2192, %v2205
  %v2209 = vadd.f32 %v2193, %v2207
  %vm2210 = vcmp.eq.f32.partialorder %v1908, 11.0
  %vm2211 = vcmp.eq.f32.partialorder %v1909, 11.0
  %v2212 = vsel %vm2210, %v2200, %v2196
  %v2213 = vsel %vm2211, %v2201, %v2197
  %v2214 = vsel %vm2194, %v2200, %v2198
  %v2215 = vsel %vm2195, %v2201, %v2199
  %v2216 = vunpack.c.l.bf16 %v1999
  %v2217 = vunpack.c.l.bf16 %v2000
  %v2218 = vsub.f32 %v2216, %v2024
  %v2219 = vsub.f32 %v2217, %v2025
  %v2220 = vmul.f32 %v2218, 1.442695
  %v2221 = vpow.pop %v2220
  %v2222 = vmul.f32 %v2219, 1.442695
  %v2223 = vpow.pop %v2222
  %v2224 = vadd.f32 %v2208, %v2221
  %v2225 = vadd.f32 %v2209, %v2223
  %vm2226 = vcmp.eq.f32.partialorder %v1908, 12.0
  %vm2227 = vcmp.eq.f32.partialorder %v1909, 12.0
  %v2228 = vsel %vm2226, %v2216, %v2212
  %v2229 = vsel %vm2227, %v2217, %v2213
  %v2230 = vsel %vm2210, %v2216, %v2214
  %v2231 = vsel %vm2211, %v2217, %v2215
  %v2232 = vunpack.c.l.bf16 %v2006
  %v2233 = vunpack.c.l.bf16 %v2007
  %v2234 = vsub.f32 %v2232, %v2024
  %v2235 = vsub.f32 %v2233, %v2025
  %v2236 = vmul.f32 %v2234, 1.442695
  %v2237 = vpow.pop %v2236
  %v2238 = vmul.f32 %v2235, 1.442695
  %v2239 = vpow.pop %v2238
  %v2240 = vadd.f32 %v2224, %v2237
  %v2241 = vadd.f32 %v2225, %v2239
  %vm2242 = vcmp.eq.f32.partialorder %v1908, 13.0
  %vm2243 = vcmp.eq.f32.partialorder %v1909, 13.0
  %v2244 = vsel %vm2242, %v2232, %v2228
  %v2245 = vsel %vm2243, %v2233, %v2229
  %v2246 = vsel %vm2226, %v2232, %v2230
  %v2247 = vsel %vm2227, %v2233, %v2231
  %v2248 = vunpack.c.l.bf16 %v2013
  %v2249 = vunpack.c.l.bf16 %v2014
  %v2250 = vsub.f32 %v2248, %v2024
  %v2251 = vsub.f32 %v2249, %v2025
  %v2252 = vmul.f32 %v2250, 1.442695
  %v2253 = vpow.pop %v2252
  %v2254 = vmul.f32 %v2251, 1.442695
  %v2255 = vpow.pop %v2254
  %v2256 = vadd.f32 %v2240, %v2253
  %v2257 = vadd.f32 %v2241, %v2255
  %vm2258 = vcmp.eq.f32.partialorder %v1908, 14.0
  %vm2259 = vcmp.eq.f32.partialorder %v1909, 14.0
  %v2260 = vsel %vm2258, %v2248, %v2244
  %v2261 = vsel %vm2259, %v2249, %v2245
  %v2262 = vsel %vm2242, %v2248, %v2246
  %v2263 = vsel %vm2243, %v2249, %v2247
  %v2264 = vunpack.c.l.bf16 %v2020
  %v2265 = vunpack.c.l.bf16 %v2021
  %v2266 = vsub.f32 %v2264, %v2024
  %v2267 = vsub.f32 %v2265, %v2025
  %v2268 = vmul.f32 %v2266, 1.442695
  %v2269 = vpow.pop %v2268
  %v2270 = vmul.f32 %v2267, 1.442695
  %v2271 = vpow.pop %v2270
  %v2272 = vadd.f32 %v2256, %v2269
  %v2273 = vadd.f32 %v2257, %v2271
  %vm2274 = vcmp.eq.f32.partialorder %v1908, 15.0
  %vm2275 = vcmp.eq.f32.partialorder %v1909, 15.0
  %v2276 = vsel %vm2274, %v2264, %v2260
  %v2277 = vsel %vm2275, %v2265, %v2261
  %v2278 = vsel %vm2258, %v2264, %v2262
  %v2279 = vsel %vm2259, %v2265, %v2263
  %v2280 = vlog2.pop %v2272
  %v2281 = vmul.f32 %v2280, 0.6931472
  %v2282 = vlog2.pop %v2273
  %v2283 = vmul.f32 %v2282, 0.6931472
  %v2284 = vadd.f32 %v2024, %v2281
  %v2285 = vadd.f32 %v2025, %v2283
  %v2286 = vsub.f32 %v2284, %v2276
  %v2287 = vsub.f32 %v2285, %v2277
  %v2288 = vmul.f32 %v2286, %v1912
  %v2289 = vmul.f32 %v2287, %v1913
  %v2290 = vadd.f32 %v1902, %v2288
  %v2291 = vadd.f32 %v1903, %v2289
  %v2292 = vsub.f32 %v2284, %v2278
  %v2293 = vsub.f32 %v2285, %v2279
  %v2294 = vsub.f32 1.0, %v1912
  %v2295 = vsub.f32 1.0, %v1913
  %v2296 = vmul.f32 %v2292, %v2294
  %v2297 = vmul.f32 %v2293, %v2295
  %v2298 = vadd.f32 %v2290, %v2296
  %v2299 = vadd.f32 %v2291, %v2297
  %v2300 = vmax.f32 %v1113, 0.0
  %v2301 = vmax.f32 %v1114, 0.0
  %v2302 = vmin.f32 %v2300, 14.99
  %v2303 = vmin.f32 %v2301, 14.99
  %v2304 = vfloor.f32 %v2302
  %v2305 = vfloor.f32 %v2303
  %v2306 = vadd.f32 %v2304, 1.0
  %v2307 = vadd.f32 %v2305, 1.0
  %v2308 = vsub.f32 %v2306, %v2302
  %v2309 = vsub.f32 %v2307, %v2303
  %s2310 = sadd.s32 0, 96
  %s2311 = smul.addr %s2310, 4
  %s2312 = scalar_lea.vmem %s1, %s2311
  %v2313 = vld [vmem:[%s2312] sm:$0xf]
  %v2314 = vld [vmem:[%s2312 + $0x4] sm:$0xf]
  %s2315 = sadd.s32 0, 98
  %s2316 = smul.addr %s2315, 4
  %s2317 = scalar_lea.vmem %s1, %s2316
  %v2318 = vld [vmem:[%s2317] sm:$0xf]
  %v2319 = vld [vmem:[%s2317 + $0x4] sm:$0xf]
  %v2320 = vmax.bf16 %v2313, %v2318
  %v2321 = vmax.bf16 %v2314, %v2319
  %s2322 = sadd.s32 0, 100
  %s2323 = smul.addr %s2322, 4
  %s2324 = scalar_lea.vmem %s1, %s2323
  %v2325 = vld [vmem:[%s2324] sm:$0xf]
  %v2326 = vld [vmem:[%s2324 + $0x4] sm:$0xf]
  %v2327 = vmax.bf16 %v2320, %v2325
  %v2328 = vmax.bf16 %v2321, %v2326
  %s2329 = sadd.s32 0, 102
  %s2330 = smul.addr %s2329, 4
  %s2331 = scalar_lea.vmem %s1, %s2330
  %v2332 = vld [vmem:[%s2331] sm:$0xf]
  %v2333 = vld [vmem:[%s2331 + $0x4] sm:$0xf]
  %v2334 = vmax.bf16 %v2327, %v2332
  %v2335 = vmax.bf16 %v2328, %v2333
  %s2336 = sadd.s32 0, 104
  %s2337 = smul.addr %s2336, 4
  %s2338 = scalar_lea.vmem %s1, %s2337
  %v2339 = vld [vmem:[%s2338] sm:$0xf]
  %v2340 = vld [vmem:[%s2338 + $0x4] sm:$0xf]
  %v2341 = vmax.bf16 %v2334, %v2339
  %v2342 = vmax.bf16 %v2335, %v2340
  %s2343 = sadd.s32 0, 106
  %s2344 = smul.addr %s2343, 4
  %s2345 = scalar_lea.vmem %s1, %s2344
  %v2346 = vld [vmem:[%s2345] sm:$0xf]
  %v2347 = vld [vmem:[%s2345 + $0x4] sm:$0xf]
  %v2348 = vmax.bf16 %v2341, %v2346
  %v2349 = vmax.bf16 %v2342, %v2347
  %s2350 = sadd.s32 0, 108
  %s2351 = smul.addr %s2350, 4
  %s2352 = scalar_lea.vmem %s1, %s2351
  %v2353 = vld [vmem:[%s2352] sm:$0xf]
  %v2354 = vld [vmem:[%s2352 + $0x4] sm:$0xf]
  %v2355 = vmax.bf16 %v2348, %v2353
  %v2356 = vmax.bf16 %v2349, %v2354
  %s2357 = sadd.s32 0, 110
  %s2358 = smul.addr %s2357, 4
  %s2359 = scalar_lea.vmem %s1, %s2358
  %v2360 = vld [vmem:[%s2359] sm:$0xf]
  %v2361 = vld [vmem:[%s2359 + $0x4] sm:$0xf]
  %v2362 = vmax.bf16 %v2355, %v2360
  %v2363 = vmax.bf16 %v2356, %v2361
  %s2364 = sadd.s32 0, 112
  %s2365 = smul.addr %s2364, 4
  %s2366 = scalar_lea.vmem %s1, %s2365
  %v2367 = vld [vmem:[%s2366] sm:$0xf]
  %v2368 = vld [vmem:[%s2366 + $0x4] sm:$0xf]
  %v2369 = vmax.bf16 %v2362, %v2367
  %v2370 = vmax.bf16 %v2363, %v2368
  %s2371 = sadd.s32 0, 114
  %s2372 = smul.addr %s2371, 4
  %s2373 = scalar_lea.vmem %s1, %s2372
  %v2374 = vld [vmem:[%s2373] sm:$0xf]
  %v2375 = vld [vmem:[%s2373 + $0x4] sm:$0xf]
  %v2376 = vmax.bf16 %v2369, %v2374
  %v2377 = vmax.bf16 %v2370, %v2375
  %s2378 = sadd.s32 0, 116
  %s2379 = smul.addr %s2378, 4
  %s2380 = scalar_lea.vmem %s1, %s2379
  %v2381 = vld [vmem:[%s2380] sm:$0xf]
  %v2382 = vld [vmem:[%s2380 + $0x4] sm:$0xf]
  %v2383 = vmax.bf16 %v2376, %v2381
  %v2384 = vmax.bf16 %v2377, %v2382
  %s2385 = sadd.s32 0, 118
  %s2386 = smul.addr %s2385, 4
  %s2387 = scalar_lea.vmem %s1, %s2386
  %v2388 = vld [vmem:[%s2387] sm:$0xf]
  %v2389 = vld [vmem:[%s2387 + $0x4] sm:$0xf]
  %v2390 = vmax.bf16 %v2383, %v2388
  %v2391 = vmax.bf16 %v2384, %v2389
  %s2392 = sadd.s32 0, 120
  %s2393 = smul.addr %s2392, 4
  %s2394 = scalar_lea.vmem %s1, %s2393
  %v2395 = vld [vmem:[%s2394] sm:$0xf]
  %v2396 = vld [vmem:[%s2394 + $0x4] sm:$0xf]
  %v2397 = vmax.bf16 %v2390, %v2395
  %v2398 = vmax.bf16 %v2391, %v2396
  %s2399 = sadd.s32 0, 122
  %s2400 = smul.addr %s2399, 4
  %s2401 = scalar_lea.vmem %s1, %s2400
  %v2402 = vld [vmem:[%s2401] sm:$0xf]
  %v2403 = vld [vmem:[%s2401 + $0x4] sm:$0xf]
  %v2404 = vmax.bf16 %v2397, %v2402
  %v2405 = vmax.bf16 %v2398, %v2403
  %s2406 = sadd.s32 0, 124
  %s2407 = smul.addr %s2406, 4
  %s2408 = scalar_lea.vmem %s1, %s2407
  %v2409 = vld [vmem:[%s2408] sm:$0xf]
  %v2410 = vld [vmem:[%s2408 + $0x4] sm:$0xf]
  %v2411 = vmax.bf16 %v2404, %v2409
  %v2412 = vmax.bf16 %v2405, %v2410
  %s2413 = sadd.s32 0, 126
  %s2414 = smul.addr %s2413, 4
  %s2415 = scalar_lea.vmem %s1, %s2414
  %v2416 = vld [vmem:[%s2415] sm:$0xf]
  %v2417 = vld [vmem:[%s2415 + $0x4] sm:$0xf]
  %v2418 = vmax.bf16 %v2411, %v2416
  %v2419 = vmax.bf16 %v2412, %v2417
  %v2420 = vunpack.c.l.bf16 %v2418
  %v2421 = vunpack.c.l.bf16 %v2419
  %v2422 = vunpack.c.l.bf16 %v2313
  %v2423 = vunpack.c.l.bf16 %v2314
  %v2424 = vsub.f32 %v2422, %v2420
  %v2425 = vsub.f32 %v2423, %v2421
  %v2426 = vmul.f32 %v2424, 1.442695
  %v2427 = vpow.pop %v2426
  %v2428 = vmul.f32 %v2425, 1.442695
  %v2429 = vpow.pop %v2428
  %v2430 = vadd.f32 %v2427, 0.0
  %v2431 = vadd.f32 %v2429, 0.0
  %vm2432 = vcmp.eq.f32.partialorder %v2304, 0.0
  %vm2433 = vcmp.eq.f32.partialorder %v2305, 0.0
  %v2434 = vsel %vm2432, %v2422, 0.0
  %v2435 = vsel %vm2433, %v2423, 0.0
  %v2436 = vunpack.c.l.bf16 %v2318
  %v2437 = vunpack.c.l.bf16 %v2319
  %v2438 = vsub.f32 %v2436, %v2420
  %v2439 = vsub.f32 %v2437, %v2421
  %v2440 = vmul.f32 %v2438, 1.442695
  %v2441 = vpow.pop %v2440
  %v2442 = vmul.f32 %v2439, 1.442695
  %v2443 = vpow.pop %v2442
  %v2444 = vadd.f32 %v2430, %v2441
  %v2445 = vadd.f32 %v2431, %v2443
  %vm2446 = vcmp.eq.f32.partialorder %v2304, 1.0
  %vm2447 = vcmp.eq.f32.partialorder %v2305, 1.0
  %v2448 = vsel %vm2446, %v2436, %v2434
  %v2449 = vsel %vm2447, %v2437, %v2435
  %v2450 = vsel %vm2432, %v2436, 0.0
  %v2451 = vsel %vm2433, %v2437, 0.0
  %v2452 = vunpack.c.l.bf16 %v2325
  %v2453 = vunpack.c.l.bf16 %v2326
  %v2454 = vsub.f32 %v2452, %v2420
  %v2455 = vsub.f32 %v2453, %v2421
  %v2456 = vmul.f32 %v2454, 1.442695
  %v2457 = vpow.pop %v2456
  %v2458 = vmul.f32 %v2455, 1.442695
  %v2459 = vpow.pop %v2458
  %v2460 = vadd.f32 %v2444, %v2457
  %v2461 = vadd.f32 %v2445, %v2459
  %vm2462 = vcmp.eq.f32.partialorder %v2304, 2.0
  %vm2463 = vcmp.eq.f32.partialorder %v2305, 2.0
  %v2464 = vsel %vm2462, %v2452, %v2448
  %v2465 = vsel %vm2463, %v2453, %v2449
  %v2466 = vsel %vm2446, %v2452, %v2450
  %v2467 = vsel %vm2447, %v2453, %v2451
  %v2468 = vunpack.c.l.bf16 %v2332
  %v2469 = vunpack.c.l.bf16 %v2333
  %v2470 = vsub.f32 %v2468, %v2420
  %v2471 = vsub.f32 %v2469, %v2421
  %v2472 = vmul.f32 %v2470, 1.442695
  %v2473 = vpow.pop %v2472
  %v2474 = vmul.f32 %v2471, 1.442695
  %v2475 = vpow.pop %v2474
  %v2476 = vadd.f32 %v2460, %v2473
  %v2477 = vadd.f32 %v2461, %v2475
  %vm2478 = vcmp.eq.f32.partialorder %v2304, 3.0
  %vm2479 = vcmp.eq.f32.partialorder %v2305, 3.0
  %v2480 = vsel %vm2478, %v2468, %v2464
  %v2481 = vsel %vm2479, %v2469, %v2465
  %v2482 = vsel %vm2462, %v2468, %v2466
  %v2483 = vsel %vm2463, %v2469, %v2467
  %v2484 = vunpack.c.l.bf16 %v2339
  %v2485 = vunpack.c.l.bf16 %v2340
  %v2486 = vsub.f32 %v2484, %v2420
  %v2487 = vsub.f32 %v2485, %v2421
  %v2488 = vmul.f32 %v2486, 1.442695
  %v2489 = vpow.pop %v2488
  %v2490 = vmul.f32 %v2487, 1.442695
  %v2491 = vpow.pop %v2490
  %v2492 = vadd.f32 %v2476, %v2489
  %v2493 = vadd.f32 %v2477, %v2491
  %vm2494 = vcmp.eq.f32.partialorder %v2304, 4.0
  %vm2495 = vcmp.eq.f32.partialorder %v2305, 4.0
  %v2496 = vsel %vm2494, %v2484, %v2480
  %v2497 = vsel %vm2495, %v2485, %v2481
  %v2498 = vsel %vm2478, %v2484, %v2482
  %v2499 = vsel %vm2479, %v2485, %v2483
  %v2500 = vunpack.c.l.bf16 %v2346
  %v2501 = vunpack.c.l.bf16 %v2347
  %v2502 = vsub.f32 %v2500, %v2420
  %v2503 = vsub.f32 %v2501, %v2421
  %v2504 = vmul.f32 %v2502, 1.442695
  %v2505 = vpow.pop %v2504
  %v2506 = vmul.f32 %v2503, 1.442695
  %v2507 = vpow.pop %v2506
  %v2508 = vadd.f32 %v2492, %v2505
  %v2509 = vadd.f32 %v2493, %v2507
  %vm2510 = vcmp.eq.f32.partialorder %v2304, 5.0
  %vm2511 = vcmp.eq.f32.partialorder %v2305, 5.0
  %v2512 = vsel %vm2510, %v2500, %v2496
  %v2513 = vsel %vm2511, %v2501, %v2497
  %v2514 = vsel %vm2494, %v2500, %v2498
  %v2515 = vsel %vm2495, %v2501, %v2499
  %v2516 = vunpack.c.l.bf16 %v2353
  %v2517 = vunpack.c.l.bf16 %v2354
  %v2518 = vsub.f32 %v2516, %v2420
  %v2519 = vsub.f32 %v2517, %v2421
  %v2520 = vmul.f32 %v2518, 1.442695
  %v2521 = vpow.pop %v2520
  %v2522 = vmul.f32 %v2519, 1.442695
  %v2523 = vpow.pop %v2522
  %v2524 = vadd.f32 %v2508, %v2521
  %v2525 = vadd.f32 %v2509, %v2523
  %vm2526 = vcmp.eq.f32.partialorder %v2304, 6.0
  %vm2527 = vcmp.eq.f32.partialorder %v2305, 6.0
  %v2528 = vsel %vm2526, %v2516, %v2512
  %v2529 = vsel %vm2527, %v2517, %v2513
  %v2530 = vsel %vm2510, %v2516, %v2514
  %v2531 = vsel %vm2511, %v2517, %v2515
  %v2532 = vunpack.c.l.bf16 %v2360
  %v2533 = vunpack.c.l.bf16 %v2361
  %v2534 = vsub.f32 %v2532, %v2420
  %v2535 = vsub.f32 %v2533, %v2421
  %v2536 = vmul.f32 %v2534, 1.442695
  %v2537 = vpow.pop %v2536
  %v2538 = vmul.f32 %v2535, 1.442695
  %v2539 = vpow.pop %v2538
  %v2540 = vadd.f32 %v2524, %v2537
  %v2541 = vadd.f32 %v2525, %v2539
  %vm2542 = vcmp.eq.f32.partialorder %v2304, 7.0
  %vm2543 = vcmp.eq.f32.partialorder %v2305, 7.0
  %v2544 = vsel %vm2542, %v2532, %v2528
  %v2545 = vsel %vm2543, %v2533, %v2529
  %v2546 = vsel %vm2526, %v2532, %v2530
  %v2547 = vsel %vm2527, %v2533, %v2531
  %v2548 = vunpack.c.l.bf16 %v2367
  %v2549 = vunpack.c.l.bf16 %v2368
  %v2550 = vsub.f32 %v2548, %v2420
  %v2551 = vsub.f32 %v2549, %v2421
  %v2552 = vmul.f32 %v2550, 1.442695
  %v2553 = vpow.pop %v2552
  %v2554 = vmul.f32 %v2551, 1.442695
  %v2555 = vpow.pop %v2554
  %v2556 = vadd.f32 %v2540, %v2553
  %v2557 = vadd.f32 %v2541, %v2555
  %vm2558 = vcmp.eq.f32.partialorder %v2304, 8.0
  %vm2559 = vcmp.eq.f32.partialorder %v2305, 8.0
  %v2560 = vsel %vm2558, %v2548, %v2544
  %v2561 = vsel %vm2559, %v2549, %v2545
  %v2562 = vsel %vm2542, %v2548, %v2546
  %v2563 = vsel %vm2543, %v2549, %v2547
  %v2564 = vunpack.c.l.bf16 %v2374
  %v2565 = vunpack.c.l.bf16 %v2375
  %v2566 = vsub.f32 %v2564, %v2420
  %v2567 = vsub.f32 %v2565, %v2421
  %v2568 = vmul.f32 %v2566, 1.442695
  %v2569 = vpow.pop %v2568
  %v2570 = vmul.f32 %v2567, 1.442695
  %v2571 = vpow.pop %v2570
  %v2572 = vadd.f32 %v2556, %v2569
  %v2573 = vadd.f32 %v2557, %v2571
  %vm2574 = vcmp.eq.f32.partialorder %v2304, 9.0
  %vm2575 = vcmp.eq.f32.partialorder %v2305, 9.0
  %v2576 = vsel %vm2574, %v2564, %v2560
  %v2577 = vsel %vm2575, %v2565, %v2561
  %v2578 = vsel %vm2558, %v2564, %v2562
  %v2579 = vsel %vm2559, %v2565, %v2563
  %v2580 = vunpack.c.l.bf16 %v2381
  %v2581 = vunpack.c.l.bf16 %v2382
  %v2582 = vsub.f32 %v2580, %v2420
  %v2583 = vsub.f32 %v2581, %v2421
  %v2584 = vmul.f32 %v2582, 1.442695
  %v2585 = vpow.pop %v2584
  %v2586 = vmul.f32 %v2583, 1.442695
  %v2587 = vpow.pop %v2586
  %v2588 = vadd.f32 %v2572, %v2585
  %v2589 = vadd.f32 %v2573, %v2587
  %vm2590 = vcmp.eq.f32.partialorder %v2304, 10.0
  %vm2591 = vcmp.eq.f32.partialorder %v2305, 10.0
  %v2592 = vsel %vm2590, %v2580, %v2576
  %v2593 = vsel %vm2591, %v2581, %v2577
  %v2594 = vsel %vm2574, %v2580, %v2578
  %v2595 = vsel %vm2575, %v2581, %v2579
  %v2596 = vunpack.c.l.bf16 %v2388
  %v2597 = vunpack.c.l.bf16 %v2389
  %v2598 = vsub.f32 %v2596, %v2420
  %v2599 = vsub.f32 %v2597, %v2421
  %v2600 = vmul.f32 %v2598, 1.442695
  %v2601 = vpow.pop %v2600
  %v2602 = vmul.f32 %v2599, 1.442695
  %v2603 = vpow.pop %v2602
  %v2604 = vadd.f32 %v2588, %v2601
  %v2605 = vadd.f32 %v2589, %v2603
  %vm2606 = vcmp.eq.f32.partialorder %v2304, 11.0
  %vm2607 = vcmp.eq.f32.partialorder %v2305, 11.0
  %v2608 = vsel %vm2606, %v2596, %v2592
  %v2609 = vsel %vm2607, %v2597, %v2593
  %v2610 = vsel %vm2590, %v2596, %v2594
  %v2611 = vsel %vm2591, %v2597, %v2595
  %v2612 = vunpack.c.l.bf16 %v2395
  %v2613 = vunpack.c.l.bf16 %v2396
  %v2614 = vsub.f32 %v2612, %v2420
  %v2615 = vsub.f32 %v2613, %v2421
  %v2616 = vmul.f32 %v2614, 1.442695
  %v2617 = vpow.pop %v2616
  %v2618 = vmul.f32 %v2615, 1.442695
  %v2619 = vpow.pop %v2618
  %v2620 = vadd.f32 %v2604, %v2617
  %v2621 = vadd.f32 %v2605, %v2619
  %vm2622 = vcmp.eq.f32.partialorder %v2304, 12.0
  %vm2623 = vcmp.eq.f32.partialorder %v2305, 12.0
  %v2624 = vsel %vm2622, %v2612, %v2608
  %v2625 = vsel %vm2623, %v2613, %v2609
  %v2626 = vsel %vm2606, %v2612, %v2610
  %v2627 = vsel %vm2607, %v2613, %v2611
  %v2628 = vunpack.c.l.bf16 %v2402
  %v2629 = vunpack.c.l.bf16 %v2403
  %v2630 = vsub.f32 %v2628, %v2420
  %v2631 = vsub.f32 %v2629, %v2421
  %v2632 = vmul.f32 %v2630, 1.442695
  %v2633 = vpow.pop %v2632
  %v2634 = vmul.f32 %v2631, 1.442695
  %v2635 = vpow.pop %v2634
  %v2636 = vadd.f32 %v2620, %v2633
  %v2637 = vadd.f32 %v2621, %v2635
  %vm2638 = vcmp.eq.f32.partialorder %v2304, 13.0
  %vm2639 = vcmp.eq.f32.partialorder %v2305, 13.0
  %v2640 = vsel %vm2638, %v2628, %v2624
  %v2641 = vsel %vm2639, %v2629, %v2625
  %v2642 = vsel %vm2622, %v2628, %v2626
  %v2643 = vsel %vm2623, %v2629, %v2627
  %v2644 = vunpack.c.l.bf16 %v2409
  %v2645 = vunpack.c.l.bf16 %v2410
  %v2646 = vsub.f32 %v2644, %v2420
  %v2647 = vsub.f32 %v2645, %v2421
  %v2648 = vmul.f32 %v2646, 1.442695
  %v2649 = vpow.pop %v2648
  %v2650 = vmul.f32 %v2647, 1.442695
  %v2651 = vpow.pop %v2650
  %v2652 = vadd.f32 %v2636, %v2649
  %v2653 = vadd.f32 %v2637, %v2651
  %vm2654 = vcmp.eq.f32.partialorder %v2304, 14.0
  %vm2655 = vcmp.eq.f32.partialorder %v2305, 14.0
  %v2656 = vsel %vm2654, %v2644, %v2640
  %v2657 = vsel %vm2655, %v2645, %v2641
  %v2658 = vsel %vm2638, %v2644, %v2642
  %v2659 = vsel %vm2639, %v2645, %v2643
  %v2660 = vunpack.c.l.bf16 %v2416
  %v2661 = vunpack.c.l.bf16 %v2417
  %v2662 = vsub.f32 %v2660, %v2420
  %v2663 = vsub.f32 %v2661, %v2421
  %v2664 = vmul.f32 %v2662, 1.442695
  %v2665 = vpow.pop %v2664
  %v2666 = vmul.f32 %v2663, 1.442695
  %v2667 = vpow.pop %v2666
  %v2668 = vadd.f32 %v2652, %v2665
  %v2669 = vadd.f32 %v2653, %v2667
  %vm2670 = vcmp.eq.f32.partialorder %v2304, 15.0
  %vm2671 = vcmp.eq.f32.partialorder %v2305, 15.0
  %v2672 = vsel %vm2670, %v2660, %v2656
  %v2673 = vsel %vm2671, %v2661, %v2657
  %v2674 = vsel %vm2654, %v2660, %v2658
  %v2675 = vsel %vm2655, %v2661, %v2659
  %v2676 = vlog2.pop %v2668
  %v2677 = vmul.f32 %v2676, 0.6931472
  %v2678 = vlog2.pop %v2669
  %v2679 = vmul.f32 %v2678, 0.6931472
  %v2680 = vadd.f32 %v2420, %v2677
  %v2681 = vadd.f32 %v2421, %v2679
  %v2682 = vsub.f32 %v2680, %v2672
  %v2683 = vsub.f32 %v2681, %v2673
  %v2684 = vmul.f32 %v2682, %v2308
  %v2685 = vmul.f32 %v2683, %v2309
  %v2686 = vadd.f32 %v2298, %v2684
  %v2687 = vadd.f32 %v2299, %v2685
  %v2688 = vsub.f32 %v2680, %v2674
  %v2689 = vsub.f32 %v2681, %v2675
  %v2690 = vsub.f32 1.0, %v2308
  %v2691 = vsub.f32 1.0, %v2309
  %v2692 = vmul.f32 %v2688, %v2690
  %v2693 = vmul.f32 %v2689, %v2691
  %v2694 = vadd.f32 %v2686, %v2692
  %v2695 = vadd.f32 %v2687, %v2693
  %v2696 = vmul.f32 %v2694, 0.25
  %v2697 = vmul.f32 %v2695, 0.25
  %v2698 = vmul.f32 %v2696, %v1081
  %v2699 = vmul.f32 %v2697, %v1082
  %v2700 = vsel %vm1087, %v2698, 0.0
  %v2701 = vsel %vm1088, %v2699, 0.0
  %v2702 = vadd.f32 %v2700, 0.0
  %v2703 = vadd.f32 %v2702, %v2701
  %2704 = vst [vmem:[%s2] sm:$0xff] %v1094
  %2705 = vst [vmem:[%s3] sm:$0xff] %v2703
  // Predicated region
  $region10: #{rotated_bbox_loss.1} parent=0 // pred_check
    _
  $region11: #{rotated_bbox_loss.1} parent=0 // pred_check_branch
    %2707 = sbr.rel (0) target = $region13
  $region12: #{rotated_bbox_loss.1} parent=0 // pred_region
    _
  $region13: #{rotated_bbox_loss.1} parent=0 // pred_fallthru
    _
  // Predicated region
  $region14: #{rotated_bbox_loss.1} parent=0 // pred_check
    _
  $region15: #{rotated_bbox_loss.1} parent=0 // pred_check_branch
    %2709 = sbr.rel (0) target = $region17
  $region16: #{rotated_bbox_loss.1} parent=0 // pred_region
    _
  $region17: #{rotated_bbox_loss.1} parent=0 // pred_fallthru
    _
  // Predicated region
  $region18: #{rotated_bbox_loss.1} parent=0 // pred_check
    _
  $region19: #{rotated_bbox_loss.1} parent=0 // pred_check_branch
    %2711 = sbr.rel (0) target = $region21
  $region20: #{rotated_bbox_loss.1} parent=0 // pred_region
    _
  $region21: #{rotated_bbox_loss.1} parent=0 // pred_fallthru
    _
  // Predicated region
  $region22: #{rotated_bbox_loss.1} parent=0 // pred_check
    _
  $region23: #{rotated_bbox_loss.1} parent=0 // pred_check_branch
    %2713 = sbr.rel (0) target = $region25
  $region24: #{rotated_bbox_loss.1} parent=0 // pred_region
    _
  $region25: #{rotated_bbox_loss.1} parent=0 // pred_fallthru
    _

</llo_original>
